<compile_context>
chip_gen: v6e
topology: v6e:2x2x1
jax: 0.10.0
libtpu: 0.0.40
codegen_flags: <defaults>
</compile_context>

<pallas_src>
import jax
import jax.numpy as jnp
from jax.experimental import pallas as pl
from jax.experimental.pallas import tpu as pltpu


# ----------------------------------------------------------------------------
# Fused kernel: one batch image per grid step.
#   x_ref     : (1, H, W, Cin)      input image (f32)
#   s1,b1     : (1, 1, 1, Cin)      folded BN1 scale / bias (f32)
#   w1_ref    : (Cin, 4k)           1x1 conv weight (bf16)
#   s2,b2     : (1, 4k)             folded BN2 scale / bias (f32)
#   w2_ref    : (9*4k, k)           3x3 conv weight, im2col layout (bf16)
#   o_ref     : (1, H, W, k)        output (f32)
#   pad_ref   : (1, H+2, W+2, 4k)   VMEM scratch, zero halo (f32)
#   patch_ref : (H*W, 9*4k)         VMEM scratch, im2col slab (bf16)
# ----------------------------------------------------------------------------
def bottleneck_kernel(x_ref, s1_ref, b1_ref, w1_ref, s2_ref, b2_ref, w2_ref,
                      o_ref, pad_ref, patch_ref):
    _, H, W, Cin = x_ref.shape
    C2 = w1_ref.shape[1]          # 4k
    Cout = o_ref.shape[-1]        # k
    HW = H * W

    # ---- BRC1: BN -> ReLU -> 1x1 conv -------------------------------------
    x = x_ref[...].astype(jnp.float32)                          # (1,H,W,Cin)
    h1 = jnp.maximum(x * s1_ref[...] + b1_ref[...], 0.0)
    z1 = jnp.dot(h1.reshape(HW, Cin).astype(jnp.bfloat16),      # (HW, Cin)
                 w1_ref[...],                                   # (Cin, C2)
                 preferred_element_type=jnp.float32)            # (HW, C2) f32

    # ---- BRC2: BN -> ReLU -> 3x3 conv (padding=1) --------------------------
    h2 = jnp.maximum(z1 * s2_ref[...] + b2_ref[...], 0.0)       # (HW, C2) f32

    # Zero halo: Conv2d zero-pads AFTER BN+ReLU, so the border must be 0.
    pad_ref[...] = jnp.zeros_like(pad_ref)
    pad_ref[:, 1:H + 1, 1:W + 1, :] = h2.reshape(1, H, W, C2)

    # im2col: pack the 9 shifted taps into one (HW, 9*C2) bf16 slab.
    for dy in range(3):
        for dx in range(3):
            tap = dy * 3 + dx
            patch_ref[:, tap * C2:(tap + 1) * C2] = (
                pad_ref[:, dy:dy + H, dx:dx + W, :]
                .reshape(HW, C2).astype(jnp.bfloat16))

    # Single MXU matmul with K = 9*C2, f32 accumulation.
    acc = jnp.dot(patch_ref[...], w2_ref[...],
                  preferred_element_type=jnp.float32)           # (HW, Cout)
    o_ref[...] = acc.reshape(1, H, W, Cout).astype(o_ref.dtype)


# ----------------------------------------------------------------------------
# Wrapper: NCHW in / NCHW out (PyTorch convention), NHWC inside the kernel.
# ----------------------------------------------------------------------------
def bottleneck_forward(x_nchw, params, eps=1e-5):
    N, cin, H, W = x_nchw.shape
    c2 = params["w1"].shape[0]     # 4k
    k = params["w2"].shape[0]

    # Fold eval-mode BatchNorm into per-channel scale/bias.
    s1 = params["gamma1"] / jnp.sqrt(params["var1"] + eps)
    b1 = params["beta1"] - params["mean1"] * s1
    s2 = params["gamma2"] / jnp.sqrt(params["var2"] + eps)
    b2 = params["beta2"] - params["mean2"] * s2

    x_nhwc = jnp.transpose(x_nchw, (0, 2, 3, 1)).astype(jnp.float32)
    # 1x1 conv weight (c2, cin, 1, 1) -> matmul RHS (cin, c2), bf16 operands.
    w1_mat = jnp.transpose(params["w1"].reshape(c2, cin), (1, 0)).astype(jnp.bfloat16)
    # 3x3 conv weight (k, c2, 3, 3) -> im2col RHS (9*c2, k); row = (dy*3+dx)*c2 + c.
    w2_mat = (jnp.transpose(params["w2"], (2, 3, 1, 0))
              .reshape(9 * c2, k).astype(jnp.bfloat16))

    out_nhwc = pl.pallas_call(
        bottleneck_kernel,
        out_shape=jax.ShapeDtypeStruct((N, H, W, k), jnp.float32),
        grid=(N,),
        in_specs=[
            pl.BlockSpec((1, H, W, cin), lambda n: (n, 0, 0, 0)),
            pl.BlockSpec((1, 1, 1, cin), lambda n: (0, 0, 0, 0)),
            pl.BlockSpec((1, 1, 1, cin), lambda n: (0, 0, 0, 0)),
            pl.BlockSpec((cin, c2), lambda n: (0, 0)),
            pl.BlockSpec((1, c2), lambda n: (0, 0)),
            pl.BlockSpec((1, c2), lambda n: (0, 0)),
            pl.BlockSpec((9 * c2, k), lambda n: (0, 0)),
        ],
        out_specs=pl.BlockSpec((1, H, W, k), lambda n: (n, 0, 0, 0)),
        scratch_shapes=[
            pltpu.VMEM((1, H + 2, W + 2, c2), jnp.float32),   # zero-halo pad buffer
            pltpu.VMEM((H * W, 9 * c2), jnp.bfloat16),        # im2col slab
        ],
        compiler_params=pltpu.CompilerParams(
            dimension_semantics=("parallel",)),
    )(x_nhwc,
      s1.reshape(1, 1, 1, cin), b1.reshape(1, 1, 1, cin),
      w1_mat,
      s2.reshape(1, c2), b2.reshape(1, c2),
      w2_mat)

    return jnp.transpose(out_nhwc, (0, 3, 1, 2))   # back to NCHW


# ----------------------------------------------------------------------------
# Parameters (PyTorch-shaped) and pure-JAX reference (same bf16 operand
# precision, f32 accumulation) for the correctness check.
# ----------------------------------------------------------------------------
def init_bottleneck_params(key, in_channels, k):
    c2 = 4 * k
    ks = jax.random.split(key, 10)
    return dict(
        w1=0.3 * jax.random.normal(ks[0], (c2, in_channels, 1, 1), jnp.float32),
        gamma1=1.0 + 0.1 * jax.random.normal(ks[1], (in_channels,), jnp.float32),
        beta1=0.1 * jax.random.normal(ks[2], (in_channels,), jnp.float32),
        mean1=0.1 * jax.random.normal(ks[3], (in_channels,), jnp.float32),
        var1=1.0 + 0.1 * jax.random.uniform(ks[4], (in_channels,), jnp.float32),
        w2=0.15 * jax.random.normal(ks[5], (k, c2, 3, 3), jnp.float32),
        gamma2=1.0 + 0.1 * jax.random.normal(ks[6], (c2,), jnp.float32),
        beta2=0.1 * jax.random.normal(ks[7], (c2,), jnp.float32),
        mean2=0.1 * jax.random.normal(ks[8], (c2,), jnp.float32),
        var2=1.0 + 0.1 * jax.random.uniform(ks[9], (c2,), jnp.float32),
    )


def bottleneck_reference(x_nchw, params, eps=1e-5):
    x = jnp.transpose(x_nchw, (0, 2, 3, 1)).astype(jnp.float32)    # NHWC
    s1 = params["gamma1"] / jnp.sqrt(params["var1"] + eps)
    b1 = params["beta1"] - params["mean1"] * s1
    h1 = jnp.maximum(x * s1 + b1, 0.0)
    w1_hwio = jnp.transpose(params["w1"], (2, 3, 1, 0))            # (1,1,Cin,C2)
    z1 = jax.lax.conv_general_dilated(
        h1.astype(jnp.bfloat16), w1_hwio.astype(jnp.bfloat16),
        (1, 1), "VALID", dimension_numbers=("NHWC", "HWIO", "NHWC"),
        preferred_element_type=jnp.float32)

    s2 = params["gamma2"] / jnp.sqrt(params["var2"] + eps)
    b2 = params["beta2"] - params["mean2"] * s2
    h2 = jnp.maximum(z1 * s2 + b2, 0.0)
    w2_hwio = jnp.transpose(params["w2"], (2, 3, 1, 0))            # (3,3,C2,k)
    out = jax.lax.conv_general_dilated(
        h2.astype(jnp.bfloat16), w2_hwio.astype(jnp.bfloat16),
        (1, 1), "SAME", dimension_numbers=("NHWC", "HWIO", "NHWC"),
        preferred_element_type=jnp.float32)
    return jnp.transpose(out, (0, 3, 1, 2))


if __name__ == "__main__":
    # Bottleneck(in_channels=4, k=4): 1x1 conv -> 16 channels, 3x3 conv -> 4.
    in_channels, k = 4, 4
    N, H, W = 2, 16, 16

    key = jax.random.PRNGKey(0)
    key, kx = jax.random.split(key)
    x = jax.random.normal(kx, (N, in_channels, H, W), jnp.float32)   # NCHW
    params = init_bottleneck_params(key, in_channels, k)

    fwd = jax.jit(bottleneck_forward)
    out = jax.block_until_ready(fwd(x, params))
    assert out.shape == (N, k, H, W), out.shape

    ref = jax.block_until_ready(bottleneck_reference(x, params))
    if not jnp.allclose(out, ref, atol=5e-3, rtol=5e-3):
        err = float(jnp.max(jnp.abs(out - ref)))
        raise AssertionError(f"Pallas Bottleneck mismatch vs reference (max abs err {err})")

    print("KERNEL_OK")
</pallas_src>

<mosaic_0001>
module attributes {stable_mosaic.version = 11 : i64} {
  func.func @bottleneck_kernel(%arg0: i32, %arg1: memref<1x16x16x4xf32, #tpu.memory_space<vmem>>, %arg2: memref<1x1x1x4xf32, #tpu.memory_space<vmem>>, %arg3: memref<1x1x1x4xf32, #tpu.memory_space<vmem>>, %arg4: memref<4x16xbf16, #tpu.memory_space<vmem>>, %arg5: memref<1x16xf32, #tpu.memory_space<vmem>>, %arg6: memref<1x16xf32, #tpu.memory_space<vmem>>, %arg7: memref<144x4xbf16, #tpu.memory_space<vmem>>, %arg8: memref<1x16x16x4xf32, #tpu.memory_space<vmem>>, %arg9: memref<1x18x18x16xf32, #tpu.memory_space<vmem>>, %arg10: memref<256x144xbf16, #tpu.memory_space<vmem>>) attributes {dimension_semantics = [#tpu.dimension_semantics<parallel>], iteration_bounds = array<i64: 2>, scalar_prefetch = 0 : i64, scratch_operands = 2 : i64, tpu.core_type = #tpu.core_type<tc>, window_params = [{transform_indices = @transform_0, window_bounds = array<i64: 1, 16, 16, 4>}, {pipeline_mode = #tpu.pipeline_mode<synchronous>, transform_indices = @transform_1, window_bounds = array<i64: 1, 1, 1, 4>}, {pipeline_mode = #tpu.pipeline_mode<synchronous>, transform_indices = @transform_2, window_bounds = array<i64: 1, 1, 1, 4>}, {pipeline_mode = #tpu.pipeline_mode<synchronous>, transform_indices = @transform_3, window_bounds = array<i64: 4, 16>}, {pipeline_mode = #tpu.pipeline_mode<synchronous>, transform_indices = @transform_4, window_bounds = array<i64: 1, 16>}, {pipeline_mode = #tpu.pipeline_mode<synchronous>, transform_indices = @transform_5, window_bounds = array<i64: 1, 16>}, {pipeline_mode = #tpu.pipeline_mode<synchronous>, transform_indices = @transform_6, window_bounds = array<i64: 144, 4>}, {transform_indices = @transform_7, window_bounds = array<i64: 1, 16, 16, 4>}]} {
    %c0 = arith.constant 0 : index
    %c0_0 = arith.constant 0 : index
    %c0_1 = arith.constant 0 : index
    %c0_2 = arith.constant 0 : index
    %0 = vector.load %arg1[%c0, %c0_0, %c0_1, %c0_2] : memref<1x16x16x4xf32, #tpu.memory_space<vmem>>, vector<1x16x16x4xf32>
    %c0_3 = arith.constant 0 : index
    %c0_4 = arith.constant 0 : index
    %c0_5 = arith.constant 0 : index
    %c0_6 = arith.constant 0 : index
    %1 = vector.load %arg2[%c0_3, %c0_4, %c0_5, %c0_6] : memref<1x1x1x4xf32, #tpu.memory_space<vmem>>, vector<1x1x1x4xf32>
    %2 = vector.broadcast %1 : vector<1x1x1x4xf32> to vector<1x16x16x4xf32>
    %3 = arith.mulf %0, %2 : vector<1x16x16x4xf32>
    %c0_7 = arith.constant 0 : index
    %c0_8 = arith.constant 0 : index
    %c0_9 = arith.constant 0 : index
    %c0_10 = arith.constant 0 : index
    %4 = vector.load %arg3[%c0_7, %c0_8, %c0_9, %c0_10] : memref<1x1x1x4xf32, #tpu.memory_space<vmem>>, vector<1x1x1x4xf32>
    %5 = vector.broadcast %4 : vector<1x1x1x4xf32> to vector<1x16x16x4xf32>
    %6 = arith.addf %3, %5 : vector<1x16x16x4xf32>
    %cst = arith.constant 0.000000e+00 : f32
    %7 = vector.broadcast %cst : f32 to vector<1x16x16x4xf32>
    %8 = arith.maximumf %6, %7 : vector<1x16x16x4xf32>
    %9 = vector.shape_cast %8 : vector<1x16x16x4xf32> to vector<256x4xf32>
    %10 = arith.truncf %9 : vector<256x4xf32> to vector<256x4xbf16>
    %c0_11 = arith.constant 0 : index
    %c0_12 = arith.constant 0 : index
    %11 = vector.load %arg4[%c0_11, %c0_12] : memref<4x16xbf16, #tpu.memory_space<vmem>>, vector<4x16xbf16>
    %cst_13 = arith.constant dense<0.000000e+00> : vector<256x16xf32>
    %12 = tpu.matmul %10, %11, %cst_13 {dimension_numbers = #tpu.dot_dimension_numbers<[1], [0], [0], [1], [0, 0, 1, 1], [], []>} : vector<256x4xbf16>, vector<4x16xbf16>, vector<256x16xf32> -> vector<256x16xf32>
    %c0_14 = arith.constant 0 : index
    %c0_15 = arith.constant 0 : index
    %13 = vector.load %arg5[%c0_14, %c0_15] : memref<1x16xf32, #tpu.memory_space<vmem>>, vector<1x16xf32>
    %14 = vector.broadcast %13 : vector<1x16xf32> to vector<256x16xf32>
    %15 = arith.mulf %12, %14 : vector<256x16xf32>
    %c0_16 = arith.constant 0 : index
    %c0_17 = arith.constant 0 : index
    %16 = vector.load %arg6[%c0_16, %c0_17] : memref<1x16xf32, #tpu.memory_space<vmem>>, vector<1x16xf32>
    %17 = vector.broadcast %16 : vector<1x16xf32> to vector<256x16xf32>
    %18 = arith.addf %15, %17 : vector<256x16xf32>
    %cst_18 = arith.constant 0.000000e+00 : f32
    %19 = vector.broadcast %cst_18 : f32 to vector<256x16xf32>
    %20 = arith.maximumf %18, %19 : vector<256x16xf32>
    %cst_19 = arith.constant 0.000000e+00 : f32
    %21 = vector.broadcast %cst_19 : f32 to vector<1x18x18x16xf32>
    %c0_20 = arith.constant 0 : index
    %c0_21 = arith.constant 0 : index
    %c0_22 = arith.constant 0 : index
    %c0_23 = arith.constant 0 : index
    %22 = vector.load %arg9[%c0_20, %c0_21, %c0_22, %c0_23] : memref<1x18x18x16xf32, #tpu.memory_space<vmem>>, vector<1x18x18x16xf32>
    tpu.vector_store %arg9[%c0_20, %c0_21, %c0_22, %c0_23], %21 {strides = array<i32>} : memref<1x18x18x16xf32, #tpu.memory_space<vmem>>, vector<1x18x18x16xf32>,
    %23 = vector.shape_cast %20 : vector<256x16xf32> to vector<1x16x16x16xf32>
    %c0_24 = arith.constant 0 : index
    %c1 = arith.constant 1 : index
    %c1_25 = arith.constant 1 : index
    %c0_26 = arith.constant 0 : index
    %24 = vector.load %arg9[%c0_24, %c1, %c1_25, %c0_26] : memref<1x18x18x16xf32, #tpu.memory_space<vmem>>, vector<1x16x16x16xf32>
    tpu.vector_store %arg9[%c0_24, %c1, %c1_25, %c0_26], %23 {strides = array<i32>} : memref<1x18x18x16xf32, #tpu.memory_space<vmem>>, vector<1x16x16x16xf32>,
    %c0_27 = arith.constant 0 : index
    %c0_28 = arith.constant 0 : index
    %c0_29 = arith.constant 0 : index
    %c0_30 = arith.constant 0 : index
    %25 = vector.load %arg9[%c0_27, %c0_28, %c0_29, %c0_30] : memref<1x18x18x16xf32, #tpu.memory_space<vmem>>, vector<1x16x16x16xf32>
    %26 = vector.shape_cast %25 : vector<1x16x16x16xf32> to vector<256x16xf32>
    %27 = arith.truncf %26 : vector<256x16xf32> to vector<256x16xbf16>
    %c0_31 = arith.constant 0 : index
    %c0_32 = arith.constant 0 : index
    %28 = vector.load %arg10[%c0_31, %c0_32] : memref<256x144xbf16, #tpu.memory_space<vmem>>, vector<256x16xbf16>
    tpu.vector_store %arg10[%c0_31, %c0_32], %27 {strides = array<i32>} : memref<256x144xbf16, #tpu.memory_space<vmem>>, vector<256x16xbf16>,
    %c0_33 = arith.constant 0 : index
    %c0_34 = arith.constant 0 : index
    %c1_35 = arith.constant 1 : index
    %c0_36 = arith.constant 0 : index
    %29 = vector.load %arg9[%c0_33, %c0_34, %c1_35, %c0_36] : memref<1x18x18x16xf32, #tpu.memory_space<vmem>>, vector<1x16x16x16xf32>
    %30 = vector.shape_cast %29 : vector<1x16x16x16xf32> to vector<256x16xf32>
    %31 = arith.truncf %30 : vector<256x16xf32> to vector<256x16xbf16>
    %c0_37 = arith.constant 0 : index
    %c16 = arith.constant 16 : index
    %32 = vector.load %arg10[%c0_37, %c16] : memref<256x144xbf16, #tpu.memory_space<vmem>>, vector<256x16xbf16>
    tpu.vector_store %arg10[%c0_37, %c16], %31 {strides = array<i32>} : memref<256x144xbf16, #tpu.memory_space<vmem>>, vector<256x16xbf16>,
    %c0_38 = arith.constant 0 : index
    %c0_39 = arith.constant 0 : index
    %c2 = arith.constant 2 : index
    %c0_40 = arith.constant 0 : index
    %33 = vector.load %arg9[%c0_38, %c0_39, %c2, %c0_40] : memref<1x18x18x16xf32, #tpu.memory_space<vmem>>, vector<1x16x16x16xf32>
    %34 = vector.shape_cast %33 : vector<1x16x16x16xf32> to vector<256x16xf32>
    %35 = arith.truncf %34 : vector<256x16xf32> to vector<256x16xbf16>
    %c0_41 = arith.constant 0 : index
    %c32 = arith.constant 32 : index
    %36 = vector.load %arg10[%c0_41, %c32] : memref<256x144xbf16, #tpu.memory_space<vmem>>, vector<256x16xbf16>
    tpu.vector_store %arg10[%c0_41, %c32], %35 {strides = array<i32>} : memref<256x144xbf16, #tpu.memory_space<vmem>>, vector<256x16xbf16>,
    %c0_42 = arith.constant 0 : index
    %c1_43 = arith.constant 1 : index
    %c0_44 = arith.constant 0 : index
    %c0_45 = arith.constant 0 : index
    %37 = vector.load %arg9[%c0_42, %c1_43, %c0_44, %c0_45] : memref<1x18x18x16xf32, #tpu.memory_space<vmem>>, vector<1x16x16x16xf32>
    %38 = vector.shape_cast %37 : vector<1x16x16x16xf32> to vector<256x16xf32>
    %39 = arith.truncf %38 : vector<256x16xf32> to vector<256x16xbf16>
    %c0_46 = arith.constant 0 : index
    %c48 = arith.constant 48 : index
    %40 = vector.load %arg10[%c0_46, %c48] : memref<256x144xbf16, #tpu.memory_space<vmem>>, vector<256x16xbf16>
    tpu.vector_store %arg10[%c0_46, %c48], %39 {strides = array<i32>} : memref<256x144xbf16, #tpu.memory_space<vmem>>, vector<256x16xbf16>,
    %c0_47 = arith.constant 0 : index
    %c1_48 = arith.constant 1 : index
    %c1_49 = arith.constant 1 : index
    %c0_50 = arith.constant 0 : index
    %41 = vector.load %arg9[%c0_47, %c1_48, %c1_49, %c0_50] : memref<1x18x18x16xf32, #tpu.memory_space<vmem>>, vector<1x16x16x16xf32>
    %42 = vector.shape_cast %41 : vector<1x16x16x16xf32> to vector<256x16xf32>
    %43 = arith.truncf %42 : vector<256x16xf32> to vector<256x16xbf16>
    %c0_51 = arith.constant 0 : index
    %c64 = arith.constant 64 : index
    %44 = vector.load %arg10[%c0_51, %c64] : memref<256x144xbf16, #tpu.memory_space<vmem>>, vector<256x16xbf16>
    tpu.vector_store %arg10[%c0_51, %c64], %43 {strides = array<i32>} : memref<256x144xbf16, #tpu.memory_space<vmem>>, vector<256x16xbf16>,
    %c0_52 = arith.constant 0 : index
    %c1_53 = arith.constant 1 : index
    %c2_54 = arith.constant 2 : index
    %c0_55 = arith.constant 0 : index
    %45 = vector.load %arg9[%c0_52, %c1_53, %c2_54, %c0_55] : memref<1x18x18x16xf32, #tpu.memory_space<vmem>>, vector<1x16x16x16xf32>
    %46 = vector.shape_cast %45 : vector<1x16x16x16xf32> to vector<256x16xf32>
    %47 = arith.truncf %46 : vector<256x16xf32> to vector<256x16xbf16>
    %c0_56 = arith.constant 0 : index
    %c80 = arith.constant 80 : index
    %48 = vector.load %arg10[%c0_56, %c80] : memref<256x144xbf16, #tpu.memory_space<vmem>>, vector<256x16xbf16>
    tpu.vector_store %arg10[%c0_56, %c80], %47 {strides = array<i32>} : memref<256x144xbf16, #tpu.memory_space<vmem>>, vector<256x16xbf16>,
    %c0_57 = arith.constant 0 : index
    %c2_58 = arith.constant 2 : index
    %c0_59 = arith.constant 0 : index
    %c0_60 = arith.constant 0 : index
    %49 = vector.load %arg9[%c0_57, %c2_58, %c0_59, %c0_60] : memref<1x18x18x16xf32, #tpu.memory_space<vmem>>, vector<1x16x16x16xf32>
    %50 = vector.shape_cast %49 : vector<1x16x16x16xf32> to vector<256x16xf32>
    %51 = arith.truncf %50 : vector<256x16xf32> to vector<256x16xbf16>
    %c0_61 = arith.constant 0 : index
    %c96 = arith.constant 96 : index
    %52 = vector.load %arg10[%c0_61, %c96] : memref<256x144xbf16, #tpu.memory_space<vmem>>, vector<256x16xbf16>
    tpu.vector_store %arg10[%c0_61, %c96], %51 {strides = array<i32>} : memref<256x144xbf16, #tpu.memory_space<vmem>>, vector<256x16xbf16>,
    %c0_62 = arith.constant 0 : index
    %c2_63 = arith.constant 2 : index
    %c1_64 = arith.constant 1 : index
    %c0_65 = arith.constant 0 : index
    %53 = vector.load %arg9[%c0_62, %c2_63, %c1_64, %c0_65] : memref<1x18x18x16xf32, #tpu.memory_space<vmem>>, vector<1x16x16x16xf32>
    %54 = vector.shape_cast %53 : vector<1x16x16x16xf32> to vector<256x16xf32>
    %55 = arith.truncf %54 : vector<256x16xf32> to vector<256x16xbf16>
    %c0_66 = arith.constant 0 : index
    %c112 = arith.constant 112 : index
    %56 = vector.load %arg10[%c0_66, %c112] : memref<256x144xbf16, #tpu.memory_space<vmem>>, vector<256x16xbf16>
    tpu.vector_store %arg10[%c0_66, %c112], %55 {strides = array<i32>} : memref<256x144xbf16, #tpu.memory_space<vmem>>, vector<256x16xbf16>,
    %c0_67 = arith.constant 0 : index
    %c2_68 = arith.constant 2 : index
    %c2_69 = arith.constant 2 : index
    %c0_70 = arith.constant 0 : index
    %57 = vector.load %arg9[%c0_67, %c2_68, %c2_69, %c0_70] : memref<1x18x18x16xf32, #tpu.memory_space<vmem>>, vector<1x16x16x16xf32>
    %58 = vector.shape_cast %57 : vector<1x16x16x16xf32> to vector<256x16xf32>
    %59 = arith.truncf %58 : vector<256x16xf32> to vector<256x16xbf16>
    %c0_71 = arith.constant 0 : index
    %c128 = arith.constant 128 : index
    %60 = vector.load %arg10[%c0_71, %c128] : memref<256x144xbf16, #tpu.memory_space<vmem>>, vector<256x16xbf16>
    tpu.vector_store %arg10[%c0_71, %c128], %59 {strides = array<i32>} : memref<256x144xbf16, #tpu.memory_space<vmem>>, vector<256x16xbf16>,
    %c0_72 = arith.constant 0 : index
    %c0_73 = arith.constant 0 : index
    %61 = vector.load %arg10[%c0_72, %c0_73] : memref<256x144xbf16, #tpu.memory_space<vmem>>, vector<256x144xbf16>
    %c0_74 = arith.constant 0 : index
    %c0_75 = arith.constant 0 : index
    %62 = vector.load %arg7[%c0_74, %c0_75] : memref<144x4xbf16, #tpu.memory_space<vmem>>, vector<144x4xbf16>
    %cst_76 = arith.constant dense<0.000000e+00> : vector<256x4xf32>
    %63 = tpu.matmul %61, %62, %cst_76 {dimension_numbers = #tpu.dot_dimension_numbers<[1], [0], [0], [1], [0, 0, 1, 1], [], []>} : vector<256x144xbf16>, vector<144x4xbf16>, vector<256x4xf32> -> vector<256x4xf32>
    %64 = vector.shape_cast %63 : vector<256x4xf32> to vector<1x16x16x4xf32>
    %c0_77 = arith.constant 0 : index
    %c0_78 = arith.constant 0 : index
    %c0_79 = arith.constant 0 : index
    %c0_80 = arith.constant 0 : index
    %65 = vector.load %arg8[%c0_77, %c0_78, %c0_79, %c0_80] : memref<1x16x16x4xf32, #tpu.memory_space<vmem>>, vector<1x16x16x4xf32>
    tpu.vector_store %arg8[%c0_77, %c0_78, %c0_79, %c0_80], %64 {strides = array<i32>} : memref<1x16x16x4xf32, #tpu.memory_space<vmem>>, vector<1x16x16x4xf32>,
    return
  }
  func.func @transform_0(%arg0: i32) -> (i32, i32, i32, i32) {
    %c0_i32 = arith.constant 0 : i32
    %c0_i32_0 = arith.constant 0 : i32
    %c0_i32_1 = arith.constant 0 : i32
    %c0_i32_2 = arith.constant 0 : i32
    return %arg0, %c0_i32, %c0_i32_0, %c0_i32_1 : i32, i32, i32, i32
  }
  func.func @transform_1(%arg0: i32) -> (i32, i32, i32, i32) {
    %c0_i32 = arith.constant 0 : i32
    %c0_i32_0 = arith.constant 0 : i32
    %c0_i32_1 = arith.constant 0 : i32
    %c0_i32_2 = arith.constant 0 : i32
    %c0_i32_3 = arith.constant 0 : i32
    return %c0_i32, %c0_i32_0, %c0_i32_1, %c0_i32_2 : i32, i32, i32, i32
  }
  func.func @transform_2(%arg0: i32) -> (i32, i32, i32, i32) {
    %c0_i32 = arith.constant 0 : i32
    %c0_i32_0 = arith.constant 0 : i32
    %c0_i32_1 = arith.constant 0 : i32
    %c0_i32_2 = arith.constant 0 : i32
    %c0_i32_3 = arith.constant 0 : i32
    return %c0_i32, %c0_i32_0, %c0_i32_1, %c0_i32_2 : i32, i32, i32, i32
  }
  func.func @transform_3(%arg0: i32) -> (i32, i32) {
    %c0_i32 = arith.constant 0 : i32
    %c0_i32_0 = arith.constant 0 : i32
    %c0_i32_1 = arith.constant 0 : i32
    return %c0_i32, %c0_i32_0 : i32, i32
  }
  func.func @transform_4(%arg0: i32) -> (i32, i32) {
    %c0_i32 = arith.constant 0 : i32
    %c0_i32_0 = arith.constant 0 : i32
    %c0_i32_1 = arith.constant 0 : i32
    return %c0_i32, %c0_i32_0 : i32, i32
  }
  func.func @transform_5(%arg0: i32) -> (i32, i32) {
    %c0_i32 = arith.constant 0 : i32
    %c0_i32_0 = arith.constant 0 : i32
    %c0_i32_1 = arith.constant 0 : i32
    return %c0_i32, %c0_i32_0 : i32, i32
  }
  func.func @transform_6(%arg0: i32) -> (i32, i32) {
    %c0_i32 = arith.constant 0 : i32
    %c0_i32_0 = arith.constant 0 : i32
    %c0_i32_1 = arith.constant 0 : i32
    return %c0_i32, %c0_i32_0 : i32, i32
  }
  func.func @transform_7(%arg0: i32) -> (i32, i32, i32, i32) {
    %c0_i32 = arith.constant 0 : i32
    %c0_i32_0 = arith.constant 0 : i32
    %c0_i32_1 = arith.constant 0 : i32
    %c0_i32_2 = arith.constant 0 : i32
    return %arg0, %c0_i32, %c0_i32_0, %c0_i32_1 : i32, i32, i32, i32
  }
}

</mosaic_0001>

<llo_original>
// kernel: bottleneck_forward.1
$region0: #{bottleneck_forward.1}
  #allocation0 [shape = 'u32[]', space=smem, size = 0x4, offset = 0x4, fixed_abs, tag = 'smem constant byte address 0x4 - core index']
  #allocation1 [shape = 'u32[144,128]{1,0:T(1,128)}', space=vmem, size = 0x12000, scoped, tag = 'internal scratch']
  #allocation2 [shape = 'f32[1,18,18,16]{3,2,1,0:T(8,128)}', space=vmem, size = 0x36000, scoped, tag = 'scratch operand']
  #allocation3 [shape = 'bf16[256,144]{1,0:T(8,128)(2,1)}', space=vmem, size = 0x20000, scoped, tag = 'scratch operand']
  %s0 = inlined_call_operand.vmem [shape: f32[2,16,16,4], index: 0, kind: input, shape index: {}]
  %s1 = inlined_call_operand.vmem [shape: f32[1,1,1,4], index: 1, kind: input, shape index: {}]
  %s2 = inlined_call_operand.vmem [shape: f32[1,1,1,4], index: 2, kind: input, shape index: {}]
  %s3 = inlined_call_operand.vmem [shape: bf16[4,16], index: 3, kind: input, shape index: {}]
  %s4 = inlined_call_operand.vmem [shape: f32[1,16], index: 4, kind: input, shape index: {}]
  %s5 = inlined_call_operand.vmem [shape: f32[1,16], index: 5, kind: input, shape index: {}]
  %s6 = inlined_call_operand.vmem [shape: bf16[144,4], index: 6, kind: input, shape index: {}]
  %s7 = inlined_call_operand.vmem [shape: f32[2,16,16,4], index: 7, kind: output, shape index: {}]
  %s8 = sld [smem:[#allocation0]]
  $region61: #{bottleneck_forward.1} parent=0
    _
  %s10 = ssub.s32 1, %s8
  %s11 = scalar_select 0, %s10, %s8
  loop: start=0, step=1, limit=4
  $region2: #{bottleneck_forward.1} parent=0 // loop_pre_header
    _
  $region3: #{bottleneck_forward.1} parent=0 // loop_header
    %s13 = sphi 0, %s17
    %p14 = scmp.ge.s32.totalorder %s13, 4
    %s23 = sphi 0, %s25
    %s26 = sphi 0, %s23
    %s27 = sphi 0, %s26
    %s43 = sphi 0, %s27
    %s47 = sphi 0, %s47
    %s49 = sphi 0, %s47
    %s50 = sphi 0, %s49
    %s64 = sphi 0, %s50
    %s68 = sphi 0, %s68
    %s70 = sphi 0, %s68
    %s71 = sphi 0, %s70
    %s85 = sphi 0, %s71
    %s89 = sphi 0, %s89
    %s91 = sphi 0, %s89
    %s92 = sphi 0, %s91
    %s106 = sphi 0, %s92
    %s110 = sphi 0, %s110
    %s112 = sphi 0, %s110
    %s113 = sphi 0, %s112
    %s127 = sphi 0, %s113
    %s131 = sphi 0, %s131
    %s133 = sphi 0, %s131
    %s134 = sphi 0, %s133
    %s148 = sphi 0, %s134
    %s152 = sphi 0, %s152
    %s154 = sphi 0, %s152
    %s155 = sphi 0, %s154
    %s169 = sphi 0, %s155
    %s175 = sphi 0, %s177
    %s178 = sphi 0, %s175
    %s179 = sphi 0, %s178
    %s195 = sphi 0, %s179
  $region4: #{bottleneck_forward.1} parent=0 // loop_header_branch
    %16 = sbr.rel (%p14) target = $region8
  $region5: #{bottleneck_forward.1} parent=0 // loop_body
    %s18 = ssub.s32 %s13, 1
    %s19 = ssub.s32 %s13, 2
    %s20 = sadd.s32 %s13, 1
    %s21 = ssub.s32 %s13, %s20
    %p22 = scmp.eq.s32.totalorder %s21, 0
    %s24 = sadd.s32 %s23, 1
    %s25 = scalar_select %p22, %s23, %s24
    %p28 = pneg %p22
    %p29 = scmp.eq.s32.totalorder %s13, 1
    %p30 = por %p28, %p29
    %p31 = scmp.ne.s32.totalorder %s23, %s26
    %p32 = scmp.eq.s32.totalorder %s13, 0
    %p33 = por %p31, %p32
    %p34 = scmp.ne.s32.totalorder %s23, %s26
    %p35 = scmp.eq.s32.totalorder %s18, 1
    %p36 = por %p34, %p35
    %p37 = scmp.ne.s32.totalorder %s26, %s27
    %p38 = scmp.eq.s32.totalorder %s18, 0
    %p39 = por %p37, %p38
    %p40 = scmp.ne.s32.totalorder %s26, %s27
    %p41 = scmp.eq.s32.totalorder %s19, 1
    %p42 = por %p40, %p41
    %p44 = scmp.ne.s32.totalorder %s27, %s43
    %p45 = scmp.eq.s32.totalorder %s19, 0
    %p46 = por %p44, %p45
    %s48 = sadd.s32 %s47, 1
    %p51 = scmp.eq.s32.totalorder %s13, 1
    %p52 = scmp.ne.s32.totalorder %s47, %s49
    %p53 = scmp.eq.s32.totalorder %s13, 0
    %p54 = por %p52, %p53
    %p55 = scmp.ne.s32.totalorder %s47, %s49
    %p56 = scmp.eq.s32.totalorder %s18, 1
    %p57 = por %p55, %p56
    %p58 = scmp.ne.s32.totalorder %s49, %s50
    %p59 = scmp.eq.s32.totalorder %s18, 0
    %p60 = por %p58, %p59
    %p61 = scmp.ne.s32.totalorder %s49, %s50
    %p62 = scmp.eq.s32.totalorder %s19, 1
    %p63 = por %p61, %p62
    %p65 = scmp.ne.s32.totalorder %s50, %s64
    %p66 = scmp.eq.s32.totalorder %s19, 0
    %p67 = por %p65, %p66
    %s69 = sadd.s32 %s68, 1
    %p72 = scmp.eq.s32.totalorder %s13, 1
    %p73 = scmp.ne.s32.totalorder %s68, %s70
    %p74 = scmp.eq.s32.totalorder %s13, 0
    %p75 = por %p73, %p74
    %p76 = scmp.ne.s32.totalorder %s68, %s70
    %p77 = scmp.eq.s32.totalorder %s18, 1
    %p78 = por %p76, %p77
    %p79 = scmp.ne.s32.totalorder %s70, %s71
    %p80 = scmp.eq.s32.totalorder %s18, 0
    %p81 = por %p79, %p80
    %p82 = scmp.ne.s32.totalorder %s70, %s71
    %p83 = scmp.eq.s32.totalorder %s19, 1
    %p84 = por %p82, %p83
    %p86 = scmp.ne.s32.totalorder %s71, %s85
    %p87 = scmp.eq.s32.totalorder %s19, 0
    %p88 = por %p86, %p87
    %s90 = sadd.s32 %s89, 1
    %p93 = scmp.eq.s32.totalorder %s13, 1
    %p94 = scmp.ne.s32.totalorder %s89, %s91
    %p95 = scmp.eq.s32.totalorder %s13, 0
    %p96 = por %p94, %p95
    %p97 = scmp.ne.s32.totalorder %s89, %s91
    %p98 = scmp.eq.s32.totalorder %s18, 1
    %p99 = por %p97, %p98
    %p100 = scmp.ne.s32.totalorder %s91, %s92
    %p101 = scmp.eq.s32.totalorder %s18, 0
    %p102 = por %p100, %p101
    %p103 = scmp.ne.s32.totalorder %s91, %s92
    %p104 = scmp.eq.s32.totalorder %s19, 1
    %p105 = por %p103, %p104
    %p107 = scmp.ne.s32.totalorder %s92, %s106
    %p108 = scmp.eq.s32.totalorder %s19, 0
    %p109 = por %p107, %p108
    %s111 = sadd.s32 %s110, 1
    %p114 = scmp.eq.s32.totalorder %s13, 1
    %p115 = scmp.ne.s32.totalorder %s110, %s112
    %p116 = scmp.eq.s32.totalorder %s13, 0
    %p117 = por %p115, %p116
    %p118 = scmp.ne.s32.totalorder %s110, %s112
    %p119 = scmp.eq.s32.totalorder %s18, 1
    %p120 = por %p118, %p119
    %p121 = scmp.ne.s32.totalorder %s112, %s113
    %p122 = scmp.eq.s32.totalorder %s18, 0
    %p123 = por %p121, %p122
    %p124 = scmp.ne.s32.totalorder %s112, %s113
    %p125 = scmp.eq.s32.totalorder %s19, 1
    %p126 = por %p124, %p125
    %p128 = scmp.ne.s32.totalorder %s113, %s127
    %p129 = scmp.eq.s32.totalorder %s19, 0
    %p130 = por %p128, %p129
    %s132 = sadd.s32 %s131, 1
    %p135 = scmp.eq.s32.totalorder %s13, 1
    %p136 = scmp.ne.s32.totalorder %s131, %s133
    %p137 = scmp.eq.s32.totalorder %s13, 0
    %p138 = por %p136, %p137
    %p139 = scmp.ne.s32.totalorder %s131, %s133
    %p140 = scmp.eq.s32.totalorder %s18, 1
    %p141 = por %p139, %p140
    %p142 = scmp.ne.s32.totalorder %s133, %s134
    %p143 = scmp.eq.s32.totalorder %s18, 0
    %p144 = por %p142, %p143
    %p145 = scmp.ne.s32.totalorder %s133, %s134
    %p146 = scmp.eq.s32.totalorder %s19, 1
    %p147 = por %p145, %p146
    %p149 = scmp.ne.s32.totalorder %s134, %s148
    %p150 = scmp.eq.s32.totalorder %s19, 0
    %p151 = por %p149, %p150
    %s153 = sadd.s32 %s152, 1
    %p156 = scmp.eq.s32.totalorder %s13, 1
    %p157 = scmp.ne.s32.totalorder %s152, %s154
    %p158 = scmp.eq.s32.totalorder %s13, 0
    %p159 = por %p157, %p158
    %p160 = scmp.ne.s32.totalorder %s152, %s154
    %p161 = scmp.eq.s32.totalorder %s18, 1
    %p162 = por %p160, %p161
    %p163 = scmp.ne.s32.totalorder %s154, %s155
    %p164 = scmp.eq.s32.totalorder %s18, 0
    %p165 = por %p163, %p164
    %p166 = scmp.ne.s32.totalorder %s154, %s155
    %p167 = scmp.eq.s32.totalorder %s19, 1
    %p168 = por %p166, %p167
    %p170 = scmp.ne.s32.totalorder %s155, %s169
    %p171 = scmp.eq.s32.totalorder %s19, 0
    %p172 = por %p170, %p171
    %s173 = ssub.s32 %s13, %s20
    %p174 = scmp.eq.s32.totalorder %s173, 0
    %s176 = sadd.s32 %s175, 1
    %s177 = scalar_select %p174, %s175, %s176
    %p180 = pneg %p174
    %p181 = scmp.eq.s32.totalorder %s13, 1
    %p182 = por %p180, %p181
    %p183 = scmp.ne.s32.totalorder %s175, %s178
    %p184 = scmp.eq.s32.totalorder %s13, 0
    %p185 = por %p183, %p184
    %p186 = scmp.ne.s32.totalorder %s175, %s178
    %p187 = scmp.eq.s32.totalorder %s18, 1
    %p188 = por %p186, %p187
    %p189 = scmp.ne.s32.totalorder %s178, %s179
    %p190 = scmp.eq.s32.totalorder %s18, 0
    %p191 = por %p189, %p190
    %p192 = scmp.ne.s32.totalorder %s178, %s179
    %p193 = scmp.eq.s32.totalorder %s19, 1
    %p194 = por %p192, %p193
    %p196 = scmp.ne.s32.totalorder %s179, %s195
    %p197 = scmp.eq.s32.totalorder %s19, 0
    %p198 = por %p196, %p197
    %p199 = scmp.le.s32.totalorder 1, %s13
    %p200 = scmp.lt.s32.totalorder %s13, 3
    %p201 = pnand %p199, %p200
    %p202 = pneg %p201
    // Predicated region
    $region9: #{bottleneck_forward.1} parent=5 // pred_check
      _
    $region10: #{bottleneck_forward.1} parent=5 // pred_check_branch
      %204 = sbr.rel (%p201) target = $region12
    $region11: #{bottleneck_forward.1} parent=5 // pred_region
      %s205 = ssub.s32 %s13, 1
      // Predicated region
      $region13: #{bottleneck_forward.1} parent=11 // pred_check
        %p206 = pneg %p60
      $region14: #{bottleneck_forward.1} parent=11 // pred_check_branch
        %208 = sbr.rel (%p206) target = $region16
      $region15: #{bottleneck_forward.1} parent=11 // pred_region
        _
      $region16: #{bottleneck_forward.1} parent=11 // pred_fallthru
        _
      // Predicated region
      $region17: #{bottleneck_forward.1} parent=11 // pred_check
        %p209 = pneg %p81
      $region18: #{bottleneck_forward.1} parent=11 // pred_check_branch
        %211 = sbr.rel (%p209) target = $region20
      $region19: #{bottleneck_forward.1} parent=11 // pred_region
        _
      $region20: #{bottleneck_forward.1} parent=11 // pred_fallthru
        _
      // Predicated region
      $region21: #{bottleneck_forward.1} parent=11 // pred_check
        %p212 = pneg %p102
      $region22: #{bottleneck_forward.1} parent=11 // pred_check_branch
        %214 = sbr.rel (%p212) target = $region24
      $region23: #{bottleneck_forward.1} parent=11 // pred_region
        _
      $region24: #{bottleneck_forward.1} parent=11 // pred_fallthru
        _
      // Predicated region
      $region25: #{bottleneck_forward.1} parent=11 // pred_check
        %p215 = pneg %p123
      $region26: #{bottleneck_forward.1} parent=11 // pred_check_branch
        %217 = sbr.rel (%p215) target = $region28
      $region27: #{bottleneck_forward.1} parent=11 // pred_region
        _
      $region28: #{bottleneck_forward.1} parent=11 // pred_fallthru
        _
      // Predicated region
      $region29: #{bottleneck_forward.1} parent=11 // pred_check
        %p218 = pneg %p144
      $region30: #{bottleneck_forward.1} parent=11 // pred_check_branch
        %220 = sbr.rel (%p218) target = $region32
      $region31: #{bottleneck_forward.1} parent=11 // pred_region
        _
      $region32: #{bottleneck_forward.1} parent=11 // pred_fallthru
        _
      // Predicated region
      $region33: #{bottleneck_forward.1} parent=11 // pred_check
        %p221 = pneg %p165
      $region34: #{bottleneck_forward.1} parent=11 // pred_check_branch
        %223 = sbr.rel (%p221) target = $region36
      $region35: #{bottleneck_forward.1} parent=11 // pred_region
        _
      $region36: #{bottleneck_forward.1} parent=11 // pred_fallthru
        _
    $region12: #{bottleneck_forward.1} parent=5 // pred_fallthru
      _
    %p224 = scmp.lt.s32.totalorder %s13, 2
    // Predicated region
    $region37: #{bottleneck_forward.1} parent=5 // pred_check
      %p225 = pneg %p224
    $region38: #{bottleneck_forward.1} parent=5 // pred_check_branch
      %227 = sbr.rel (%p225) target = $region40
    $region39: #{bottleneck_forward.1} parent=5 // pred_region
      // Predicated region
      $region41: #{bottleneck_forward.1} parent=39 // pred_check
        %p228 = pneg %p33
      $region42: #{bottleneck_forward.1} parent=39 // pred_check_branch
        %230 = sbr.rel (%p228) target = $region44
      $region43: #{bottleneck_forward.1} parent=39 // pred_region
        %p231 = scmp.lt.s32.totalorder %s13, 1
        %s232 = scalar_select %p231, %s13, 1
        %s233 = smul.addr %s232, 32
        %s234 = smul.addr %s233, 8
        %s235 = scalar_lea.vmem %s0, %s234
      $region44: #{bottleneck_forward.1} parent=39 // pred_fallthru
        _
    $region40: #{bottleneck_forward.1} parent=5 // pred_fallthru
      _
    %p236 = scmp.le.s32.totalorder 1, %s13
    %p237 = scmp.lt.s32.totalorder %s13, 3
    %p238 = pnand %p236, %p237
    %p239 = pneg %p238
    // Predicated region
    $region45: #{bottleneck_forward.1} parent=5 // pred_check
      _
    $region46: #{bottleneck_forward.1} parent=5 // pred_check_branch
      %241 = sbr.rel (%p238) target = $region48
    $region47: #{bottleneck_forward.1} parent=5 // pred_region
      %s242 = ssub.s32 %s13, 1
      %p243 = scmp.lt.s32.totalorder %s18, 1
      %s244 = scalar_select %p243, %s18, 1
      %s245 = smul.addr %s244, 32
      %s246 = smul.addr %s245, 8
      %s247 = scalar_lea.vmem %s0, %s246
      %p248 = pneg %p39
      %p249 = pneg %p36
      %p250 = pneg %p60
      %p251 = pneg %p57
      %p252 = pneg %p81
      %p253 = pneg %p78
      %p254 = pneg %p102
      %p255 = pneg %p99
      %p256 = pneg %p123
      %p257 = pneg %p120
      %p258 = pneg %p144
      %p259 = pneg %p141
      %p260 = pneg %p165
      %p261 = pneg %p162
      %p262 = pneg %p191
      %p263 = pneg %p188
      %p264 = scmp.lt.s32.totalorder %s18, 1
      %s265 = scalar_select %p264, %s18, 1
      %s266 = smul.addr %s265, 32
      %s267 = smul.addr %s266, 8
      %s268 = scalar_lea.vmem %s7, %s267
      %p269 = scmp.lt.s32.totalorder %s18, 1
      %s270 = scalar_select %p269, %s18, 1
      %s271 = smul.addr %s270, 32
      %s272 = smul.addr %s271, 8
      %s273 = scalar_lea.vmem %s0, %s272
      %p274 = scmp.lt.s32.totalorder %s18, 1
      %s275 = scalar_select %p274, %s18, 1
      %s276 = smul.addr %s275, 32
      %s277 = smul.addr %s276, 8
      %s278 = scalar_lea.vmem %s7, %s277
      %v280 = vld [vmem:[%s273] sm:$0xff]
      %v281 = vld [vmem:[%s273 + $0x8] sm:$0xff]
      %v282 = vld [vmem:[%s273 + $0x10] sm:$0xff]
      %v283 = vld [vmem:[%s273 + $0x18] sm:$0xff]
      %v284 = vld [vmem:[%s273 + $0x20] sm:$0xff]
      %v285 = vld [vmem:[%s273 + $0x28] sm:$0xff]
      %v286 = vld [vmem:[%s273 + $0x30] sm:$0xff]
      %v287 = vld [vmem:[%s273 + $0x38] sm:$0xff]
      %v288 = vld [vmem:[%s273 + $0x40] sm:$0xff]
      %v289 = vld [vmem:[%s273 + $0x48] sm:$0xff]
      %v290 = vld [vmem:[%s273 + $0x50] sm:$0xff]
      %v291 = vld [vmem:[%s273 + $0x58] sm:$0xff]
      %v292 = vld [vmem:[%s273 + $0x60] sm:$0xff]
      %v293 = vld [vmem:[%s273 + $0x68] sm:$0xff]
      %v294 = vld [vmem:[%s273 + $0x70] sm:$0xff]
      %v295 = vld [vmem:[%s273 + $0x78] sm:$0xff]
      %v296 = vld [vmem:[%s273 + $0x80] sm:$0xff]
      %v297 = vld [vmem:[%s273 + $0x88] sm:$0xff]
      %v298 = vld [vmem:[%s273 + $0x90] sm:$0xff]
      %v299 = vld [vmem:[%s273 + $0x98] sm:$0xff]
      %v300 = vld [vmem:[%s273 + $0xa0] sm:$0xff]
      %v301 = vld [vmem:[%s273 + $0xa8] sm:$0xff]
      %v302 = vld [vmem:[%s273 + $0xb0] sm:$0xff]
      %v303 = vld [vmem:[%s273 + $0xb8] sm:$0xff]
      %v304 = vld [vmem:[%s273 + $0xc0] sm:$0xff]
      %v305 = vld [vmem:[%s273 + $0xc8] sm:$0xff]
      %v306 = vld [vmem:[%s273 + $0xd0] sm:$0xff]
      %v307 = vld [vmem:[%s273 + $0xd8] sm:$0xff]
      %v308 = vld [vmem:[%s273 + $0xe0] sm:$0xff]
      %v309 = vld [vmem:[%s273 + $0xe8] sm:$0xff]
      %v310 = vld [vmem:[%s273 + $0xf0] sm:$0xff]
      %v311 = vld [vmem:[%s273 + $0xf8] sm:$0xff]
      %v312 = vld [vmem:[%s1] sm:$0x1]
      %v314 = vlaneseq
      %v315 = vshrl.u32 %v314, 7
      %v316 = vsub.s32 0, %v315
      %v317 = vrot.slane %v312, %v316
      %v319 = vmul.f32 %v280, %v317
      %v320 = vmul.f32 %v281, %v317
      %v321 = vmul.f32 %v282, %v317
      %v322 = vmul.f32 %v283, %v317
      %v323 = vmul.f32 %v284, %v317
      %v324 = vmul.f32 %v285, %v317
      %v325 = vmul.f32 %v286, %v317
      %v326 = vmul.f32 %v287, %v317
      %v327 = vmul.f32 %v288, %v317
      %v328 = vmul.f32 %v289, %v317
      %v329 = vmul.f32 %v290, %v317
      %v330 = vmul.f32 %v291, %v317
      %v331 = vmul.f32 %v292, %v317
      %v332 = vmul.f32 %v293, %v317
      %v333 = vmul.f32 %v294, %v317
      %v334 = vmul.f32 %v295, %v317
      %v335 = vmul.f32 %v296, %v317
      %v336 = vmul.f32 %v297, %v317
      %v337 = vmul.f32 %v298, %v317
      %v338 = vmul.f32 %v299, %v317
      %v339 = vmul.f32 %v300, %v317
      %v340 = vmul.f32 %v301, %v317
      %v341 = vmul.f32 %v302, %v317
      %v342 = vmul.f32 %v303, %v317
      %v343 = vmul.f32 %v304, %v317
      %v344 = vmul.f32 %v305, %v317
      %v345 = vmul.f32 %v306, %v317
      %v346 = vmul.f32 %v307, %v317
      %v347 = vmul.f32 %v308, %v317
      %v348 = vmul.f32 %v309, %v317
      %v349 = vmul.f32 %v310, %v317
      %v350 = vmul.f32 %v311, %v317
      %v351 = vld [vmem:[%s2] sm:$0x1]
      %v353 = vlaneseq
      %v354 = vshrl.u32 %v353, 7
      %v355 = vsub.s32 0, %v354
      %v356 = vrot.slane %v351, %v355
      %v358 = vadd.f32 %v319, %v356
      %v359 = vadd.f32 %v320, %v356
      %v360 = vadd.f32 %v321, %v356
      %v361 = vadd.f32 %v322, %v356
      %v362 = vadd.f32 %v323, %v356
      %v363 = vadd.f32 %v324, %v356
      %v364 = vadd.f32 %v325, %v356
      %v365 = vadd.f32 %v326, %v356
      %v366 = vadd.f32 %v327, %v356
      %v367 = vadd.f32 %v328, %v356
      %v368 = vadd.f32 %v329, %v356
      %v369 = vadd.f32 %v330, %v356
      %v370 = vadd.f32 %v331, %v356
      %v371 = vadd.f32 %v332, %v356
      %v372 = vadd.f32 %v333, %v356
      %v373 = vadd.f32 %v334, %v356
      %v374 = vadd.f32 %v335, %v356
      %v375 = vadd.f32 %v336, %v356
      %v376 = vadd.f32 %v337, %v356
      %v377 = vadd.f32 %v338, %v356
      %v378 = vadd.f32 %v339, %v356
      %v379 = vadd.f32 %v340, %v356
      %v380 = vadd.f32 %v341, %v356
      %v381 = vadd.f32 %v342, %v356
      %v382 = vadd.f32 %v343, %v356
      %v383 = vadd.f32 %v344, %v356
      %v384 = vadd.f32 %v345, %v356
      %v385 = vadd.f32 %v346, %v356
      %v386 = vadd.f32 %v347, %v356
      %v387 = vadd.f32 %v348, %v356
      %v388 = vadd.f32 %v349, %v356
      %v389 = vadd.f32 %v350, %v356
      %v390 = vmax.f32 %v358, 0.0
      %v391 = vmax.f32 %v359, 0.0
      %v392 = vmax.f32 %v360, 0.0
      %v393 = vmax.f32 %v361, 0.0
      %v394 = vmax.f32 %v362, 0.0
      %v395 = vmax.f32 %v363, 0.0
      %v396 = vmax.f32 %v364, 0.0
      %v397 = vmax.f32 %v365, 0.0
      %v398 = vmax.f32 %v366, 0.0
      %v399 = vmax.f32 %v367, 0.0
      %v400 = vmax.f32 %v368, 0.0
      %v401 = vmax.f32 %v369, 0.0
      %v402 = vmax.f32 %v370, 0.0
      %v403 = vmax.f32 %v371, 0.0
      %v404 = vmax.f32 %v372, 0.0
      %v405 = vmax.f32 %v373, 0.0
      %v406 = vmax.f32 %v374, 0.0
      %v407 = vmax.f32 %v375, 0.0
      %v408 = vmax.f32 %v376, 0.0
      %v409 = vmax.f32 %v377, 0.0
      %v410 = vmax.f32 %v378, 0.0
      %v411 = vmax.f32 %v379, 0.0
      %v412 = vmax.f32 %v380, 0.0
      %v413 = vmax.f32 %v381, 0.0
      %v414 = vmax.f32 %v382, 0.0
      %v415 = vmax.f32 %v383, 0.0
      %v416 = vmax.f32 %v384, 0.0
      %v417 = vmax.f32 %v385, 0.0
      %v418 = vmax.f32 %v386, 0.0
      %v419 = vmax.f32 %v387, 0.0
      %v420 = vmax.f32 %v388, 0.0
      %v421 = vmax.f32 %v389, 0.0
      %v422 = vpack.c.bf16 %v391, %v390
      %v423 = vpack.c.bf16 %v393, %v392
      %v424 = vpack.c.bf16 %v395, %v394
      %v425 = vpack.c.bf16 %v397, %v396
      %v426 = vpack.c.bf16 %v399, %v398
      %v427 = vpack.c.bf16 %v401, %v400
      %v428 = vpack.c.bf16 %v403, %v402
      %v429 = vpack.c.bf16 %v405, %v404
      %v430 = vpack.c.bf16 %v407, %v406
      %v431 = vpack.c.bf16 %v409, %v408
      %v432 = vpack.c.bf16 %v411, %v410
      %v433 = vpack.c.bf16 %v413, %v412
      %v434 = vpack.c.bf16 %v415, %v414
      %v435 = vpack.c.bf16 %v417, %v416
      %v436 = vpack.c.bf16 %v419, %v418
      %v437 = vpack.c.bf16 %v421, %v420
      %v438 = vld [vmem:[%s3] sm:$0x3]
      %vm439 = vcmask 31744
      %v441 = vsel %vm439, %v422, 0
      %v444 = vsel %vm439, %v423, 0
      %v447 = vsel %vm439, %v424, 0
      %v450 = vsel %vm439, %v425, 0
      %v453 = vsel %vm439, %v426, 0
      %v456 = vsel %vm439, %v427, 0
      %v459 = vsel %vm439, %v428, 0
      %v462 = vsel %vm439, %v429, 0
      %v465 = vsel %vm439, %v430, 0
      %v468 = vsel %vm439, %v431, 0
      %v471 = vsel %vm439, %v432, 0
      %v474 = vsel %vm439, %v433, 0
      %v477 = vsel %vm439, %v434, 0
      %v480 = vsel %vm439, %v435, 0
      %v483 = vsel %vm439, %v436, 0
      %v486 = vsel %vm439, %v437, 0
      %vm488 = vcmask 1041408
      %v490 = vsel %vm488, %v438, 0
      %492 = vmatprep.subr.bf16.mxu0 0
      %493 = vmatpush1.bf16.msra.mxu0 0
      %494 = vmatprep.subr.bf16.mxu0 0
      %495 = vmatpush1.bf16.msra.mxu0 0
      %496 = vmatprep.subr.bf16.mxu0 0
      %497 = vmatpush1.bf16.msra.mxu0 0
      %498 = vmatprep.subr.bf16.mxu0 0
      %499 = vmatpush1.bf16.msra.mxu0 0
      %500 = vmatprep.subr.bf16.mxu0 0
      %501 = vmatpush1.bf16.msra.mxu0 0
      %502 = vmatprep.subr.bf16.mxu0 0
      %503 = vmatpush1.bf16.msra.mxu0 0
      %504 = vmatprep.subr.bf16.mxu0 0
      %505 = vmatpush1.bf16.msra.mxu0 0
      %506 = vmatprep.subr.bf16.mxu0 0
      %507 = vmatpush1.bf16.msra.mxu0 %v490
      %508 = vmatprep.subr.bf16.mxu0 0
      %509 = vmatpush2.bf16.msra.mxu0 0
      %510 = vmatprep.subr.bf16.mxu0 0
      %511 = vmatpush2.bf16.msra.mxu0 0
      %512 = vmatprep.subr.bf16.mxu0 0
      %513 = vmatpush2.bf16.msra.mxu0 0
      %514 = vmatprep.subr.bf16.mxu0 0
      %515 = vmatpush2.bf16.msra.mxu0 0
      %516 = vmatprep.subr.bf16.mxu0 0
      %517 = vmatpush2.bf16.msra.mxu0 0
      %518 = vmatprep.subr.bf16.mxu0 0
      %519 = vmatpush2.bf16.msra.mxu0 0
      %520 = vmatprep.subr.bf16.mxu0 0
      %521 = vmatpush2.bf16.msra.mxu0 0
      %522 = vmatprep.subr.bf16.mxu0 0
      %523 = vmatpush2.bf16.msra.mxu0 0
      %524 = vmatprep.mubr.bf16.mxu0 0
      %525 = vmatmul.mubr.bf16.gmra.mxu0 %v441
      %v526 = vpop.f32.mrf.mxu0
      %v527 = vadd.f32 0.0, %v526
      %v528 = vpop.f32.mrf.mxu0
      %v529 = vpop.f32.mrf.mxu0
      %v530 = vadd.f32 0.0, %v529
      %v531 = vpop.f32.mrf.mxu0
      %532 = vmatprep.mubr.bf16.mxu0 0
      %533 = vmatmul.mubr.bf16.gmra.mxu0 %v444
      %v534 = vpop.f32.mrf.mxu0
      %v535 = vadd.f32 0.0, %v534
      %v536 = vpop.f32.mrf.mxu0
      %v537 = vpop.f32.mrf.mxu0
      %v538 = vadd.f32 0.0, %v537
      %v539 = vpop.f32.mrf.mxu0
      %540 = vmatprep.mubr.bf16.mxu0 0
      %541 = vmatmul.mubr.bf16.gmra.mxu0 %v447
      %v542 = vpop.f32.mrf.mxu0
      %v543 = vadd.f32 0.0, %v542
      %v544 = vpop.f32.mrf.mxu0
      %v545 = vpop.f32.mrf.mxu0
      %v546 = vadd.f32 0.0, %v545
      %v547 = vpop.f32.mrf.mxu0
      %548 = vmatprep.mubr.bf16.mxu0 0
      %549 = vmatmul.mubr.bf16.gmra.mxu0 %v450
      %v550 = vpop.f32.mrf.mxu0
      %v551 = vadd.f32 0.0, %v550
      %v552 = vpop.f32.mrf.mxu0
      %v553 = vpop.f32.mrf.mxu0
      %v554 = vadd.f32 0.0, %v553
      %v555 = vpop.f32.mrf.mxu0
      %556 = vmatprep.mubr.bf16.mxu0 0
      %557 = vmatmul.mubr.bf16.gmra.mxu0 %v453
      %v558 = vpop.f32.mrf.mxu0
      %v559 = vadd.f32 0.0, %v558
      %v560 = vpop.f32.mrf.mxu0
      %v561 = vpop.f32.mrf.mxu0
      %v562 = vadd.f32 0.0, %v561
      %v563 = vpop.f32.mrf.mxu0
      %564 = vmatprep.mubr.bf16.mxu0 0
      %565 = vmatmul.mubr.bf16.gmra.mxu0 %v456
      %v566 = vpop.f32.mrf.mxu0
      %v567 = vadd.f32 0.0, %v566
      %v568 = vpop.f32.mrf.mxu0
      %v569 = vpop.f32.mrf.mxu0
      %v570 = vadd.f32 0.0, %v569
      %v571 = vpop.f32.mrf.mxu0
      %572 = vmatprep.mubr.bf16.mxu0 0
      %573 = vmatmul.mubr.bf16.gmra.mxu0 %v459
      %v574 = vpop.f32.mrf.mxu0
      %v575 = vadd.f32 0.0, %v574
      %v576 = vpop.f32.mrf.mxu0
      %v577 = vpop.f32.mrf.mxu0
      %v578 = vadd.f32 0.0, %v577
      %v579 = vpop.f32.mrf.mxu0
      %580 = vmatprep.mubr.bf16.mxu0 0
      %581 = vmatmul.mubr.bf16.gmra.mxu0 %v462
      %v582 = vpop.f32.mrf.mxu0
      %v583 = vadd.f32 0.0, %v582
      %v584 = vpop.f32.mrf.mxu0
      %v585 = vpop.f32.mrf.mxu0
      %v586 = vadd.f32 0.0, %v585
      %v587 = vpop.f32.mrf.mxu0
      %588 = vmatprep.mubr.bf16.mxu0 0
      %589 = vmatmul.mubr.bf16.gmra.mxu0 %v465
      %v590 = vpop.f32.mrf.mxu0
      %v591 = vadd.f32 0.0, %v590
      %v592 = vpop.f32.mrf.mxu0
      %v593 = vpop.f32.mrf.mxu0
      %v594 = vadd.f32 0.0, %v593
      %v595 = vpop.f32.mrf.mxu0
      %596 = vmatprep.mubr.bf16.mxu0 0
      %597 = vmatmul.mubr.bf16.gmra.mxu0 %v468
      %v598 = vpop.f32.mrf.mxu0
      %v599 = vadd.f32 0.0, %v598
      %v600 = vpop.f32.mrf.mxu0
      %v601 = vpop.f32.mrf.mxu0
      %v602 = vadd.f32 0.0, %v601
      %v603 = vpop.f32.mrf.mxu0
      %604 = vmatprep.mubr.bf16.mxu0 0
      %605 = vmatmul.mubr.bf16.gmra.mxu0 %v471
      %v606 = vpop.f32.mrf.mxu0
      %v607 = vadd.f32 0.0, %v606
      %v608 = vpop.f32.mrf.mxu0
      %v609 = vpop.f32.mrf.mxu0
      %v610 = vadd.f32 0.0, %v609
      %v611 = vpop.f32.mrf.mxu0
      %612 = vmatprep.mubr.bf16.mxu0 0
      %613 = vmatmul.mubr.bf16.gmra.mxu0 %v474
      %v614 = vpop.f32.mrf.mxu0
      %v615 = vadd.f32 0.0, %v614
      %v616 = vpop.f32.mrf.mxu0
      %v617 = vpop.f32.mrf.mxu0
      %v618 = vadd.f32 0.0, %v617
      %v619 = vpop.f32.mrf.mxu0
      %620 = vmatprep.mubr.bf16.mxu0 0
      %621 = vmatmul.mubr.bf16.gmra.mxu0 %v477
      %v622 = vpop.f32.mrf.mxu0
      %v623 = vadd.f32 0.0, %v622
      %v624 = vpop.f32.mrf.mxu0
      %v625 = vpop.f32.mrf.mxu0
      %v626 = vadd.f32 0.0, %v625
      %v627 = vpop.f32.mrf.mxu0
      %628 = vmatprep.mubr.bf16.mxu0 0
      %629 = vmatmul.mubr.bf16.gmra.mxu0 %v480
      %v630 = vpop.f32.mrf.mxu0
      %v631 = vadd.f32 0.0, %v630
      %v632 = vpop.f32.mrf.mxu0
      %v633 = vpop.f32.mrf.mxu0
      %v634 = vadd.f32 0.0, %v633
      %v635 = vpop.f32.mrf.mxu0
      %636 = vmatprep.mubr.bf16.mxu0 0
      %637 = vmatmul.mubr.bf16.gmra.mxu0 %v483
      %v638 = vpop.f32.mrf.mxu0
      %v639 = vadd.f32 0.0, %v638
      %v640 = vpop.f32.mrf.mxu0
      %v641 = vpop.f32.mrf.mxu0
      %v642 = vadd.f32 0.0, %v641
      %v643 = vpop.f32.mrf.mxu0
      %644 = vmatprep.mubr.bf16.mxu0 0
      %645 = vmatmul.mubr.bf16.gmra.mxu0 %v486
      %v646 = vpop.f32.mrf.mxu0
      %v647 = vadd.f32 0.0, %v646
      %v648 = vpop.f32.mrf.mxu0
      %v649 = vpop.f32.mrf.mxu0
      %v650 = vadd.f32 0.0, %v649
      %v651 = vpop.f32.mrf.mxu0
      %652 = vdwg.mxu0
      %v653 = vld [vmem:[%s4] sm:$0x1]
      %v655 = vlaneseq
      %v656 = vshrl.u32 %v655, 7
      %v657 = vsub.s32 0, %v656
      %v658 = vrot.slane %v653, %v657
      %v660 = vmul.f32 %v527, %v658
      %v661 = vmul.f32 %v530, %v658
      %v662 = vmul.f32 %v535, %v658
      %v663 = vmul.f32 %v538, %v658
      %v664 = vmul.f32 %v543, %v658
      %v665 = vmul.f32 %v546, %v658
      %v666 = vmul.f32 %v551, %v658
      %v667 = vmul.f32 %v554, %v658
      %v668 = vmul.f32 %v559, %v658
      %v669 = vmul.f32 %v562, %v658
      %v670 = vmul.f32 %v567, %v658
      %v671 = vmul.f32 %v570, %v658
      %v672 = vmul.f32 %v575, %v658
      %v673 = vmul.f32 %v578, %v658
      %v674 = vmul.f32 %v583, %v658
      %v675 = vmul.f32 %v586, %v658
      %v676 = vmul.f32 %v591, %v658
      %v677 = vmul.f32 %v594, %v658
      %v678 = vmul.f32 %v599, %v658
      %v679 = vmul.f32 %v602, %v658
      %v680 = vmul.f32 %v607, %v658
      %v681 = vmul.f32 %v610, %v658
      %v682 = vmul.f32 %v615, %v658
      %v683 = vmul.f32 %v618, %v658
      %v684 = vmul.f32 %v623, %v658
      %v685 = vmul.f32 %v626, %v658
      %v686 = vmul.f32 %v631, %v658
      %v687 = vmul.f32 %v634, %v658
      %v688 = vmul.f32 %v639, %v658
      %v689 = vmul.f32 %v642, %v658
      %v690 = vmul.f32 %v647, %v658
      %v691 = vmul.f32 %v650, %v658
      %v692 = vld [vmem:[%s5] sm:$0x1]
      %v694 = vlaneseq
      %v695 = vshrl.u32 %v694, 7
      %v696 = vsub.s32 0, %v695
      %v697 = vrot.slane %v692, %v696
      %v699 = vadd.f32 %v660, %v697
      %v700 = vadd.f32 %v661, %v697
      %v701 = vadd.f32 %v662, %v697
      %v702 = vadd.f32 %v663, %v697
      %v703 = vadd.f32 %v664, %v697
      %v704 = vadd.f32 %v665, %v697
      %v705 = vadd.f32 %v666, %v697
      %v706 = vadd.f32 %v667, %v697
      %v707 = vadd.f32 %v668, %v697
      %v708 = vadd.f32 %v669, %v697
      %v709 = vadd.f32 %v670, %v697
      %v710 = vadd.f32 %v671, %v697
      %v711 = vadd.f32 %v672, %v697
      %v712 = vadd.f32 %v673, %v697
      %v713 = vadd.f32 %v674, %v697
      %v714 = vadd.f32 %v675, %v697
      %v715 = vadd.f32 %v676, %v697
      %v716 = vadd.f32 %v677, %v697
      %v717 = vadd.f32 %v678, %v697
      %v718 = vadd.f32 %v679, %v697
      %v719 = vadd.f32 %v680, %v697
      %v720 = vadd.f32 %v681, %v697
      %v721 = vadd.f32 %v682, %v697
      %v722 = vadd.f32 %v683, %v697
      %v723 = vadd.f32 %v684, %v697
      %v724 = vadd.f32 %v685, %v697
      %v725 = vadd.f32 %v686, %v697
      %v726 = vadd.f32 %v687, %v697
      %v727 = vadd.f32 %v688, %v697
      %v728 = vadd.f32 %v689, %v697
      %v729 = vadd.f32 %v690, %v697
      %v730 = vadd.f32 %v691, %v697
      %v731 = vmax.f32 %v699, 0.0
      %v732 = vmax.f32 %v700, 0.0
      %v733 = vmax.f32 %v701, 0.0
      %v734 = vmax.f32 %v702, 0.0
      %v735 = vmax.f32 %v703, 0.0
      %v736 = vmax.f32 %v704, 0.0
      %v737 = vmax.f32 %v705, 0.0
      %v738 = vmax.f32 %v706, 0.0
      %v739 = vmax.f32 %v707, 0.0
      %v740 = vmax.f32 %v708, 0.0
      %v741 = vmax.f32 %v709, 0.0
      %v742 = vmax.f32 %v710, 0.0
      %v743 = vmax.f32 %v711, 0.0
      %v744 = vmax.f32 %v712, 0.0
      %v745 = vmax.f32 %v713, 0.0
      %v746 = vmax.f32 %v714, 0.0
      %v747 = vmax.f32 %v715, 0.0
      %v748 = vmax.f32 %v716, 0.0
      %v749 = vmax.f32 %v717, 0.0
      %v750 = vmax.f32 %v718, 0.0
      %v751 = vmax.f32 %v719, 0.0
      %v752 = vmax.f32 %v720, 0.0
      %v753 = vmax.f32 %v721, 0.0
      %v754 = vmax.f32 %v722, 0.0
      %v755 = vmax.f32 %v723, 0.0
      %v756 = vmax.f32 %v724, 0.0
      %v757 = vmax.f32 %v725, 0.0
      %v758 = vmax.f32 %v726, 0.0
      %v759 = vmax.f32 %v727, 0.0
      %v760 = vmax.f32 %v728, 0.0
      %v761 = vmax.f32 %v729, 0.0
      %v762 = vmax.f32 %v730, 0.0
      %vm763 = vcmask 130048
      %764 = vst.msk [vmem:[#allocation2] sm:$0xff] %vm763, 0.0
      %765 = vst.msk [vmem:[#allocation2 + $0x8] sm:$0xff] %vm763, 0.0
      %vm766 = vcmask 123904
      %767 = vst.msk [vmem:[#allocation2 + $0x10] sm:$0x3] %vm766, 0.0
      %768 = vst.msk [vmem:[#allocation2 + $0x18] sm:$0xff] %vm763, 0.0
      %769 = vst.msk [vmem:[#allocation2 + $0x20] sm:$0xff] %vm763, 0.0
      %770 = vst.msk [vmem:[#allocation2 + $0x28] sm:$0x3] %vm766, 0.0
      %771 = vst.msk [vmem:[#allocation2 + $0x30] sm:$0xff] %vm763, 0.0
      %772 = vst.msk [vmem:[#allocation2 + $0x38] sm:$0xff] %vm763, 0.0
      %773 = vst.msk [vmem:[#allocation2 + $0x40] sm:$0x3] %vm766, 0.0
      %774 = vst.msk [vmem:[#allocation2 + $0x48] sm:$0xff] %vm763, 0.0
      %775 = vst.msk [vmem:[#allocation2 + $0x50] sm:$0xff] %vm763, 0.0
      %776 = vst.msk [vmem:[#allocation2 + $0x58] sm:$0x3] %vm766, 0.0
      %777 = vst.msk [vmem:[#allocation2 + $0x60] sm:$0xff] %vm763, 0.0
      %778 = vst.msk [vmem:[#allocation2 + $0x68] sm:$0xff] %vm763, 0.0
      %779 = vst.msk [vmem:[#allocation2 + $0x70] sm:$0x3] %vm766, 0.0
      %780 = vst.msk [vmem:[#allocation2 + $0x78] sm:$0xff] %vm763, 0.0
      %781 = vst.msk [vmem:[#allocation2 + $0x80] sm:$0xff] %vm763, 0.0
      %782 = vst.msk [vmem:[#allocation2 + $0x88] sm:$0x3] %vm766, 0.0
      %783 = vst.msk [vmem:[#allocation2 + $0x90] sm:$0xff] %vm763, 0.0
      %784 = vst.msk [vmem:[#allocation2 + $0x98] sm:$0xff] %vm763, 0.0
      %785 = vst.msk [vmem:[#allocation2 + $0xa0] sm:$0x3] %vm766, 0.0
      %786 = vst.msk [vmem:[#allocation2 + $0xa8] sm:$0xff] %vm763, 0.0
      %787 = vst.msk [vmem:[#allocation2 + $0xb0] sm:$0xff] %vm763, 0.0
      %788 = vst.msk [vmem:[#allocation2 + $0xb8] sm:$0x3] %vm766, 0.0
      %789 = vst.msk [vmem:[#allocation2 + $0xc0] sm:$0xff] %vm763, 0.0
      %790 = vst.msk [vmem:[#allocation2 + $0xc8] sm:$0xff] %vm763, 0.0
      %791 = vst.msk [vmem:[#allocation2 + $0xd0] sm:$0x3] %vm766, 0.0
      %792 = vst.msk [vmem:[#allocation2 + $0xd8] sm:$0xff] %vm763, 0.0
      %793 = vst.msk [vmem:[#allocation2 + $0xe0] sm:$0xff] %vm763, 0.0
      %794 = vst.msk [vmem:[#allocation2 + $0xe8] sm:$0x3] %vm766, 0.0
      %795 = vst.msk [vmem:[#allocation2 + $0xf0] sm:$0xff] %vm763, 0.0
      %796 = vst.msk [vmem:[#allocation2 + $0xf8] sm:$0xff] %vm763, 0.0
      %797 = vst.msk [vmem:[#allocation2 + $0x100] sm:$0x3] %vm766, 0.0
      %798 = vst.msk [vmem:[#allocation2 + $0x108] sm:$0xff] %vm763, 0.0
      %799 = vst.msk [vmem:[#allocation2 + $0x110] sm:$0xff] %vm763, 0.0
      %800 = vst.msk [vmem:[#allocation2 + $0x118] sm:$0x3] %vm766, 0.0
      %801 = vst.msk [vmem:[#allocation2 + $0x120] sm:$0xff] %vm763, 0.0
      %802 = vst.msk [vmem:[#allocation2 + $0x128] sm:$0xff] %vm763, 0.0
      %803 = vst.msk [vmem:[#allocation2 + $0x130] sm:$0x3] %vm766, 0.0
      %804 = vst.msk [vmem:[#allocation2 + $0x138] sm:$0xff] %vm763, 0.0
      %805 = vst.msk [vmem:[#allocation2 + $0x140] sm:$0xff] %vm763, 0.0
      %806 = vst.msk [vmem:[#allocation2 + $0x148] sm:$0x3] %vm766, 0.0
      %807 = vst.msk [vmem:[#allocation2 + $0x150] sm:$0xff] %vm763, 0.0
      %808 = vst.msk [vmem:[#allocation2 + $0x158] sm:$0xff] %vm763, 0.0
      %809 = vst.msk [vmem:[#allocation2 + $0x160] sm:$0x3] %vm766, 0.0
      %810 = vst.msk [vmem:[#allocation2 + $0x168] sm:$0xff] %vm763, 0.0
      %811 = vst.msk [vmem:[#allocation2 + $0x170] sm:$0xff] %vm763, 0.0
      %812 = vst.msk [vmem:[#allocation2 + $0x178] sm:$0x3] %vm766, 0.0
      %813 = vst.msk [vmem:[#allocation2 + $0x180] sm:$0xff] %vm763, 0.0
      %814 = vst.msk [vmem:[#allocation2 + $0x188] sm:$0xff] %vm763, 0.0
      %815 = vst.msk [vmem:[#allocation2 + $0x190] sm:$0x3] %vm766, 0.0
      %816 = vst.msk [vmem:[#allocation2 + $0x198] sm:$0xff] %vm763, 0.0
      %817 = vst.msk [vmem:[#allocation2 + $0x1a0] sm:$0xff] %vm763, 0.0
      %818 = vst.msk [vmem:[#allocation2 + $0x1a8] sm:$0x3] %vm766, 0.0
      %s819 = scalar_lea.vmem [#allocation2], 24
      %820 = vst.msk [vmem:[%s819 + $0x1] sm:$0xff] %vm763, %v731
      %821 = vst.msk [vmem:[%s819 + $0x9] sm:$0xff] %vm763, %v732
      %822 = vst.msk [vmem:[%s819 + $0x19] sm:$0xff] %vm763, %v733
      %823 = vst.msk [vmem:[%s819 + $0x21] sm:$0xff] %vm763, %v734
      %824 = vst.msk [vmem:[%s819 + $0x31] sm:$0xff] %vm763, %v735
      %825 = vst.msk [vmem:[%s819 + $0x39] sm:$0xff] %vm763, %v736
      %826 = vst.msk [vmem:[%s819 + $0x49] sm:$0xff] %vm763, %v737
      %827 = vst.msk [vmem:[%s819 + $0x51] sm:$0xff] %vm763, %v738
      %828 = vst.msk [vmem:[%s819 + $0x61] sm:$0xff] %vm763, %v739
      %829 = vst.msk [vmem:[%s819 + $0x69] sm:$0xff] %vm763, %v740
      %830 = vst.msk [vmem:[%s819 + $0x79] sm:$0xff] %vm763, %v741
      %831 = vst.msk [vmem:[%s819 + $0x81] sm:$0xff] %vm763, %v742
      %832 = vst.msk [vmem:[%s819 + $0x91] sm:$0xff] %vm763, %v743
      %833 = vst.msk [vmem:[%s819 + $0x99] sm:$0xff] %vm763, %v744
      %834 = vst.msk [vmem:[%s819 + $0xa9] sm:$0xff] %vm763, %v745
      %835 = vst.msk [vmem:[%s819 + $0xb1] sm:$0xff] %vm763, %v746
      %836 = vst.msk [vmem:[%s819 + $0xc1] sm:$0xff] %vm763, %v747
      %837 = vst.msk [vmem:[%s819 + $0xc9] sm:$0xff] %vm763, %v748
      %838 = vst.msk [vmem:[%s819 + $0xd9] sm:$0xff] %vm763, %v749
      %839 = vst.msk [vmem:[%s819 + $0xe1] sm:$0xff] %vm763, %v750
      %840 = vst.msk [vmem:[%s819 + $0xf1] sm:$0xff] %vm763, %v751
      %841 = vst.msk [vmem:[%s819 + $0xf9] sm:$0xff] %vm763, %v752
      %842 = vst.msk [vmem:[%s819 + $0x109] sm:$0xff] %vm763, %v753
      %843 = vst.msk [vmem:[%s819 + $0x111] sm:$0xff] %vm763, %v754
      %844 = vst.msk [vmem:[%s819 + $0x121] sm:$0xff] %vm763, %v755
      %845 = vst.msk [vmem:[%s819 + $0x129] sm:$0xff] %vm763, %v756
      %846 = vst.msk [vmem:[%s819 + $0x139] sm:$0xff] %vm763, %v757
      %847 = vst.msk [vmem:[%s819 + $0x141] sm:$0xff] %vm763, %v758
      %848 = vst.msk [vmem:[%s819 + $0x151] sm:$0xff] %vm763, %v759
      %849 = vst.msk [vmem:[%s819 + $0x159] sm:$0xff] %vm763, %v760
      %850 = vst.msk [vmem:[%s819 + $0x169] sm:$0xff] %vm763, %v761
      %851 = vst.msk [vmem:[%s819 + $0x171] sm:$0xff] %vm763, %v762
      %v852 = vld [vmem:[#allocation2] sm:$0xff]
      %v853 = vld [vmem:[#allocation2 + $0x8] sm:$0xff]
      %v854 = vld [vmem:[#allocation2 + $0x18] sm:$0xff]
      %v855 = vld [vmem:[#allocation2 + $0x20] sm:$0xff]
      %v856 = vld [vmem:[#allocation2 + $0x30] sm:$0xff]
      %v857 = vld [vmem:[#allocation2 + $0x38] sm:$0xff]
      %v858 = vld [vmem:[#allocation2 + $0x48] sm:$0xff]
      %v859 = vld [vmem:[#allocation2 + $0x50] sm:$0xff]
      %v860 = vld [vmem:[#allocation2 + $0x60] sm:$0xff]
      %v861 = vld [vmem:[#allocation2 + $0x68] sm:$0xff]
      %v862 = vld [vmem:[#allocation2 + $0x78] sm:$0xff]
      %v863 = vld [vmem:[#allocation2 + $0x80] sm:$0xff]
      %v864 = vld [vmem:[#allocation2 + $0x90] sm:$0xff]
      %v865 = vld [vmem:[#allocation2 + $0x98] sm:$0xff]
      %v866 = vld [vmem:[#allocation2 + $0xa8] sm:$0xff]
      %v867 = vld [vmem:[#allocation2 + $0xb0] sm:$0xff]
      %v868 = vld [vmem:[#allocation2 + $0xc0] sm:$0xff]
      %v869 = vld [vmem:[#allocation2 + $0xc8] sm:$0xff]
      %v870 = vld [vmem:[#allocation2 + $0xd8] sm:$0xff]
      %v871 = vld [vmem:[#allocation2 + $0xe0] sm:$0xff]
      %v872 = vld [vmem:[#allocation2 + $0xf0] sm:$0xff]
      %v873 = vld [vmem:[#allocation2 + $0xf8] sm:$0xff]
      %v874 = vld [vmem:[#allocation2 + $0x108] sm:$0xff]
      %v875 = vld [vmem:[#allocation2 + $0x110] sm:$0xff]
      %v876 = vld [vmem:[#allocation2 + $0x120] sm:$0xff]
      %v877 = vld [vmem:[#allocation2 + $0x128] sm:$0xff]
      %v878 = vld [vmem:[#allocation2 + $0x138] sm:$0xff]
      %v879 = vld [vmem:[#allocation2 + $0x140] sm:$0xff]
      %v880 = vld [vmem:[#allocation2 + $0x150] sm:$0xff]
      %v881 = vld [vmem:[#allocation2 + $0x158] sm:$0xff]
      %v882 = vld [vmem:[#allocation2 + $0x168] sm:$0xff]
      %v883 = vld [vmem:[#allocation2 + $0x170] sm:$0xff]
      %v884 = vpack.c.bf16 %v853, %v852
      %v885 = vpack.c.bf16 %v855, %v854
      %v886 = vpack.c.bf16 %v857, %v856
      %v887 = vpack.c.bf16 %v859, %v858
      %v888 = vpack.c.bf16 %v861, %v860
      %v889 = vpack.c.bf16 %v863, %v862
      %v890 = vpack.c.bf16 %v865, %v864
      %v891 = vpack.c.bf16 %v867, %v866
      %v892 = vpack.c.bf16 %v869, %v868
      %v893 = vpack.c.bf16 %v871, %v870
      %v894 = vpack.c.bf16 %v873, %v872
      %v895 = vpack.c.bf16 %v875, %v874
      %v896 = vpack.c.bf16 %v877, %v876
      %v897 = vpack.c.bf16 %v879, %v878
      %v898 = vpack.c.bf16 %v881, %v880
      %v899 = vpack.c.bf16 %v883, %v882
      %v916 = vunpack.c.l.b16 %v884
      %v917 = vunpack.c.h.b16 %v884
      %v918 = vunpack.c.l.b16 %v885
      %v919 = vunpack.c.h.b16 %v885
      %v920 = vunpack.c.l.b16 %v886
      %v921 = vunpack.c.h.b16 %v886
      %v922 = vunpack.c.l.b16 %v887
      %v923 = vunpack.c.h.b16 %v887
      %v924 = vunpack.c.l.b16 %v888
      %v925 = vunpack.c.h.b16 %v888
      %v926 = vunpack.c.l.b16 %v889
      %v927 = vunpack.c.h.b16 %v889
      %v928 = vunpack.c.l.b16 %v890
      %v929 = vunpack.c.h.b16 %v890
      %v930 = vunpack.c.l.b16 %v891
      %v931 = vunpack.c.h.b16 %v891
      %v932 = vunpack.c.l.b16 %v892
      %v933 = vunpack.c.h.b16 %v892
      %v934 = vunpack.c.l.b16 %v893
      %v935 = vunpack.c.h.b16 %v893
      %v936 = vunpack.c.l.b16 %v894
      %v937 = vunpack.c.h.b16 %v894
      %v938 = vunpack.c.l.b16 %v895
      %v939 = vunpack.c.h.b16 %v895
      %v940 = vunpack.c.l.b16 %v896
      %v941 = vunpack.c.h.b16 %v896
      %v942 = vunpack.c.l.b16 %v897
      %v943 = vunpack.c.h.b16 %v897
      %v944 = vunpack.c.l.b16 %v898
      %v945 = vunpack.c.h.b16 %v898
      %v946 = vunpack.c.l.b16 %v899
      %v947 = vunpack.c.h.b16 %v899
      %v948 = vpack.c.b16 %v916, %v916
      %v949 = vpack.c.b16 %v917, %v917
      %v950 = vpack.c.b16 %v918, %v918
      %v951 = vpack.c.b16 %v919, %v919
      %v952 = vpack.c.b16 %v920, %v920
      %v953 = vpack.c.b16 %v921, %v921
      %v954 = vpack.c.b16 %v922, %v922
      %v955 = vpack.c.b16 %v923, %v923
      %v956 = vpack.c.b16 %v924, %v924
      %v957 = vpack.c.b16 %v925, %v925
      %v958 = vpack.c.b16 %v926, %v926
      %v959 = vpack.c.b16 %v927, %v927
      %v960 = vpack.c.b16 %v928, %v928
      %v961 = vpack.c.b16 %v929, %v929
      %v962 = vpack.c.b16 %v930, %v930
      %v963 = vpack.c.b16 %v931, %v931
      %v964 = vpack.c.b16 %v932, %v932
      %v965 = vpack.c.b16 %v933, %v933
      %v966 = vpack.c.b16 %v934, %v934
      %v967 = vpack.c.b16 %v935, %v935
      %v968 = vpack.c.b16 %v936, %v936
      %v969 = vpack.c.b16 %v937, %v937
      %v970 = vpack.c.b16 %v938, %v938
      %v971 = vpack.c.b16 %v939, %v939
      %v972 = vpack.c.b16 %v940, %v940
      %v973 = vpack.c.b16 %v941, %v941
      %v974 = vpack.c.b16 %v942, %v942
      %v975 = vpack.c.b16 %v943, %v943
      %v976 = vpack.c.b16 %v944, %v944
      %v977 = vpack.c.b16 %v945, %v945
      %v978 = vpack.c.b16 %v946, %v946
      %v979 = vpack.c.b16 %v947, %v947
      %vm1012 = vcmask 125952
      %1013 = vst.msk [vmem:[#allocation3] sm:$0xf] %vm1012, %v948
      %1014 = vst.msk [vmem:[#allocation3 + $0x8] sm:$0xf] %vm1012, %v949
      %1015 = vst.msk [vmem:[#allocation3 + $0x10] sm:$0xf] %vm1012, %v950
      %1016 = vst.msk [vmem:[#allocation3 + $0x18] sm:$0xf] %vm1012, %v951
      %1017 = vst.msk [vmem:[#allocation3 + $0x20] sm:$0xf] %vm1012, %v952
      %1018 = vst.msk [vmem:[#allocation3 + $0x28] sm:$0xf] %vm1012, %v953
      %1019 = vst.msk [vmem:[#allocation3 + $0x30] sm:$0xf] %vm1012, %v954
      %1020 = vst.msk [vmem:[#allocation3 + $0x38] sm:$0xf] %vm1012, %v955
      %1021 = vst.msk [vmem:[#allocation3 + $0x40] sm:$0xf] %vm1012, %v956
      %1022 = vst.msk [vmem:[#allocation3 + $0x48] sm:$0xf] %vm1012, %v957
      %1023 = vst.msk [vmem:[#allocation3 + $0x50] sm:$0xf] %vm1012, %v958
      %1024 = vst.msk [vmem:[#allocation3 + $0x58] sm:$0xf] %vm1012, %v959
      %1025 = vst.msk [vmem:[#allocation3 + $0x60] sm:$0xf] %vm1012, %v960
      %1026 = vst.msk [vmem:[#allocation3 + $0x68] sm:$0xf] %vm1012, %v961
      %1027 = vst.msk [vmem:[#allocation3 + $0x70] sm:$0xf] %vm1012, %v962
      %1028 = vst.msk [vmem:[#allocation3 + $0x78] sm:$0xf] %vm1012, %v963
      %1029 = vst.msk [vmem:[#allocation3 + $0x80] sm:$0xf] %vm1012, %v964
      %1030 = vst.msk [vmem:[#allocation3 + $0x88] sm:$0xf] %vm1012, %v965
      %1031 = vst.msk [vmem:[#allocation3 + $0x90] sm:$0xf] %vm1012, %v966
      %1032 = vst.msk [vmem:[#allocation3 + $0x98] sm:$0xf] %vm1012, %v967
      %1033 = vst.msk [vmem:[#allocation3 + $0xa0] sm:$0xf] %vm1012, %v968
      %1034 = vst.msk [vmem:[#allocation3 + $0xa8] sm:$0xf] %vm1012, %v969
      %1035 = vst.msk [vmem:[#allocation3 + $0xb0] sm:$0xf] %vm1012, %v970
      %1036 = vst.msk [vmem:[#allocation3 + $0xb8] sm:$0xf] %vm1012, %v971
      %1037 = vst.msk [vmem:[#allocation3 + $0xc0] sm:$0xf] %vm1012, %v972
      %1038 = vst.msk [vmem:[#allocation3 + $0xc8] sm:$0xf] %vm1012, %v973
      %1039 = vst.msk [vmem:[#allocation3 + $0xd0] sm:$0xf] %vm1012, %v974
      %1040 = vst.msk [vmem:[#allocation3 + $0xd8] sm:$0xf] %vm1012, %v975
      %1041 = vst.msk [vmem:[#allocation3 + $0xe0] sm:$0xf] %vm1012, %v976
      %1042 = vst.msk [vmem:[#allocation3 + $0xe8] sm:$0xf] %vm1012, %v977
      %1043 = vst.msk [vmem:[#allocation3 + $0xf0] sm:$0xf] %vm1012, %v978
      %1044 = vst.msk [vmem:[#allocation3 + $0xf8] sm:$0xf] %vm1012, %v979
      %v1045 = vld [vmem:[#allocation2 + $0x1] sm:$0xff]
      %v1046 = vld [vmem:[#allocation2 + $0x9] sm:$0xff]
      %v1047 = vld [vmem:[#allocation2 + $0x19] sm:$0xff]
      %v1048 = vld [vmem:[#allocation2 + $0x21] sm:$0xff]
      %v1049 = vld [vmem:[#allocation2 + $0x31] sm:$0xff]
      %v1050 = vld [vmem:[#allocation2 + $0x39] sm:$0xff]
      %v1051 = vld [vmem:[#allocation2 + $0x49] sm:$0xff]
      %v1052 = vld [vmem:[#allocation2 + $0x51] sm:$0xff]
      %v1053 = vld [vmem:[#allocation2 + $0x61] sm:$0xff]
      %v1054 = vld [vmem:[#allocation2 + $0x69] sm:$0xff]
      %v1055 = vld [vmem:[#allocation2 + $0x79] sm:$0xff]
      %v1056 = vld [vmem:[#allocation2 + $0x81] sm:$0xff]
      %v1057 = vld [vmem:[#allocation2 + $0x91] sm:$0xff]
      %v1058 = vld [vmem:[#allocation2 + $0x99] sm:$0xff]
      %v1059 = vld [vmem:[#allocation2 + $0xa9] sm:$0xff]
      %v1060 = vld [vmem:[#allocation2 + $0xb1] sm:$0xff]
      %v1061 = vld [vmem:[#allocation2 + $0xc1] sm:$0xff]
      %v1062 = vld [vmem:[#allocation2 + $0xc9] sm:$0xff]
      %v1063 = vld [vmem:[#allocation2 + $0xd9] sm:$0xff]
      %v1064 = vld [vmem:[#allocation2 + $0xe1] sm:$0xff]
      %v1065 = vld [vmem:[#allocation2 + $0xf1] sm:$0xff]
      %v1066 = vld [vmem:[#allocation2 + $0xf9] sm:$0xff]
      %v1067 = vld [vmem:[#allocation2 + $0x109] sm:$0xff]
      %v1068 = vld [vmem:[#allocation2 + $0x111] sm:$0xff]
      %v1069 = vld [vmem:[#allocation2 + $0x121] sm:$0xff]
      %v1070 = vld [vmem:[#allocation2 + $0x129] sm:$0xff]
      %v1071 = vld [vmem:[#allocation2 + $0x139] sm:$0xff]
      %v1072 = vld [vmem:[#allocation2 + $0x141] sm:$0xff]
      %v1073 = vld [vmem:[#allocation2 + $0x151] sm:$0xff]
      %v1074 = vld [vmem:[#allocation2 + $0x159] sm:$0xff]
      %v1075 = vld [vmem:[#allocation2 + $0x169] sm:$0xff]
      %v1076 = vld [vmem:[#allocation2 + $0x171] sm:$0xff]
      %v1077 = vpack.c.bf16 %v1046, %v1045
      %v1078 = vpack.c.bf16 %v1048, %v1047
      %v1079 = vpack.c.bf16 %v1050, %v1049
      %v1080 = vpack.c.bf16 %v1052, %v1051
      %v1081 = vpack.c.bf16 %v1054, %v1053
      %v1082 = vpack.c.bf16 %v1056, %v1055
      %v1083 = vpack.c.bf16 %v1058, %v1057
      %v1084 = vpack.c.bf16 %v1060, %v1059
      %v1085 = vpack.c.bf16 %v1062, %v1061
      %v1086 = vpack.c.bf16 %v1064, %v1063
      %v1087 = vpack.c.bf16 %v1066, %v1065
      %v1088 = vpack.c.bf16 %v1068, %v1067
      %v1089 = vpack.c.bf16 %v1070, %v1069
      %v1090 = vpack.c.bf16 %v1072, %v1071
      %v1091 = vpack.c.bf16 %v1074, %v1073
      %v1092 = vpack.c.bf16 %v1076, %v1075
      %v1109 = vunpack.c.l.b16 %v1077
      %v1110 = vunpack.c.h.b16 %v1077
      %v1111 = vunpack.c.l.b16 %v1078
      %v1112 = vunpack.c.h.b16 %v1078
      %v1113 = vunpack.c.l.b16 %v1079
      %v1114 = vunpack.c.h.b16 %v1079
      %v1115 = vunpack.c.l.b16 %v1080
      %v1116 = vunpack.c.h.b16 %v1080
      %v1117 = vunpack.c.l.b16 %v1081
      %v1118 = vunpack.c.h.b16 %v1081
      %v1119 = vunpack.c.l.b16 %v1082
      %v1120 = vunpack.c.h.b16 %v1082
      %v1121 = vunpack.c.l.b16 %v1083
      %v1122 = vunpack.c.h.b16 %v1083
      %v1123 = vunpack.c.l.b16 %v1084
      %v1124 = vunpack.c.h.b16 %v1084
      %v1125 = vunpack.c.l.b16 %v1085
      %v1126 = vunpack.c.h.b16 %v1085
      %v1127 = vunpack.c.l.b16 %v1086
      %v1128 = vunpack.c.h.b16 %v1086
      %v1129 = vunpack.c.l.b16 %v1087
      %v1130 = vunpack.c.h.b16 %v1087
      %v1131 = vunpack.c.l.b16 %v1088
      %v1132 = vunpack.c.h.b16 %v1088
      %v1133 = vunpack.c.l.b16 %v1089
      %v1134 = vunpack.c.h.b16 %v1089
      %v1135 = vunpack.c.l.b16 %v1090
      %v1136 = vunpack.c.h.b16 %v1090
      %v1137 = vunpack.c.l.b16 %v1091
      %v1138 = vunpack.c.h.b16 %v1091
      %v1139 = vunpack.c.l.b16 %v1092
      %v1140 = vunpack.c.h.b16 %v1092
      %v1141 = vpack.c.b16 %v1109, %v1109
      %v1142 = vpack.c.b16 %v1110, %v1110
      %v1143 = vpack.c.b16 %v1111, %v1111
      %v1144 = vpack.c.b16 %v1112, %v1112
      %v1145 = vpack.c.b16 %v1113, %v1113
      %v1146 = vpack.c.b16 %v1114, %v1114
      %v1147 = vpack.c.b16 %v1115, %v1115
      %v1148 = vpack.c.b16 %v1116, %v1116
      %v1149 = vpack.c.b16 %v1117, %v1117
      %v1150 = vpack.c.b16 %v1118, %v1118
      %v1151 = vpack.c.b16 %v1119, %v1119
      %v1152 = vpack.c.b16 %v1120, %v1120
      %v1153 = vpack.c.b16 %v1121, %v1121
      %v1154 = vpack.c.b16 %v1122, %v1122
      %v1155 = vpack.c.b16 %v1123, %v1123
      %v1156 = vpack.c.b16 %v1124, %v1124
      %v1157 = vpack.c.b16 %v1125, %v1125
      %v1158 = vpack.c.b16 %v1126, %v1126
      %v1159 = vpack.c.b16 %v1127, %v1127
      %v1160 = vpack.c.b16 %v1128, %v1128
      %v1161 = vpack.c.b16 %v1129, %v1129
      %v1162 = vpack.c.b16 %v1130, %v1130
      %v1163 = vpack.c.b16 %v1131, %v1131
      %v1164 = vpack.c.b16 %v1132, %v1132
      %v1165 = vpack.c.b16 %v1133, %v1133
      %v1166 = vpack.c.b16 %v1134, %v1134
      %v1167 = vpack.c.b16 %v1135, %v1135
      %v1168 = vpack.c.b16 %v1136, %v1136
      %v1169 = vpack.c.b16 %v1137, %v1137
      %v1170 = vpack.c.b16 %v1138, %v1138
      %v1171 = vpack.c.b16 %v1139, %v1139
      %v1172 = vpack.c.b16 %v1140, %v1140
      %1173 = vrot.lane.b32.xlu0 %v1141, 16
      %v1174 = vpop.permute.xlu0 %1173
      %1175 = vrot.lane.b32.xlu0 %v1142, 16
      %v1176 = vpop.permute.xlu0 %1175
      %1177 = vrot.lane.b32.xlu0 %v1143, 16
      %v1178 = vpop.permute.xlu0 %1177
      %1179 = vrot.lane.b32.xlu0 %v1144, 16
      %v1180 = vpop.permute.xlu0 %1179
      %1181 = vrot.lane.b32.xlu0 %v1145, 16
      %v1182 = vpop.permute.xlu0 %1181
      %1183 = vrot.lane.b32.xlu0 %v1146, 16
      %v1184 = vpop.permute.xlu0 %1183
      %1185 = vrot.lane.b32.xlu0 %v1147, 16
      %v1186 = vpop.permute.xlu0 %1185
      %1187 = vrot.lane.b32.xlu0 %v1148, 16
      %v1188 = vpop.permute.xlu0 %1187
      %1189 = vrot.lane.b32.xlu0 %v1149, 16
      %v1190 = vpop.permute.xlu0 %1189
      %1191 = vrot.lane.b32.xlu0 %v1150, 16
      %v1192 = vpop.permute.xlu0 %1191
      %1193 = vrot.lane.b32.xlu0 %v1151, 16
      %v1194 = vpop.permute.xlu0 %1193
      %1195 = vrot.lane.b32.xlu0 %v1152, 16
      %v1196 = vpop.permute.xlu0 %1195
      %1197 = vrot.lane.b32.xlu0 %v1153, 16
      %v1198 = vpop.permute.xlu0 %1197
      %1199 = vrot.lane.b32.xlu0 %v1154, 16
      %v1200 = vpop.permute.xlu0 %1199
      %1201 = vrot.lane.b32.xlu0 %v1155, 16
      %v1202 = vpop.permute.xlu0 %1201
      %1203 = vrot.lane.b32.xlu0 %v1156, 16
      %v1204 = vpop.permute.xlu0 %1203
      %1205 = vrot.lane.b32.xlu0 %v1157, 16
      %v1206 = vpop.permute.xlu0 %1205
      %1207 = vrot.lane.b32.xlu0 %v1158, 16
      %v1208 = vpop.permute.xlu0 %1207
      %1209 = vrot.lane.b32.xlu0 %v1159, 16
      %v1210 = vpop.permute.xlu0 %1209
      %1211 = vrot.lane.b32.xlu0 %v1160, 16
      %v1212 = vpop.permute.xlu0 %1211
      %1213 = vrot.lane.b32.xlu0 %v1161, 16
      %v1214 = vpop.permute.xlu0 %1213
      %1215 = vrot.lane.b32.xlu0 %v1162, 16
      %v1216 = vpop.permute.xlu0 %1215
      %1217 = vrot.lane.b32.xlu0 %v1163, 16
      %v1218 = vpop.permute.xlu0 %1217
      %1219 = vrot.lane.b32.xlu0 %v1164, 16
      %v1220 = vpop.permute.xlu0 %1219
      %1221 = vrot.lane.b32.xlu0 %v1165, 16
      %v1222 = vpop.permute.xlu0 %1221
      %1223 = vrot.lane.b32.xlu0 %v1166, 16
      %v1224 = vpop.permute.xlu0 %1223
      %1225 = vrot.lane.b32.xlu0 %v1167, 16
      %v1226 = vpop.permute.xlu0 %1225
      %1227 = vrot.lane.b32.xlu0 %v1168, 16
      %v1228 = vpop.permute.xlu0 %1227
      %1229 = vrot.lane.b32.xlu0 %v1169, 16
      %v1230 = vpop.permute.xlu0 %1229
      %1231 = vrot.lane.b32.xlu0 %v1170, 16
      %v1232 = vpop.permute.xlu0 %1231
      %1233 = vrot.lane.b32.xlu0 %v1171, 16
      %v1234 = vpop.permute.xlu0 %1233
      %1235 = vrot.lane.b32.xlu0 %v1172, 16
      %v1236 = vpop.permute.xlu0 %1235
      %vm1269 = vcmask 257152
      %1270 = vst.msk [vmem:[#allocation3] sm:$0xf] %vm1269, %v1174
      %1271 = vst.msk [vmem:[#allocation3 + $0x8] sm:$0xf] %vm1269, %v1176
      %1272 = vst.msk [vmem:[#allocation3 + $0x10] sm:$0xf] %vm1269, %v1178
      %1273 = vst.msk [vmem:[#allocation3 + $0x18] sm:$0xf] %vm1269, %v1180
      %1274 = vst.msk [vmem:[#allocation3 + $0x20] sm:$0xf] %vm1269, %v1182
      %1275 = vst.msk [vmem:[#allocation3 + $0x28] sm:$0xf] %vm1269, %v1184
      %1276 = vst.msk [vmem:[#allocation3 + $0x30] sm:$0xf] %vm1269, %v1186
      %1277 = vst.msk [vmem:[#allocation3 + $0x38] sm:$0xf] %vm1269, %v1188
      %1278 = vst.msk [vmem:[#allocation3 + $0x40] sm:$0xf] %vm1269, %v1190
      %1279 = vst.msk [vmem:[#allocation3 + $0x48] sm:$0xf] %vm1269, %v1192
      %1280 = vst.msk [vmem:[#allocation3 + $0x50] sm:$0xf] %vm1269, %v1194
      %1281 = vst.msk [vmem:[#allocation3 + $0x58] sm:$0xf] %vm1269, %v1196
      %1282 = vst.msk [vmem:[#allocation3 + $0x60] sm:$0xf] %vm1269, %v1198
      %1283 = vst.msk [vmem:[#allocation3 + $0x68] sm:$0xf] %vm1269, %v1200
      %1284 = vst.msk [vmem:[#allocation3 + $0x70] sm:$0xf] %vm1269, %v1202
      %1285 = vst.msk [vmem:[#allocation3 + $0x78] sm:$0xf] %vm1269, %v1204
      %1286 = vst.msk [vmem:[#allocation3 + $0x80] sm:$0xf] %vm1269, %v1206
      %1287 = vst.msk [vmem:[#allocation3 + $0x88] sm:$0xf] %vm1269, %v1208
      %1288 = vst.msk [vmem:[#allocation3 + $0x90] sm:$0xf] %vm1269, %v1210
      %1289 = vst.msk [vmem:[#allocation3 + $0x98] sm:$0xf] %vm1269, %v1212
      %1290 = vst.msk [vmem:[#allocation3 + $0xa0] sm:$0xf] %vm1269, %v1214
      %1291 = vst.msk [vmem:[#allocation3 + $0xa8] sm:$0xf] %vm1269, %v1216
      %1292 = vst.msk [vmem:[#allocation3 + $0xb0] sm:$0xf] %vm1269, %v1218
      %1293 = vst.msk [vmem:[#allocation3 + $0xb8] sm:$0xf] %vm1269, %v1220
      %1294 = vst.msk [vmem:[#allocation3 + $0xc0] sm:$0xf] %vm1269, %v1222
      %1295 = vst.msk [vmem:[#allocation3 + $0xc8] sm:$0xf] %vm1269, %v1224
      %1296 = vst.msk [vmem:[#allocation3 + $0xd0] sm:$0xf] %vm1269, %v1226
      %1297 = vst.msk [vmem:[#allocation3 + $0xd8] sm:$0xf] %vm1269, %v1228
      %1298 = vst.msk [vmem:[#allocation3 + $0xe0] sm:$0xf] %vm1269, %v1230
      %1299 = vst.msk [vmem:[#allocation3 + $0xe8] sm:$0xf] %vm1269, %v1232
      %1300 = vst.msk [vmem:[#allocation3 + $0xf0] sm:$0xf] %vm1269, %v1234
      %1301 = vst.msk [vmem:[#allocation3 + $0xf8] sm:$0xf] %vm1269, %v1236
      %v1302 = vld [vmem:[#allocation2 + $0x2] sm:$0xff]
      %v1303 = vld [vmem:[#allocation2 + $0xa] sm:$0xff]
      %v1304 = vld [vmem:[#allocation2 + $0x1a] sm:$0xff]
      %v1305 = vld [vmem:[#allocation2 + $0x22] sm:$0xff]
      %v1306 = vld [vmem:[#allocation2 + $0x32] sm:$0xff]
      %v1307 = vld [vmem:[#allocation2 + $0x3a] sm:$0xff]
      %v1308 = vld [vmem:[#allocation2 + $0x4a] sm:$0xff]
      %v1309 = vld [vmem:[#allocation2 + $0x52] sm:$0xff]
      %v1310 = vld [vmem:[#allocation2 + $0x62] sm:$0xff]
      %v1311 = vld [vmem:[#allocation2 + $0x6a] sm:$0xff]
      %v1312 = vld [vmem:[#allocation2 + $0x7a] sm:$0xff]
      %v1313 = vld [vmem:[#allocation2 + $0x82] sm:$0xff]
      %v1314 = vld [vmem:[#allocation2 + $0x92] sm:$0xff]
      %v1315 = vld [vmem:[#allocation2 + $0x9a] sm:$0xff]
      %v1316 = vld [vmem:[#allocation2 + $0xaa] sm:$0xff]
      %v1317 = vld [vmem:[#allocation2 + $0xb2] sm:$0xff]
      %v1318 = vld [vmem:[#allocation2 + $0xc2] sm:$0xff]
      %v1319 = vld [vmem:[#allocation2 + $0xca] sm:$0xff]
      %v1320 = vld [vmem:[#allocation2 + $0xda] sm:$0xff]
      %v1321 = vld [vmem:[#allocation2 + $0xe2] sm:$0xff]
      %v1322 = vld [vmem:[#allocation2 + $0xf2] sm:$0xff]
      %v1323 = vld [vmem:[#allocation2 + $0xfa] sm:$0xff]
      %v1324 = vld [vmem:[#allocation2 + $0x10a] sm:$0xff]
      %v1325 = vld [vmem:[#allocation2 + $0x112] sm:$0xff]
      %v1326 = vld [vmem:[#allocation2 + $0x122] sm:$0xff]
      %v1327 = vld [vmem:[#allocation2 + $0x12a] sm:$0xff]
      %v1328 = vld [vmem:[#allocation2 + $0x13a] sm:$0xff]
      %v1329 = vld [vmem:[#allocation2 + $0x142] sm:$0xff]
      %v1330 = vld [vmem:[#allocation2 + $0x152] sm:$0xff]
      %v1331 = vld [vmem:[#allocation2 + $0x15a] sm:$0xff]
      %v1332 = vld [vmem:[#allocation2 + $0x16a] sm:$0xff]
      %v1333 = vld [vmem:[#allocation2 + $0x172] sm:$0xff]
      %v1334 = vpack.c.bf16 %v1303, %v1302
      %v1335 = vpack.c.bf16 %v1305, %v1304
      %v1336 = vpack.c.bf16 %v1307, %v1306
      %v1337 = vpack.c.bf16 %v1309, %v1308
      %v1338 = vpack.c.bf16 %v1311, %v1310
      %v1339 = vpack.c.bf16 %v1313, %v1312
      %v1340 = vpack.c.bf16 %v1315, %v1314
      %v1341 = vpack.c.bf16 %v1317, %v1316
      %v1342 = vpack.c.bf16 %v1319, %v1318
      %v1343 = vpack.c.bf16 %v1321, %v1320
      %v1344 = vpack.c.bf16 %v1323, %v1322
      %v1345 = vpack.c.bf16 %v1325, %v1324
      %v1346 = vpack.c.bf16 %v1327, %v1326
      %v1347 = vpack.c.bf16 %v1329, %v1328
      %v1348 = vpack.c.bf16 %v1331, %v1330
      %v1349 = vpack.c.bf16 %v1333, %v1332
      %v1366 = vunpack.c.l.b16 %v1334
      %v1367 = vunpack.c.h.b16 %v1334
      %v1368 = vunpack.c.l.b16 %v1335
      %v1369 = vunpack.c.h.b16 %v1335
      %v1370 = vunpack.c.l.b16 %v1336
      %v1371 = vunpack.c.h.b16 %v1336
      %v1372 = vunpack.c.l.b16 %v1337
      %v1373 = vunpack.c.h.b16 %v1337
      %v1374 = vunpack.c.l.b16 %v1338
      %v1375 = vunpack.c.h.b16 %v1338
      %v1376 = vunpack.c.l.b16 %v1339
      %v1377 = vunpack.c.h.b16 %v1339
      %v1378 = vunpack.c.l.b16 %v1340
      %v1379 = vunpack.c.h.b16 %v1340
      %v1380 = vunpack.c.l.b16 %v1341
      %v1381 = vunpack.c.h.b16 %v1341
      %v1382 = vunpack.c.l.b16 %v1342
      %v1383 = vunpack.c.h.b16 %v1342
      %v1384 = vunpack.c.l.b16 %v1343
      %v1385 = vunpack.c.h.b16 %v1343
      %v1386 = vunpack.c.l.b16 %v1344
      %v1387 = vunpack.c.h.b16 %v1344
      %v1388 = vunpack.c.l.b16 %v1345
      %v1389 = vunpack.c.h.b16 %v1345
      %v1390 = vunpack.c.l.b16 %v1346
      %v1391 = vunpack.c.h.b16 %v1346
      %v1392 = vunpack.c.l.b16 %v1347
      %v1393 = vunpack.c.h.b16 %v1347
      %v1394 = vunpack.c.l.b16 %v1348
      %v1395 = vunpack.c.h.b16 %v1348
      %v1396 = vunpack.c.l.b16 %v1349
      %v1397 = vunpack.c.h.b16 %v1349
      %v1398 = vpack.c.b16 %v1366, %v1366
      %v1399 = vpack.c.b16 %v1367, %v1367
      %v1400 = vpack.c.b16 %v1368, %v1368
      %v1401 = vpack.c.b16 %v1369, %v1369
      %v1402 = vpack.c.b16 %v1370, %v1370
      %v1403 = vpack.c.b16 %v1371, %v1371
      %v1404 = vpack.c.b16 %v1372, %v1372
      %v1405 = vpack.c.b16 %v1373, %v1373
      %v1406 = vpack.c.b16 %v1374, %v1374
      %v1407 = vpack.c.b16 %v1375, %v1375
      %v1408 = vpack.c.b16 %v1376, %v1376
      %v1409 = vpack.c.b16 %v1377, %v1377
      %v1410 = vpack.c.b16 %v1378, %v1378
      %v1411 = vpack.c.b16 %v1379, %v1379
      %v1412 = vpack.c.b16 %v1380, %v1380
      %v1413 = vpack.c.b16 %v1381, %v1381
      %v1414 = vpack.c.b16 %v1382, %v1382
      %v1415 = vpack.c.b16 %v1383, %v1383
      %v1416 = vpack.c.b16 %v1384, %v1384
      %v1417 = vpack.c.b16 %v1385, %v1385
      %v1418 = vpack.c.b16 %v1386, %v1386
      %v1419 = vpack.c.b16 %v1387, %v1387
      %v1420 = vpack.c.b16 %v1388, %v1388
      %v1421 = vpack.c.b16 %v1389, %v1389
      %v1422 = vpack.c.b16 %v1390, %v1390
      %v1423 = vpack.c.b16 %v1391, %v1391
      %v1424 = vpack.c.b16 %v1392, %v1392
      %v1425 = vpack.c.b16 %v1393, %v1393
      %v1426 = vpack.c.b16 %v1394, %v1394
      %v1427 = vpack.c.b16 %v1395, %v1395
      %v1428 = vpack.c.b16 %v1396, %v1396
      %v1429 = vpack.c.b16 %v1397, %v1397
      %1430 = vrot.lane.b32.xlu0 %v1398, 32
      %v1431 = vpop.permute.xlu0 %1430
      %1432 = vrot.lane.b32.xlu0 %v1399, 32
      %v1433 = vpop.permute.xlu0 %1432
      %1434 = vrot.lane.b32.xlu0 %v1400, 32
      %v1435 = vpop.permute.xlu0 %1434
      %1436 = vrot.lane.b32.xlu0 %v1401, 32
      %v1437 = vpop.permute.xlu0 %1436
      %1438 = vrot.lane.b32.xlu0 %v1402, 32
      %v1439 = vpop.permute.xlu0 %1438
      %1440 = vrot.lane.b32.xlu0 %v1403, 32
      %v1441 = vpop.permute.xlu0 %1440
      %1442 = vrot.lane.b32.xlu0 %v1404, 32
      %v1443 = vpop.permute.xlu0 %1442
      %1444 = vrot.lane.b32.xlu0 %v1405, 32
      %v1445 = vpop.permute.xlu0 %1444
      %1446 = vrot.lane.b32.xlu0 %v1406, 32
      %v1447 = vpop.permute.xlu0 %1446
      %1448 = vrot.lane.b32.xlu0 %v1407, 32
      %v1449 = vpop.permute.xlu0 %1448
      %1450 = vrot.lane.b32.xlu0 %v1408, 32
      %v1451 = vpop.permute.xlu0 %1450
      %1452 = vrot.lane.b32.xlu0 %v1409, 32
      %v1453 = vpop.permute.xlu0 %1452
      %1454 = vrot.lane.b32.xlu0 %v1410, 32
      %v1455 = vpop.permute.xlu0 %1454
      %1456 = vrot.lane.b32.xlu0 %v1411, 32
      %v1457 = vpop.permute.xlu0 %1456
      %1458 = vrot.lane.b32.xlu0 %v1412, 32
      %v1459 = vpop.permute.xlu0 %1458
      %1460 = vrot.lane.b32.xlu0 %v1413, 32
      %v1461 = vpop.permute.xlu0 %1460
      %1462 = vrot.lane.b32.xlu0 %v1414, 32
      %v1463 = vpop.permute.xlu0 %1462
      %1464 = vrot.lane.b32.xlu0 %v1415, 32
      %v1465 = vpop.permute.xlu0 %1464
      %1466 = vrot.lane.b32.xlu0 %v1416, 32
      %v1467 = vpop.permute.xlu0 %1466
      %1468 = vrot.lane.b32.xlu0 %v1417, 32
      %v1469 = vpop.permute.xlu0 %1468
      %1470 = vrot.lane.b32.xlu0 %v1418, 32
      %v1471 = vpop.permute.xlu0 %1470
      %1472 = vrot.lane.b32.xlu0 %v1419, 32
      %v1473 = vpop.permute.xlu0 %1472
      %1474 = vrot.lane.b32.xlu0 %v1420, 32
      %v1475 = vpop.permute.xlu0 %1474
      %1476 = vrot.lane.b32.xlu0 %v1421, 32
      %v1477 = vpop.permute.xlu0 %1476
      %1478 = vrot.lane.b32.xlu0 %v1422, 32
      %v1479 = vpop.permute.xlu0 %1478
      %1480 = vrot.lane.b32.xlu0 %v1423, 32
      %v1481 = vpop.permute.xlu0 %1480
      %1482 = vrot.lane.b32.xlu0 %v1424, 32
      %v1483 = vpop.permute.xlu0 %1482
      %1484 = vrot.lane.b32.xlu0 %v1425, 32
      %v1485 = vpop.permute.xlu0 %1484
      %1486 = vrot.lane.b32.xlu0 %v1426, 32
      %v1487 = vpop.permute.xlu0 %1486
      %1488 = vrot.lane.b32.xlu0 %v1427, 32
      %v1489 = vpop.permute.xlu0 %1488
      %1490 = vrot.lane.b32.xlu0 %v1428, 32
      %v1491 = vpop.permute.xlu0 %1490
      %1492 = vrot.lane.b32.xlu0 %v1429, 32
      %v1493 = vpop.permute.xlu0 %1492
      %vm1526 = vcmask 388352
      %1527 = vst.msk [vmem:[#allocation3] sm:$0xf] %vm1526, %v1431
      %1528 = vst.msk [vmem:[#allocation3 + $0x8] sm:$0xf] %vm1526, %v1433
      %1529 = vst.msk [vmem:[#allocation3 + $0x10] sm:$0xf] %vm1526, %v1435
      %1530 = vst.msk [vmem:[#allocation3 + $0x18] sm:$0xf] %vm1526, %v1437
      %1531 = vst.msk [vmem:[#allocation3 + $0x20] sm:$0xf] %vm1526, %v1439
      %1532 = vst.msk [vmem:[#allocation3 + $0x28] sm:$0xf] %vm1526, %v1441
      %1533 = vst.msk [vmem:[#allocation3 + $0x30] sm:$0xf] %vm1526, %v1443
      %1534 = vst.msk [vmem:[#allocation3 + $0x38] sm:$0xf] %vm1526, %v1445
      %1535 = vst.msk [vmem:[#allocation3 + $0x40] sm:$0xf] %vm1526, %v1447
      %1536 = vst.msk [vmem:[#allocation3 + $0x48] sm:$0xf] %vm1526, %v1449
      %1537 = vst.msk [vmem:[#allocation3 + $0x50] sm:$0xf] %vm1526, %v1451
      %1538 = vst.msk [vmem:[#allocation3 + $0x58] sm:$0xf] %vm1526, %v1453
      %1539 = vst.msk [vmem:[#allocation3 + $0x60] sm:$0xf] %vm1526, %v1455
      %1540 = vst.msk [vmem:[#allocation3 + $0x68] sm:$0xf] %vm1526, %v1457
      %1541 = vst.msk [vmem:[#allocation3 + $0x70] sm:$0xf] %vm1526, %v1459
      %1542 = vst.msk [vmem:[#allocation3 + $0x78] sm:$0xf] %vm1526, %v1461
      %1543 = vst.msk [vmem:[#allocation3 + $0x80] sm:$0xf] %vm1526, %v1463
      %1544 = vst.msk [vmem:[#allocation3 + $0x88] sm:$0xf] %vm1526, %v1465
      %1545 = vst.msk [vmem:[#allocation3 + $0x90] sm:$0xf] %vm1526, %v1467
      %1546 = vst.msk [vmem:[#allocation3 + $0x98] sm:$0xf] %vm1526, %v1469
      %1547 = vst.msk [vmem:[#allocation3 + $0xa0] sm:$0xf] %vm1526, %v1471
      %1548 = vst.msk [vmem:[#allocation3 + $0xa8] sm:$0xf] %vm1526, %v1473
      %1549 = vst.msk [vmem:[#allocation3 + $0xb0] sm:$0xf] %vm1526, %v1475
      %1550 = vst.msk [vmem:[#allocation3 + $0xb8] sm:$0xf] %vm1526, %v1477
      %1551 = vst.msk [vmem:[#allocation3 + $0xc0] sm:$0xf] %vm1526, %v1479
      %1552 = vst.msk [vmem:[#allocation3 + $0xc8] sm:$0xf] %vm1526, %v1481
      %1553 = vst.msk [vmem:[#allocation3 + $0xd0] sm:$0xf] %vm1526, %v1483
      %1554 = vst.msk [vmem:[#allocation3 + $0xd8] sm:$0xf] %vm1526, %v1485
      %1555 = vst.msk [vmem:[#allocation3 + $0xe0] sm:$0xf] %vm1526, %v1487
      %1556 = vst.msk [vmem:[#allocation3 + $0xe8] sm:$0xf] %vm1526, %v1489
      %1557 = vst.msk [vmem:[#allocation3 + $0xf0] sm:$0xf] %vm1526, %v1491
      %1558 = vst.msk [vmem:[#allocation3 + $0xf8] sm:$0xf] %vm1526, %v1493
      %v1559 = vld [vmem:[%s819] sm:$0xff]
      %v1560 = vld [vmem:[%s819 + $0x8] sm:$0xff]
      %v1561 = vld [vmem:[%s819 + $0x18] sm:$0xff]
      %v1562 = vld [vmem:[%s819 + $0x20] sm:$0xff]
      %v1563 = vld [vmem:[%s819 + $0x30] sm:$0xff]
      %v1564 = vld [vmem:[%s819 + $0x38] sm:$0xff]
      %v1565 = vld [vmem:[%s819 + $0x48] sm:$0xff]
      %v1566 = vld [vmem:[%s819 + $0x50] sm:$0xff]
      %v1567 = vld [vmem:[%s819 + $0x60] sm:$0xff]
      %v1568 = vld [vmem:[%s819 + $0x68] sm:$0xff]
      %v1569 = vld [vmem:[%s819 + $0x78] sm:$0xff]
      %v1570 = vld [vmem:[%s819 + $0x80] sm:$0xff]
      %v1571 = vld [vmem:[%s819 + $0x90] sm:$0xff]
      %v1572 = vld [vmem:[%s819 + $0x98] sm:$0xff]
      %v1573 = vld [vmem:[%s819 + $0xa8] sm:$0xff]
      %v1574 = vld [vmem:[%s819 + $0xb0] sm:$0xff]
      %v1575 = vld [vmem:[%s819 + $0xc0] sm:$0xff]
      %v1576 = vld [vmem:[%s819 + $0xc8] sm:$0xff]
      %v1577 = vld [vmem:[%s819 + $0xd8] sm:$0xff]
      %v1578 = vld [vmem:[%s819 + $0xe0] sm:$0xff]
      %v1579 = vld [vmem:[%s819 + $0xf0] sm:$0xff]
      %v1580 = vld [vmem:[%s819 + $0xf8] sm:$0xff]
      %v1581 = vld [vmem:[%s819 + $0x108] sm:$0xff]
      %v1582 = vld [vmem:[%s819 + $0x110] sm:$0xff]
      %v1583 = vld [vmem:[%s819 + $0x120] sm:$0xff]
      %v1584 = vld [vmem:[%s819 + $0x128] sm:$0xff]
      %v1585 = vld [vmem:[%s819 + $0x138] sm:$0xff]
      %v1586 = vld [vmem:[%s819 + $0x140] sm:$0xff]
      %v1587 = vld [vmem:[%s819 + $0x150] sm:$0xff]
      %v1588 = vld [vmem:[%s819 + $0x158] sm:$0xff]
      %v1589 = vld [vmem:[%s819 + $0x168] sm:$0xff]
      %v1590 = vld [vmem:[%s819 + $0x170] sm:$0xff]
      %v1591 = vpack.c.bf16 %v1560, %v1559
      %v1592 = vpack.c.bf16 %v1562, %v1561
      %v1593 = vpack.c.bf16 %v1564, %v1563
      %v1594 = vpack.c.bf16 %v1566, %v1565
      %v1595 = vpack.c.bf16 %v1568, %v1567
      %v1596 = vpack.c.bf16 %v1570, %v1569
      %v1597 = vpack.c.bf16 %v1572, %v1571
      %v1598 = vpack.c.bf16 %v1574, %v1573
      %v1599 = vpack.c.bf16 %v1576, %v1575
      %v1600 = vpack.c.bf16 %v1578, %v1577
      %v1601 = vpack.c.bf16 %v1580, %v1579
      %v1602 = vpack.c.bf16 %v1582, %v1581
      %v1603 = vpack.c.bf16 %v1584, %v1583
      %v1604 = vpack.c.bf16 %v1586, %v1585
      %v1605 = vpack.c.bf16 %v1588, %v1587
      %v1606 = vpack.c.bf16 %v1590, %v1589
      %v1623 = vunpack.c.l.b16 %v1591
      %v1624 = vunpack.c.h.b16 %v1591
      %v1625 = vunpack.c.l.b16 %v1592
      %v1626 = vunpack.c.h.b16 %v1592
      %v1627 = vunpack.c.l.b16 %v1593
      %v1628 = vunpack.c.h.b16 %v1593
      %v1629 = vunpack.c.l.b16 %v1594
      %v1630 = vunpack.c.h.b16 %v1594
      %v1631 = vunpack.c.l.b16 %v1595
      %v1632 = vunpack.c.h.b16 %v1595
      %v1633 = vunpack.c.l.b16 %v1596
      %v1634 = vunpack.c.h.b16 %v1596
      %v1635 = vunpack.c.l.b16 %v1597
      %v1636 = vunpack.c.h.b16 %v1597
      %v1637 = vunpack.c.l.b16 %v1598
      %v1638 = vunpack.c.h.b16 %v1598
      %v1639 = vunpack.c.l.b16 %v1599
      %v1640 = vunpack.c.h.b16 %v1599
      %v1641 = vunpack.c.l.b16 %v1600
      %v1642 = vunpack.c.h.b16 %v1600
      %v1643 = vunpack.c.l.b16 %v1601
      %v1644 = vunpack.c.h.b16 %v1601
      %v1645 = vunpack.c.l.b16 %v1602
      %v1646 = vunpack.c.h.b16 %v1602
      %v1647 = vunpack.c.l.b16 %v1603
      %v1648 = vunpack.c.h.b16 %v1603
      %v1649 = vunpack.c.l.b16 %v1604
      %v1650 = vunpack.c.h.b16 %v1604
      %v1651 = vunpack.c.l.b16 %v1605
      %v1652 = vunpack.c.h.b16 %v1605
      %v1653 = vunpack.c.l.b16 %v1606
      %v1654 = vunpack.c.h.b16 %v1606
      %v1655 = vpack.c.b16 %v1623, %v1623
      %v1656 = vpack.c.b16 %v1624, %v1624
      %v1657 = vpack.c.b16 %v1625, %v1625
      %v1658 = vpack.c.b16 %v1626, %v1626
      %v1659 = vpack.c.b16 %v1627, %v1627
      %v1660 = vpack.c.b16 %v1628, %v1628
      %v1661 = vpack.c.b16 %v1629, %v1629
      %v1662 = vpack.c.b16 %v1630, %v1630
      %v1663 = vpack.c.b16 %v1631, %v1631
      %v1664 = vpack.c.b16 %v1632, %v1632
      %v1665 = vpack.c.b16 %v1633, %v1633
      %v1666 = vpack.c.b16 %v1634, %v1634
      %v1667 = vpack.c.b16 %v1635, %v1635
      %v1668 = vpack.c.b16 %v1636, %v1636
      %v1669 = vpack.c.b16 %v1637, %v1637
      %v1670 = vpack.c.b16 %v1638, %v1638
      %v1671 = vpack.c.b16 %v1639, %v1639
      %v1672 = vpack.c.b16 %v1640, %v1640
      %v1673 = vpack.c.b16 %v1641, %v1641
      %v1674 = vpack.c.b16 %v1642, %v1642
      %v1675 = vpack.c.b16 %v1643, %v1643
      %v1676 = vpack.c.b16 %v1644, %v1644
      %v1677 = vpack.c.b16 %v1645, %v1645
      %v1678 = vpack.c.b16 %v1646, %v1646
      %v1679 = vpack.c.b16 %v1647, %v1647
      %v1680 = vpack.c.b16 %v1648, %v1648
      %v1681 = vpack.c.b16 %v1649, %v1649
      %v1682 = vpack.c.b16 %v1650, %v1650
      %v1683 = vpack.c.b16 %v1651, %v1651
      %v1684 = vpack.c.b16 %v1652, %v1652
      %v1685 = vpack.c.b16 %v1653, %v1653
      %v1686 = vpack.c.b16 %v1654, %v1654
      %1687 = vrot.lane.b32.xlu0 %v1655, 48
      %v1688 = vpop.permute.xlu0 %1687
      %1689 = vrot.lane.b32.xlu0 %v1656, 48
      %v1690 = vpop.permute.xlu0 %1689
      %1691 = vrot.lane.b32.xlu0 %v1657, 48
      %v1692 = vpop.permute.xlu0 %1691
      %1693 = vrot.lane.b32.xlu0 %v1658, 48
      %v1694 = vpop.permute.xlu0 %1693
      %1695 = vrot.lane.b32.xlu0 %v1659, 48
      %v1696 = vpop.permute.xlu0 %1695
      %1697 = vrot.lane.b32.xlu0 %v1660, 48
      %v1698 = vpop.permute.xlu0 %1697
      %1699 = vrot.lane.b32.xlu0 %v1661, 48
      %v1700 = vpop.permute.xlu0 %1699
      %1701 = vrot.lane.b32.xlu0 %v1662, 48
      %v1702 = vpop.permute.xlu0 %1701
      %1703 = vrot.lane.b32.xlu0 %v1663, 48
      %v1704 = vpop.permute.xlu0 %1703
      %1705 = vrot.lane.b32.xlu0 %v1664, 48
      %v1706 = vpop.permute.xlu0 %1705
      %1707 = vrot.lane.b32.xlu0 %v1665, 48
      %v1708 = vpop.permute.xlu0 %1707
      %1709 = vrot.lane.b32.xlu0 %v1666, 48
      %v1710 = vpop.permute.xlu0 %1709
      %1711 = vrot.lane.b32.xlu0 %v1667, 48
      %v1712 = vpop.permute.xlu0 %1711
      %1713 = vrot.lane.b32.xlu0 %v1668, 48
      %v1714 = vpop.permute.xlu0 %1713
      %1715 = vrot.lane.b32.xlu0 %v1669, 48
      %v1716 = vpop.permute.xlu0 %1715
      %1717 = vrot.lane.b32.xlu0 %v1670, 48
      %v1718 = vpop.permute.xlu0 %1717
      %1719 = vrot.lane.b32.xlu0 %v1671, 48
      %v1720 = vpop.permute.xlu0 %1719
      %1721 = vrot.lane.b32.xlu0 %v1672, 48
      %v1722 = vpop.permute.xlu0 %1721
      %1723 = vrot.lane.b32.xlu0 %v1673, 48
      %v1724 = vpop.permute.xlu0 %1723
      %1725 = vrot.lane.b32.xlu0 %v1674, 48
      %v1726 = vpop.permute.xlu0 %1725
      %1727 = vrot.lane.b32.xlu0 %v1675, 48
      %v1728 = vpop.permute.xlu0 %1727
      %1729 = vrot.lane.b32.xlu0 %v1676, 48
      %v1730 = vpop.permute.xlu0 %1729
      %1731 = vrot.lane.b32.xlu0 %v1677, 48
      %v1732 = vpop.permute.xlu0 %1731
      %1733 = vrot.lane.b32.xlu0 %v1678, 48
      %v1734 = vpop.permute.xlu0 %1733
      %1735 = vrot.lane.b32.xlu0 %v1679, 48
      %v1736 = vpop.permute.xlu0 %1735
      %1737 = vrot.lane.b32.xlu0 %v1680, 48
      %v1738 = vpop.permute.xlu0 %1737
      %1739 = vrot.lane.b32.xlu0 %v1681, 48
      %v1740 = vpop.permute.xlu0 %1739
      %1741 = vrot.lane.b32.xlu0 %v1682, 48
      %v1742 = vpop.permute.xlu0 %1741
      %1743 = vrot.lane.b32.xlu0 %v1683, 48
      %v1744 = vpop.permute.xlu0 %1743
      %1745 = vrot.lane.b32.xlu0 %v1684, 48
      %v1746 = vpop.permute.xlu0 %1745
      %1747 = vrot.lane.b32.xlu0 %v1685, 48
      %v1748 = vpop.permute.xlu0 %1747
      %1749 = vrot.lane.b32.xlu0 %v1686, 48
      %v1750 = vpop.permute.xlu0 %1749
      %vm1783 = vcmask 519552
      %1784 = vst.msk [vmem:[#allocation3] sm:$0xf] %vm1783, %v1688
      %1785 = vst.msk [vmem:[#allocation3 + $0x8] sm:$0xf] %vm1783, %v1690
      %1786 = vst.msk [vmem:[#allocation3 + $0x10] sm:$0xf] %vm1783, %v1692
      %1787 = vst.msk [vmem:[#allocation3 + $0x18] sm:$0xf] %vm1783, %v1694
      %1788 = vst.msk [vmem:[#allocation3 + $0x20] sm:$0xf] %vm1783, %v1696
      %1789 = vst.msk [vmem:[#allocation3 + $0x28] sm:$0xf] %vm1783, %v1698
      %1790 = vst.msk [vmem:[#allocation3 + $0x30] sm:$0xf] %vm1783, %v1700
      %1791 = vst.msk [vmem:[#allocation3 + $0x38] sm:$0xf] %vm1783, %v1702
      %1792 = vst.msk [vmem:[#allocation3 + $0x40] sm:$0xf] %vm1783, %v1704
      %1793 = vst.msk [vmem:[#allocation3 + $0x48] sm:$0xf] %vm1783, %v1706
      %1794 = vst.msk [vmem:[#allocation3 + $0x50] sm:$0xf] %vm1783, %v1708
      %1795 = vst.msk [vmem:[#allocation3 + $0x58] sm:$0xf] %vm1783, %v1710
      %1796 = vst.msk [vmem:[#allocation3 + $0x60] sm:$0xf] %vm1783, %v1712
      %1797 = vst.msk [vmem:[#allocation3 + $0x68] sm:$0xf] %vm1783, %v1714
      %1798 = vst.msk [vmem:[#allocation3 + $0x70] sm:$0xf] %vm1783, %v1716
      %1799 = vst.msk [vmem:[#allocation3 + $0x78] sm:$0xf] %vm1783, %v1718
      %1800 = vst.msk [vmem:[#allocation3 + $0x80] sm:$0xf] %vm1783, %v1720
      %1801 = vst.msk [vmem:[#allocation3 + $0x88] sm:$0xf] %vm1783, %v1722
      %1802 = vst.msk [vmem:[#allocation3 + $0x90] sm:$0xf] %vm1783, %v1724
      %1803 = vst.msk [vmem:[#allocation3 + $0x98] sm:$0xf] %vm1783, %v1726
      %1804 = vst.msk [vmem:[#allocation3 + $0xa0] sm:$0xf] %vm1783, %v1728
      %1805 = vst.msk [vmem:[#allocation3 + $0xa8] sm:$0xf] %vm1783, %v1730
      %1806 = vst.msk [vmem:[#allocation3 + $0xb0] sm:$0xf] %vm1783, %v1732
      %1807 = vst.msk [vmem:[#allocation3 + $0xb8] sm:$0xf] %vm1783, %v1734
      %1808 = vst.msk [vmem:[#allocation3 + $0xc0] sm:$0xf] %vm1783, %v1736
      %1809 = vst.msk [vmem:[#allocation3 + $0xc8] sm:$0xf] %vm1783, %v1738
      %1810 = vst.msk [vmem:[#allocation3 + $0xd0] sm:$0xf] %vm1783, %v1740
      %1811 = vst.msk [vmem:[#allocation3 + $0xd8] sm:$0xf] %vm1783, %v1742
      %1812 = vst.msk [vmem:[#allocation3 + $0xe0] sm:$0xf] %vm1783, %v1744
      %1813 = vst.msk [vmem:[#allocation3 + $0xe8] sm:$0xf] %vm1783, %v1746
      %1814 = vst.msk [vmem:[#allocation3 + $0xf0] sm:$0xf] %vm1783, %v1748
      %1815 = vst.msk [vmem:[#allocation3 + $0xf8] sm:$0xf] %vm1783, %v1750
      %v1816 = vld [vmem:[%s819 + $0x1] sm:$0xff]
      %v1817 = vld [vmem:[%s819 + $0x9] sm:$0xff]
      %v1818 = vld [vmem:[%s819 + $0x19] sm:$0xff]
      %v1819 = vld [vmem:[%s819 + $0x21] sm:$0xff]
      %v1820 = vld [vmem:[%s819 + $0x31] sm:$0xff]
      %v1821 = vld [vmem:[%s819 + $0x39] sm:$0xff]
      %v1822 = vld [vmem:[%s819 + $0x49] sm:$0xff]
      %v1823 = vld [vmem:[%s819 + $0x51] sm:$0xff]
      %v1824 = vld [vmem:[%s819 + $0x61] sm:$0xff]
      %v1825 = vld [vmem:[%s819 + $0x69] sm:$0xff]
      %v1826 = vld [vmem:[%s819 + $0x79] sm:$0xff]
      %v1827 = vld [vmem:[%s819 + $0x81] sm:$0xff]
      %v1828 = vld [vmem:[%s819 + $0x91] sm:$0xff]
      %v1829 = vld [vmem:[%s819 + $0x99] sm:$0xff]
      %v1830 = vld [vmem:[%s819 + $0xa9] sm:$0xff]
      %v1831 = vld [vmem:[%s819 + $0xb1] sm:$0xff]
      %v1832 = vld [vmem:[%s819 + $0xc1] sm:$0xff]
      %v1833 = vld [vmem:[%s819 + $0xc9] sm:$0xff]
      %v1834 = vld [vmem:[%s819 + $0xd9] sm:$0xff]
      %v1835 = vld [vmem:[%s819 + $0xe1] sm:$0xff]
      %v1836 = vld [vmem:[%s819 + $0xf1] sm:$0xff]
      %v1837 = vld [vmem:[%s819 + $0xf9] sm:$0xff]
      %v1838 = vld [vmem:[%s819 + $0x109] sm:$0xff]
      %v1839 = vld [vmem:[%s819 + $0x111] sm:$0xff]
      %v1840 = vld [vmem:[%s819 + $0x121] sm:$0xff]
      %v1841 = vld [vmem:[%s819 + $0x129] sm:$0xff]
      %v1842 = vld [vmem:[%s819 + $0x139] sm:$0xff]
      %v1843 = vld [vmem:[%s819 + $0x141] sm:$0xff]
      %v1844 = vld [vmem:[%s819 + $0x151] sm:$0xff]
      %v1845 = vld [vmem:[%s819 + $0x159] sm:$0xff]
      %v1846 = vld [vmem:[%s819 + $0x169] sm:$0xff]
      %v1847 = vld [vmem:[%s819 + $0x171] sm:$0xff]
      %v1848 = vpack.c.bf16 %v1817, %v1816
      %v1849 = vpack.c.bf16 %v1819, %v1818
      %v1850 = vpack.c.bf16 %v1821, %v1820
      %v1851 = vpack.c.bf16 %v1823, %v1822
      %v1852 = vpack.c.bf16 %v1825, %v1824
      %v1853 = vpack.c.bf16 %v1827, %v1826
      %v1854 = vpack.c.bf16 %v1829, %v1828
      %v1855 = vpack.c.bf16 %v1831, %v1830
      %v1856 = vpack.c.bf16 %v1833, %v1832
      %v1857 = vpack.c.bf16 %v1835, %v1834
      %v1858 = vpack.c.bf16 %v1837, %v1836
      %v1859 = vpack.c.bf16 %v1839, %v1838
      %v1860 = vpack.c.bf16 %v1841, %v1840
      %v1861 = vpack.c.bf16 %v1843, %v1842
      %v1862 = vpack.c.bf16 %v1845, %v1844
      %v1863 = vpack.c.bf16 %v1847, %v1846
      %v1880 = vunpack.c.l.b16 %v1848
      %v1881 = vunpack.c.h.b16 %v1848
      %v1882 = vunpack.c.l.b16 %v1849
      %v1883 = vunpack.c.h.b16 %v1849
      %v1884 = vunpack.c.l.b16 %v1850
      %v1885 = vunpack.c.h.b16 %v1850
      %v1886 = vunpack.c.l.b16 %v1851
      %v1887 = vunpack.c.h.b16 %v1851
      %v1888 = vunpack.c.l.b16 %v1852
      %v1889 = vunpack.c.h.b16 %v1852
      %v1890 = vunpack.c.l.b16 %v1853
      %v1891 = vunpack.c.h.b16 %v1853
      %v1892 = vunpack.c.l.b16 %v1854
      %v1893 = vunpack.c.h.b16 %v1854
      %v1894 = vunpack.c.l.b16 %v1855
      %v1895 = vunpack.c.h.b16 %v1855
      %v1896 = vunpack.c.l.b16 %v1856
      %v1897 = vunpack.c.h.b16 %v1856
      %v1898 = vunpack.c.l.b16 %v1857
      %v1899 = vunpack.c.h.b16 %v1857
      %v1900 = vunpack.c.l.b16 %v1858
      %v1901 = vunpack.c.h.b16 %v1858
      %v1902 = vunpack.c.l.b16 %v1859
      %v1903 = vunpack.c.h.b16 %v1859
      %v1904 = vunpack.c.l.b16 %v1860
      %v1905 = vunpack.c.h.b16 %v1860
      %v1906 = vunpack.c.l.b16 %v1861
      %v1907 = vunpack.c.h.b16 %v1861
      %v1908 = vunpack.c.l.b16 %v1862
      %v1909 = vunpack.c.h.b16 %v1862
      %v1910 = vunpack.c.l.b16 %v1863
      %v1911 = vunpack.c.h.b16 %v1863
      %v1912 = vpack.c.b16 %v1880, %v1880
      %v1913 = vpack.c.b16 %v1881, %v1881
      %v1914 = vpack.c.b16 %v1882, %v1882
      %v1915 = vpack.c.b16 %v1883, %v1883
      %v1916 = vpack.c.b16 %v1884, %v1884
      %v1917 = vpack.c.b16 %v1885, %v1885
      %v1918 = vpack.c.b16 %v1886, %v1886
      %v1919 = vpack.c.b16 %v1887, %v1887
      %v1920 = vpack.c.b16 %v1888, %v1888
      %v1921 = vpack.c.b16 %v1889, %v1889
      %v1922 = vpack.c.b16 %v1890, %v1890
      %v1923 = vpack.c.b16 %v1891, %v1891
      %v1924 = vpack.c.b16 %v1892, %v1892
      %v1925 = vpack.c.b16 %v1893, %v1893
      %v1926 = vpack.c.b16 %v1894, %v1894
      %v1927 = vpack.c.b16 %v1895, %v1895
      %v1928 = vpack.c.b16 %v1896, %v1896
      %v1929 = vpack.c.b16 %v1897, %v1897
      %v1930 = vpack.c.b16 %v1898, %v1898
      %v1931 = vpack.c.b16 %v1899, %v1899
      %v1932 = vpack.c.b16 %v1900, %v1900
      %v1933 = vpack.c.b16 %v1901, %v1901
      %v1934 = vpack.c.b16 %v1902, %v1902
      %v1935 = vpack.c.b16 %v1903, %v1903
      %v1936 = vpack.c.b16 %v1904, %v1904
      %v1937 = vpack.c.b16 %v1905, %v1905
      %v1938 = vpack.c.b16 %v1906, %v1906
      %v1939 = vpack.c.b16 %v1907, %v1907
      %v1940 = vpack.c.b16 %v1908, %v1908
      %v1941 = vpack.c.b16 %v1909, %v1909
      %v1942 = vpack.c.b16 %v1910, %v1910
      %v1943 = vpack.c.b16 %v1911, %v1911
      %1944 = vrot.lane.b32.xlu0 %v1912, 64
      %v1945 = vpop.permute.xlu0 %1944
      %1946 = vrot.lane.b32.xlu0 %v1913, 64
      %v1947 = vpop.permute.xlu0 %1946
      %1948 = vrot.lane.b32.xlu0 %v1914, 64
      %v1949 = vpop.permute.xlu0 %1948
      %1950 = vrot.lane.b32.xlu0 %v1915, 64
      %v1951 = vpop.permute.xlu0 %1950
      %1952 = vrot.lane.b32.xlu0 %v1916, 64
      %v1953 = vpop.permute.xlu0 %1952
      %1954 = vrot.lane.b32.xlu0 %v1917, 64
      %v1955 = vpop.permute.xlu0 %1954
      %1956 = vrot.lane.b32.xlu0 %v1918, 64
      %v1957 = vpop.permute.xlu0 %1956
      %1958 = vrot.lane.b32.xlu0 %v1919, 64
      %v1959 = vpop.permute.xlu0 %1958
      %1960 = vrot.lane.b32.xlu0 %v1920, 64
      %v1961 = vpop.permute.xlu0 %1960
      %1962 = vrot.lane.b32.xlu0 %v1921, 64
      %v1963 = vpop.permute.xlu0 %1962
      %1964 = vrot.lane.b32.xlu0 %v1922, 64
      %v1965 = vpop.permute.xlu0 %1964
      %1966 = vrot.lane.b32.xlu0 %v1923, 64
      %v1967 = vpop.permute.xlu0 %1966
      %1968 = vrot.lane.b32.xlu0 %v1924, 64
      %v1969 = vpop.permute.xlu0 %1968
      %1970 = vrot.lane.b32.xlu0 %v1925, 64
      %v1971 = vpop.permute.xlu0 %1970
      %1972 = vrot.lane.b32.xlu0 %v1926, 64
      %v1973 = vpop.permute.xlu0 %1972
      %1974 = vrot.lane.b32.xlu0 %v1927, 64
      %v1975 = vpop.permute.xlu0 %1974
      %1976 = vrot.lane.b32.xlu0 %v1928, 64
      %v1977 = vpop.permute.xlu0 %1976
      %1978 = vrot.lane.b32.xlu0 %v1929, 64
      %v1979 = vpop.permute.xlu0 %1978
      %1980 = vrot.lane.b32.xlu0 %v1930, 64
      %v1981 = vpop.permute.xlu0 %1980
      %1982 = vrot.lane.b32.xlu0 %v1931, 64
      %v1983 = vpop.permute.xlu0 %1982
      %1984 = vrot.lane.b32.xlu0 %v1932, 64
      %v1985 = vpop.permute.xlu0 %1984
      %1986 = vrot.lane.b32.xlu0 %v1933, 64
      %v1987 = vpop.permute.xlu0 %1986
      %1988 = vrot.lane.b32.xlu0 %v1934, 64
      %v1989 = vpop.permute.xlu0 %1988
      %1990 = vrot.lane.b32.xlu0 %v1935, 64
      %v1991 = vpop.permute.xlu0 %1990
      %1992 = vrot.lane.b32.xlu0 %v1936, 64
      %v1993 = vpop.permute.xlu0 %1992
      %1994 = vrot.lane.b32.xlu0 %v1937, 64
      %v1995 = vpop.permute.xlu0 %1994
      %1996 = vrot.lane.b32.xlu0 %v1938, 64
      %v1997 = vpop.permute.xlu0 %1996
      %1998 = vrot.lane.b32.xlu0 %v1939, 64
      %v1999 = vpop.permute.xlu0 %1998
      %2000 = vrot.lane.b32.xlu0 %v1940, 64
      %v2001 = vpop.permute.xlu0 %2000
      %2002 = vrot.lane.b32.xlu0 %v1941, 64
      %v2003 = vpop.permute.xlu0 %2002
      %2004 = vrot.lane.b32.xlu0 %v1942, 64
      %v2005 = vpop.permute.xlu0 %2004
      %2006 = vrot.lane.b32.xlu0 %v1943, 64
      %v2007 = vpop.permute.xlu0 %2006
      %vm2040 = vcmask 650752
      %2041 = vst.msk [vmem:[#allocation3] sm:$0xf] %vm2040, %v1945
      %2042 = vst.msk [vmem:[#allocation3 + $0x8] sm:$0xf] %vm2040, %v1947
      %2043 = vst.msk [vmem:[#allocation3 + $0x10] sm:$0xf] %vm2040, %v1949
      %2044 = vst.msk [vmem:[#allocation3 + $0x18] sm:$0xf] %vm2040, %v1951
      %2045 = vst.msk [vmem:[#allocation3 + $0x20] sm:$0xf] %vm2040, %v1953
      %2046 = vst.msk [vmem:[#allocation3 + $0x28] sm:$0xf] %vm2040, %v1955
      %2047 = vst.msk [vmem:[#allocation3 + $0x30] sm:$0xf] %vm2040, %v1957
      %2048 = vst.msk [vmem:[#allocation3 + $0x38] sm:$0xf] %vm2040, %v1959
      %2049 = vst.msk [vmem:[#allocation3 + $0x40] sm:$0xf] %vm2040, %v1961
      %2050 = vst.msk [vmem:[#allocation3 + $0x48] sm:$0xf] %vm2040, %v1963
      %2051 = vst.msk [vmem:[#allocation3 + $0x50] sm:$0xf] %vm2040, %v1965
      %2052 = vst.msk [vmem:[#allocation3 + $0x58] sm:$0xf] %vm2040, %v1967
      %2053 = vst.msk [vmem:[#allocation3 + $0x60] sm:$0xf] %vm2040, %v1969
      %2054 = vst.msk [vmem:[#allocation3 + $0x68] sm:$0xf] %vm2040, %v1971
      %2055 = vst.msk [vmem:[#allocation3 + $0x70] sm:$0xf] %vm2040, %v1973
      %2056 = vst.msk [vmem:[#allocation3 + $0x78] sm:$0xf] %vm2040, %v1975
      %2057 = vst.msk [vmem:[#allocation3 + $0x80] sm:$0xf] %vm2040, %v1977
      %2058 = vst.msk [vmem:[#allocation3 + $0x88] sm:$0xf] %vm2040, %v1979
      %2059 = vst.msk [vmem:[#allocation3 + $0x90] sm:$0xf] %vm2040, %v1981
      %2060 = vst.msk [vmem:[#allocation3 + $0x98] sm:$0xf] %vm2040, %v1983
      %2061 = vst.msk [vmem:[#allocation3 + $0xa0] sm:$0xf] %vm2040, %v1985
      %2062 = vst.msk [vmem:[#allocation3 + $0xa8] sm:$0xf] %vm2040, %v1987
      %2063 = vst.msk [vmem:[#allocation3 + $0xb0] sm:$0xf] %vm2040, %v1989
      %2064 = vst.msk [vmem:[#allocation3 + $0xb8] sm:$0xf] %vm2040, %v1991
      %2065 = vst.msk [vmem:[#allocation3 + $0xc0] sm:$0xf] %vm2040, %v1993
      %2066 = vst.msk [vmem:[#allocation3 + $0xc8] sm:$0xf] %vm2040, %v1995
      %2067 = vst.msk [vmem:[#allocation3 + $0xd0] sm:$0xf] %vm2040, %v1997
      %2068 = vst.msk [vmem:[#allocation3 + $0xd8] sm:$0xf] %vm2040, %v1999
      %2069 = vst.msk [vmem:[#allocation3 + $0xe0] sm:$0xf] %vm2040, %v2001
      %2070 = vst.msk [vmem:[#allocation3 + $0xe8] sm:$0xf] %vm2040, %v2003
      %2071 = vst.msk [vmem:[#allocation3 + $0xf0] sm:$0xf] %vm2040, %v2005
      %2072 = vst.msk [vmem:[#allocation3 + $0xf8] sm:$0xf] %vm2040, %v2007
      %v2073 = vld [vmem:[%s819 + $0x2] sm:$0xff]
      %v2074 = vld [vmem:[%s819 + $0xa] sm:$0xff]
      %v2075 = vld [vmem:[%s819 + $0x1a] sm:$0xff]
      %v2076 = vld [vmem:[%s819 + $0x22] sm:$0xff]
      %v2077 = vld [vmem:[%s819 + $0x32] sm:$0xff]
      %v2078 = vld [vmem:[%s819 + $0x3a] sm:$0xff]
      %v2079 = vld [vmem:[%s819 + $0x4a] sm:$0xff]
      %v2080 = vld [vmem:[%s819 + $0x52] sm:$0xff]
      %v2081 = vld [vmem:[%s819 + $0x62] sm:$0xff]
      %v2082 = vld [vmem:[%s819 + $0x6a] sm:$0xff]
      %v2083 = vld [vmem:[%s819 + $0x7a] sm:$0xff]
      %v2084 = vld [vmem:[%s819 + $0x82] sm:$0xff]
      %v2085 = vld [vmem:[%s819 + $0x92] sm:$0xff]
      %v2086 = vld [vmem:[%s819 + $0x9a] sm:$0xff]
      %v2087 = vld [vmem:[%s819 + $0xaa] sm:$0xff]
      %v2088 = vld [vmem:[%s819 + $0xb2] sm:$0xff]
      %v2089 = vld [vmem:[%s819 + $0xc2] sm:$0xff]
      %v2090 = vld [vmem:[%s819 + $0xca] sm:$0xff]
      %v2091 = vld [vmem:[%s819 + $0xda] sm:$0xff]
      %v2092 = vld [vmem:[%s819 + $0xe2] sm:$0xff]
      %v2093 = vld [vmem:[%s819 + $0xf2] sm:$0xff]
      %v2094 = vld [vmem:[%s819 + $0xfa] sm:$0xff]
      %v2095 = vld [vmem:[%s819 + $0x10a] sm:$0xff]
      %v2096 = vld [vmem:[%s819 + $0x112] sm:$0xff]
      %v2097 = vld [vmem:[%s819 + $0x122] sm:$0xff]
      %v2098 = vld [vmem:[%s819 + $0x12a] sm:$0xff]
      %v2099 = vld [vmem:[%s819 + $0x13a] sm:$0xff]
      %v2100 = vld [vmem:[%s819 + $0x142] sm:$0xff]
      %v2101 = vld [vmem:[%s819 + $0x152] sm:$0xff]
      %v2102 = vld [vmem:[%s819 + $0x15a] sm:$0xff]
      %v2103 = vld [vmem:[%s819 + $0x16a] sm:$0xff]
      %v2104 = vld [vmem:[%s819 + $0x172] sm:$0xff]
      %v2105 = vpack.c.bf16 %v2074, %v2073
      %v2106 = vpack.c.bf16 %v2076, %v2075
      %v2107 = vpack.c.bf16 %v2078, %v2077
      %v2108 = vpack.c.bf16 %v2080, %v2079
      %v2109 = vpack.c.bf16 %v2082, %v2081
      %v2110 = vpack.c.bf16 %v2084, %v2083
      %v2111 = vpack.c.bf16 %v2086, %v2085
      %v2112 = vpack.c.bf16 %v2088, %v2087
      %v2113 = vpack.c.bf16 %v2090, %v2089
      %v2114 = vpack.c.bf16 %v2092, %v2091
      %v2115 = vpack.c.bf16 %v2094, %v2093
      %v2116 = vpack.c.bf16 %v2096, %v2095
      %v2117 = vpack.c.bf16 %v2098, %v2097
      %v2118 = vpack.c.bf16 %v2100, %v2099
      %v2119 = vpack.c.bf16 %v2102, %v2101
      %v2120 = vpack.c.bf16 %v2104, %v2103
      %v2137 = vunpack.c.l.b16 %v2105
      %v2138 = vunpack.c.h.b16 %v2105
      %v2139 = vunpack.c.l.b16 %v2106
      %v2140 = vunpack.c.h.b16 %v2106
      %v2141 = vunpack.c.l.b16 %v2107
      %v2142 = vunpack.c.h.b16 %v2107
      %v2143 = vunpack.c.l.b16 %v2108
      %v2144 = vunpack.c.h.b16 %v2108
      %v2145 = vunpack.c.l.b16 %v2109
      %v2146 = vunpack.c.h.b16 %v2109
      %v2147 = vunpack.c.l.b16 %v2110
      %v2148 = vunpack.c.h.b16 %v2110
      %v2149 = vunpack.c.l.b16 %v2111
      %v2150 = vunpack.c.h.b16 %v2111
      %v2151 = vunpack.c.l.b16 %v2112
      %v2152 = vunpack.c.h.b16 %v2112
      %v2153 = vunpack.c.l.b16 %v2113
      %v2154 = vunpack.c.h.b16 %v2113
      %v2155 = vunpack.c.l.b16 %v2114
      %v2156 = vunpack.c.h.b16 %v2114
      %v2157 = vunpack.c.l.b16 %v2115
      %v2158 = vunpack.c.h.b16 %v2115
      %v2159 = vunpack.c.l.b16 %v2116
      %v2160 = vunpack.c.h.b16 %v2116
      %v2161 = vunpack.c.l.b16 %v2117
      %v2162 = vunpack.c.h.b16 %v2117
      %v2163 = vunpack.c.l.b16 %v2118
      %v2164 = vunpack.c.h.b16 %v2118
      %v2165 = vunpack.c.l.b16 %v2119
      %v2166 = vunpack.c.h.b16 %v2119
      %v2167 = vunpack.c.l.b16 %v2120
      %v2168 = vunpack.c.h.b16 %v2120
      %v2169 = vpack.c.b16 %v2137, %v2137
      %v2170 = vpack.c.b16 %v2138, %v2138
      %v2171 = vpack.c.b16 %v2139, %v2139
      %v2172 = vpack.c.b16 %v2140, %v2140
      %v2173 = vpack.c.b16 %v2141, %v2141
      %v2174 = vpack.c.b16 %v2142, %v2142
      %v2175 = vpack.c.b16 %v2143, %v2143
      %v2176 = vpack.c.b16 %v2144, %v2144
      %v2177 = vpack.c.b16 %v2145, %v2145
      %v2178 = vpack.c.b16 %v2146, %v2146
      %v2179 = vpack.c.b16 %v2147, %v2147
      %v2180 = vpack.c.b16 %v2148, %v2148
      %v2181 = vpack.c.b16 %v2149, %v2149
      %v2182 = vpack.c.b16 %v2150, %v2150
      %v2183 = vpack.c.b16 %v2151, %v2151
      %v2184 = vpack.c.b16 %v2152, %v2152
      %v2185 = vpack.c.b16 %v2153, %v2153
      %v2186 = vpack.c.b16 %v2154, %v2154
      %v2187 = vpack.c.b16 %v2155, %v2155
      %v2188 = vpack.c.b16 %v2156, %v2156
      %v2189 = vpack.c.b16 %v2157, %v2157
      %v2190 = vpack.c.b16 %v2158, %v2158
      %v2191 = vpack.c.b16 %v2159, %v2159
      %v2192 = vpack.c.b16 %v2160, %v2160
      %v2193 = vpack.c.b16 %v2161, %v2161
      %v2194 = vpack.c.b16 %v2162, %v2162
      %v2195 = vpack.c.b16 %v2163, %v2163
      %v2196 = vpack.c.b16 %v2164, %v2164
      %v2197 = vpack.c.b16 %v2165, %v2165
      %v2198 = vpack.c.b16 %v2166, %v2166
      %v2199 = vpack.c.b16 %v2167, %v2167
      %v2200 = vpack.c.b16 %v2168, %v2168
      %2201 = vrot.lane.b32.xlu0 %v2169, 80
      %v2202 = vpop.permute.xlu0 %2201
      %2203 = vrot.lane.b32.xlu0 %v2170, 80
      %v2204 = vpop.permute.xlu0 %2203
      %2205 = vrot.lane.b32.xlu0 %v2171, 80
      %v2206 = vpop.permute.xlu0 %2205
      %2207 = vrot.lane.b32.xlu0 %v2172, 80
      %v2208 = vpop.permute.xlu0 %2207
      %2209 = vrot.lane.b32.xlu0 %v2173, 80
      %v2210 = vpop.permute.xlu0 %2209
      %2211 = vrot.lane.b32.xlu0 %v2174, 80
      %v2212 = vpop.permute.xlu0 %2211
      %2213 = vrot.lane.b32.xlu0 %v2175, 80
      %v2214 = vpop.permute.xlu0 %2213
      %2215 = vrot.lane.b32.xlu0 %v2176, 80
      %v2216 = vpop.permute.xlu0 %2215
      %2217 = vrot.lane.b32.xlu0 %v2177, 80
      %v2218 = vpop.permute.xlu0 %2217
      %2219 = vrot.lane.b32.xlu0 %v2178, 80
      %v2220 = vpop.permute.xlu0 %2219
      %2221 = vrot.lane.b32.xlu0 %v2179, 80
      %v2222 = vpop.permute.xlu0 %2221
      %2223 = vrot.lane.b32.xlu0 %v2180, 80
      %v2224 = vpop.permute.xlu0 %2223
      %2225 = vrot.lane.b32.xlu0 %v2181, 80
      %v2226 = vpop.permute.xlu0 %2225
      %2227 = vrot.lane.b32.xlu0 %v2182, 80
      %v2228 = vpop.permute.xlu0 %2227
      %2229 = vrot.lane.b32.xlu0 %v2183, 80
      %v2230 = vpop.permute.xlu0 %2229
      %2231 = vrot.lane.b32.xlu0 %v2184, 80
      %v2232 = vpop.permute.xlu0 %2231
      %2233 = vrot.lane.b32.xlu0 %v2185, 80
      %v2234 = vpop.permute.xlu0 %2233
      %2235 = vrot.lane.b32.xlu0 %v2186, 80
      %v2236 = vpop.permute.xlu0 %2235
      %2237 = vrot.lane.b32.xlu0 %v2187, 80
      %v2238 = vpop.permute.xlu0 %2237
      %2239 = vrot.lane.b32.xlu0 %v2188, 80
      %v2240 = vpop.permute.xlu0 %2239
      %2241 = vrot.lane.b32.xlu0 %v2189, 80
      %v2242 = vpop.permute.xlu0 %2241
      %2243 = vrot.lane.b32.xlu0 %v2190, 80
      %v2244 = vpop.permute.xlu0 %2243
      %2245 = vrot.lane.b32.xlu0 %v2191, 80
      %v2246 = vpop.permute.xlu0 %2245
      %2247 = vrot.lane.b32.xlu0 %v2192, 80
      %v2248 = vpop.permute.xlu0 %2247
      %2249 = vrot.lane.b32.xlu0 %v2193, 80
      %v2250 = vpop.permute.xlu0 %2249
      %2251 = vrot.lane.b32.xlu0 %v2194, 80
      %v2252 = vpop.permute.xlu0 %2251
      %2253 = vrot.lane.b32.xlu0 %v2195, 80
      %v2254 = vpop.permute.xlu0 %2253
      %2255 = vrot.lane.b32.xlu0 %v2196, 80
      %v2256 = vpop.permute.xlu0 %2255
      %2257 = vrot.lane.b32.xlu0 %v2197, 80
      %v2258 = vpop.permute.xlu0 %2257
      %2259 = vrot.lane.b32.xlu0 %v2198, 80
      %v2260 = vpop.permute.xlu0 %2259
      %2261 = vrot.lane.b32.xlu0 %v2199, 80
      %v2262 = vpop.permute.xlu0 %2261
      %2263 = vrot.lane.b32.xlu0 %v2200, 80
      %v2264 = vpop.permute.xlu0 %2263
      %vm2297 = vcmask 781952
      %2298 = vst.msk [vmem:[#allocation3] sm:$0xf] %vm2297, %v2202
      %2299 = vst.msk [vmem:[#allocation3 + $0x8] sm:$0xf] %vm2297, %v2204
      %2300 = vst.msk [vmem:[#allocation3 + $0x10] sm:$0xf] %vm2297, %v2206
      %2301 = vst.msk [vmem:[#allocation3 + $0x18] sm:$0xf] %vm2297, %v2208
      %2302 = vst.msk [vmem:[#allocation3 + $0x20] sm:$0xf] %vm2297, %v2210
      %2303 = vst.msk [vmem:[#allocation3 + $0x28] sm:$0xf] %vm2297, %v2212
      %2304 = vst.msk [vmem:[#allocation3 + $0x30] sm:$0xf] %vm2297, %v2214
      %2305 = vst.msk [vmem:[#allocation3 + $0x38] sm:$0xf] %vm2297, %v2216
      %2306 = vst.msk [vmem:[#allocation3 + $0x40] sm:$0xf] %vm2297, %v2218
      %2307 = vst.msk [vmem:[#allocation3 + $0x48] sm:$0xf] %vm2297, %v2220
      %2308 = vst.msk [vmem:[#allocation3 + $0x50] sm:$0xf] %vm2297, %v2222
      %2309 = vst.msk [vmem:[#allocation3 + $0x58] sm:$0xf] %vm2297, %v2224
      %2310 = vst.msk [vmem:[#allocation3 + $0x60] sm:$0xf] %vm2297, %v2226
      %2311 = vst.msk [vmem:[#allocation3 + $0x68] sm:$0xf] %vm2297, %v2228
      %2312 = vst.msk [vmem:[#allocation3 + $0x70] sm:$0xf] %vm2297, %v2230
      %2313 = vst.msk [vmem:[#allocation3 + $0x78] sm:$0xf] %vm2297, %v2232
      %2314 = vst.msk [vmem:[#allocation3 + $0x80] sm:$0xf] %vm2297, %v2234
      %2315 = vst.msk [vmem:[#allocation3 + $0x88] sm:$0xf] %vm2297, %v2236
      %2316 = vst.msk [vmem:[#allocation3 + $0x90] sm:$0xf] %vm2297, %v2238
      %2317 = vst.msk [vmem:[#allocation3 + $0x98] sm:$0xf] %vm2297, %v2240
      %2318 = vst.msk [vmem:[#allocation3 + $0xa0] sm:$0xf] %vm2297, %v2242
      %2319 = vst.msk [vmem:[#allocation3 + $0xa8] sm:$0xf] %vm2297, %v2244
      %2320 = vst.msk [vmem:[#allocation3 + $0xb0] sm:$0xf] %vm2297, %v2246
      %2321 = vst.msk [vmem:[#allocation3 + $0xb8] sm:$0xf] %vm2297, %v2248
      %2322 = vst.msk [vmem:[#allocation3 + $0xc0] sm:$0xf] %vm2297, %v2250
      %2323 = vst.msk [vmem:[#allocation3 + $0xc8] sm:$0xf] %vm2297, %v2252
      %2324 = vst.msk [vmem:[#allocation3 + $0xd0] sm:$0xf] %vm2297, %v2254
      %2325 = vst.msk [vmem:[#allocation3 + $0xd8] sm:$0xf] %vm2297, %v2256
      %2326 = vst.msk [vmem:[#allocation3 + $0xe0] sm:$0xf] %vm2297, %v2258
      %2327 = vst.msk [vmem:[#allocation3 + $0xe8] sm:$0xf] %vm2297, %v2260
      %2328 = vst.msk [vmem:[#allocation3 + $0xf0] sm:$0xf] %vm2297, %v2262
      %2329 = vst.msk [vmem:[#allocation3 + $0xf8] sm:$0xf] %vm2297, %v2264
      %s2330 = scalar_lea.vmem [#allocation2], 48
      %v2331 = vld [vmem:[%s2330] sm:$0xff]
      %v2332 = vld [vmem:[%s2330 + $0x8] sm:$0xff]
      %v2333 = vld [vmem:[%s2330 + $0x18] sm:$0xff]
      %v2334 = vld [vmem:[%s2330 + $0x20] sm:$0xff]
      %v2335 = vld [vmem:[%s2330 + $0x30] sm:$0xff]
      %v2336 = vld [vmem:[%s2330 + $0x38] sm:$0xff]
      %v2337 = vld [vmem:[%s2330 + $0x48] sm:$0xff]
      %v2338 = vld [vmem:[%s2330 + $0x50] sm:$0xff]
      %v2339 = vld [vmem:[%s2330 + $0x60] sm:$0xff]
      %v2340 = vld [vmem:[%s2330 + $0x68] sm:$0xff]
      %v2341 = vld [vmem:[%s2330 + $0x78] sm:$0xff]
      %v2342 = vld [vmem:[%s2330 + $0x80] sm:$0xff]
      %v2343 = vld [vmem:[%s2330 + $0x90] sm:$0xff]
      %v2344 = vld [vmem:[%s2330 + $0x98] sm:$0xff]
      %v2345 = vld [vmem:[%s2330 + $0xa8] sm:$0xff]
      %v2346 = vld [vmem:[%s2330 + $0xb0] sm:$0xff]
      %v2347 = vld [vmem:[%s2330 + $0xc0] sm:$0xff]
      %v2348 = vld [vmem:[%s2330 + $0xc8] sm:$0xff]
      %v2349 = vld [vmem:[%s2330 + $0xd8] sm:$0xff]
      %v2350 = vld [vmem:[%s2330 + $0xe0] sm:$0xff]
      %v2351 = vld [vmem:[%s2330 + $0xf0] sm:$0xff]
      %v2352 = vld [vmem:[%s2330 + $0xf8] sm:$0xff]
      %v2353 = vld [vmem:[%s2330 + $0x108] sm:$0xff]
      %v2354 = vld [vmem:[%s2330 + $0x110] sm:$0xff]
      %v2355 = vld [vmem:[%s2330 + $0x120] sm:$0xff]
      %v2356 = vld [vmem:[%s2330 + $0x128] sm:$0xff]
      %v2357 = vld [vmem:[%s2330 + $0x138] sm:$0xff]
      %v2358 = vld [vmem:[%s2330 + $0x140] sm:$0xff]
      %v2359 = vld [vmem:[%s2330 + $0x150] sm:$0xff]
      %v2360 = vld [vmem:[%s2330 + $0x158] sm:$0xff]
      %v2361 = vld [vmem:[%s2330 + $0x168] sm:$0xff]
      %v2362 = vld [vmem:[%s2330 + $0x170] sm:$0xff]
      %v2363 = vpack.c.bf16 %v2332, %v2331
      %v2364 = vpack.c.bf16 %v2334, %v2333
      %v2365 = vpack.c.bf16 %v2336, %v2335
      %v2366 = vpack.c.bf16 %v2338, %v2337
      %v2367 = vpack.c.bf16 %v2340, %v2339
      %v2368 = vpack.c.bf16 %v2342, %v2341
      %v2369 = vpack.c.bf16 %v2344, %v2343
      %v2370 = vpack.c.bf16 %v2346, %v2345
      %v2371 = vpack.c.bf16 %v2348, %v2347
      %v2372 = vpack.c.bf16 %v2350, %v2349
      %v2373 = vpack.c.bf16 %v2352, %v2351
      %v2374 = vpack.c.bf16 %v2354, %v2353
      %v2375 = vpack.c.bf16 %v2356, %v2355
      %v2376 = vpack.c.bf16 %v2358, %v2357
      %v2377 = vpack.c.bf16 %v2360, %v2359
      %v2378 = vpack.c.bf16 %v2362, %v2361
      %v2395 = vunpack.c.l.b16 %v2363
      %v2396 = vunpack.c.h.b16 %v2363
      %v2397 = vunpack.c.l.b16 %v2364
      %v2398 = vunpack.c.h.b16 %v2364
      %v2399 = vunpack.c.l.b16 %v2365
      %v2400 = vunpack.c.h.b16 %v2365
      %v2401 = vunpack.c.l.b16 %v2366
      %v2402 = vunpack.c.h.b16 %v2366
      %v2403 = vunpack.c.l.b16 %v2367
      %v2404 = vunpack.c.h.b16 %v2367
      %v2405 = vunpack.c.l.b16 %v2368
      %v2406 = vunpack.c.h.b16 %v2368
      %v2407 = vunpack.c.l.b16 %v2369
      %v2408 = vunpack.c.h.b16 %v2369
      %v2409 = vunpack.c.l.b16 %v2370
      %v2410 = vunpack.c.h.b16 %v2370
      %v2411 = vunpack.c.l.b16 %v2371
      %v2412 = vunpack.c.h.b16 %v2371
      %v2413 = vunpack.c.l.b16 %v2372
      %v2414 = vunpack.c.h.b16 %v2372
      %v2415 = vunpack.c.l.b16 %v2373
      %v2416 = vunpack.c.h.b16 %v2373
      %v2417 = vunpack.c.l.b16 %v2374
      %v2418 = vunpack.c.h.b16 %v2374
      %v2419 = vunpack.c.l.b16 %v2375
      %v2420 = vunpack.c.h.b16 %v2375
      %v2421 = vunpack.c.l.b16 %v2376
      %v2422 = vunpack.c.h.b16 %v2376
      %v2423 = vunpack.c.l.b16 %v2377
      %v2424 = vunpack.c.h.b16 %v2377
      %v2425 = vunpack.c.l.b16 %v2378
      %v2426 = vunpack.c.h.b16 %v2378
      %v2427 = vpack.c.b16 %v2395, %v2395
      %v2428 = vpack.c.b16 %v2396, %v2396
      %v2429 = vpack.c.b16 %v2397, %v2397
      %v2430 = vpack.c.b16 %v2398, %v2398
      %v2431 = vpack.c.b16 %v2399, %v2399
      %v2432 = vpack.c.b16 %v2400, %v2400
      %v2433 = vpack.c.b16 %v2401, %v2401
      %v2434 = vpack.c.b16 %v2402, %v2402
      %v2435 = vpack.c.b16 %v2403, %v2403
      %v2436 = vpack.c.b16 %v2404, %v2404
      %v2437 = vpack.c.b16 %v2405, %v2405
      %v2438 = vpack.c.b16 %v2406, %v2406
      %v2439 = vpack.c.b16 %v2407, %v2407
      %v2440 = vpack.c.b16 %v2408, %v2408
      %v2441 = vpack.c.b16 %v2409, %v2409
      %v2442 = vpack.c.b16 %v2410, %v2410
      %v2443 = vpack.c.b16 %v2411, %v2411
      %v2444 = vpack.c.b16 %v2412, %v2412
      %v2445 = vpack.c.b16 %v2413, %v2413
      %v2446 = vpack.c.b16 %v2414, %v2414
      %v2447 = vpack.c.b16 %v2415, %v2415
      %v2448 = vpack.c.b16 %v2416, %v2416
      %v2449 = vpack.c.b16 %v2417, %v2417
      %v2450 = vpack.c.b16 %v2418, %v2418
      %v2451 = vpack.c.b16 %v2419, %v2419
      %v2452 = vpack.c.b16 %v2420, %v2420
      %v2453 = vpack.c.b16 %v2421, %v2421
      %v2454 = vpack.c.b16 %v2422, %v2422
      %v2455 = vpack.c.b16 %v2423, %v2423
      %v2456 = vpack.c.b16 %v2424, %v2424
      %v2457 = vpack.c.b16 %v2425, %v2425
      %v2458 = vpack.c.b16 %v2426, %v2426
      %2459 = vrot.lane.b32.xlu0 %v2427, 96
      %v2460 = vpop.permute.xlu0 %2459
      %2461 = vrot.lane.b32.xlu0 %v2428, 96
      %v2462 = vpop.permute.xlu0 %2461
      %2463 = vrot.lane.b32.xlu0 %v2429, 96
      %v2464 = vpop.permute.xlu0 %2463
      %2465 = vrot.lane.b32.xlu0 %v2430, 96
      %v2466 = vpop.permute.xlu0 %2465
      %2467 = vrot.lane.b32.xlu0 %v2431, 96
      %v2468 = vpop.permute.xlu0 %2467
      %2469 = vrot.lane.b32.xlu0 %v2432, 96
      %v2470 = vpop.permute.xlu0 %2469
      %2471 = vrot.lane.b32.xlu0 %v2433, 96
      %v2472 = vpop.permute.xlu0 %2471
      %2473 = vrot.lane.b32.xlu0 %v2434, 96
      %v2474 = vpop.permute.xlu0 %2473
      %2475 = vrot.lane.b32.xlu0 %v2435, 96
      %v2476 = vpop.permute.xlu0 %2475
      %2477 = vrot.lane.b32.xlu0 %v2436, 96
      %v2478 = vpop.permute.xlu0 %2477
      %2479 = vrot.lane.b32.xlu0 %v2437, 96
      %v2480 = vpop.permute.xlu0 %2479
      %2481 = vrot.lane.b32.xlu0 %v2438, 96
      %v2482 = vpop.permute.xlu0 %2481
      %2483 = vrot.lane.b32.xlu0 %v2439, 96
      %v2484 = vpop.permute.xlu0 %2483
      %2485 = vrot.lane.b32.xlu0 %v2440, 96
      %v2486 = vpop.permute.xlu0 %2485
      %2487 = vrot.lane.b32.xlu0 %v2441, 96
      %v2488 = vpop.permute.xlu0 %2487
      %2489 = vrot.lane.b32.xlu0 %v2442, 96
      %v2490 = vpop.permute.xlu0 %2489
      %2491 = vrot.lane.b32.xlu0 %v2443, 96
      %v2492 = vpop.permute.xlu0 %2491
      %2493 = vrot.lane.b32.xlu0 %v2444, 96
      %v2494 = vpop.permute.xlu0 %2493
      %2495 = vrot.lane.b32.xlu0 %v2445, 96
      %v2496 = vpop.permute.xlu0 %2495
      %2497 = vrot.lane.b32.xlu0 %v2446, 96
      %v2498 = vpop.permute.xlu0 %2497
      %2499 = vrot.lane.b32.xlu0 %v2447, 96
      %v2500 = vpop.permute.xlu0 %2499
      %2501 = vrot.lane.b32.xlu0 %v2448, 96
      %v2502 = vpop.permute.xlu0 %2501
      %2503 = vrot.lane.b32.xlu0 %v2449, 96
      %v2504 = vpop.permute.xlu0 %2503
      %2505 = vrot.lane.b32.xlu0 %v2450, 96
      %v2506 = vpop.permute.xlu0 %2505
      %2507 = vrot.lane.b32.xlu0 %v2451, 96
      %v2508 = vpop.permute.xlu0 %2507
      %2509 = vrot.lane.b32.xlu0 %v2452, 96
      %v2510 = vpop.permute.xlu0 %2509
      %2511 = vrot.lane.b32.xlu0 %v2453, 96
      %v2512 = vpop.permute.xlu0 %2511
      %2513 = vrot.lane.b32.xlu0 %v2454, 96
      %v2514 = vpop.permute.xlu0 %2513
      %2515 = vrot.lane.b32.xlu0 %v2455, 96
      %v2516 = vpop.permute.xlu0 %2515
      %2517 = vrot.lane.b32.xlu0 %v2456, 96
      %v2518 = vpop.permute.xlu0 %2517
      %2519 = vrot.lane.b32.xlu0 %v2457, 96
      %v2520 = vpop.permute.xlu0 %2519
      %2521 = vrot.lane.b32.xlu0 %v2458, 96
      %v2522 = vpop.permute.xlu0 %2521
      %vm2555 = vcmask 913152
      %2556 = vst.msk [vmem:[#allocation3] sm:$0xf] %vm2555, %v2460
      %2557 = vst.msk [vmem:[#allocation3 + $0x8] sm:$0xf] %vm2555, %v2462
      %2558 = vst.msk [vmem:[#allocation3 + $0x10] sm:$0xf] %vm2555, %v2464
      %2559 = vst.msk [vmem:[#allocation3 + $0x18] sm:$0xf] %vm2555, %v2466
      %2560 = vst.msk [vmem:[#allocation3 + $0x20] sm:$0xf] %vm2555, %v2468
      %2561 = vst.msk [vmem:[#allocation3 + $0x28] sm:$0xf] %vm2555, %v2470
      %2562 = vst.msk [vmem:[#allocation3 + $0x30] sm:$0xf] %vm2555, %v2472
      %2563 = vst.msk [vmem:[#allocation3 + $0x38] sm:$0xf] %vm2555, %v2474
      %2564 = vst.msk [vmem:[#allocation3 + $0x40] sm:$0xf] %vm2555, %v2476
      %2565 = vst.msk [vmem:[#allocation3 + $0x48] sm:$0xf] %vm2555, %v2478
      %2566 = vst.msk [vmem:[#allocation3 + $0x50] sm:$0xf] %vm2555, %v2480
      %2567 = vst.msk [vmem:[#allocation3 + $0x58] sm:$0xf] %vm2555, %v2482
      %2568 = vst.msk [vmem:[#allocation3 + $0x60] sm:$0xf] %vm2555, %v2484
      %2569 = vst.msk [vmem:[#allocation3 + $0x68] sm:$0xf] %vm2555, %v2486
      %2570 = vst.msk [vmem:[#allocation3 + $0x70] sm:$0xf] %vm2555, %v2488
      %2571 = vst.msk [vmem:[#allocation3 + $0x78] sm:$0xf] %vm2555, %v2490
      %2572 = vst.msk [vmem:[#allocation3 + $0x80] sm:$0xf] %vm2555, %v2492
      %2573 = vst.msk [vmem:[#allocation3 + $0x88] sm:$0xf] %vm2555, %v2494
      %2574 = vst.msk [vmem:[#allocation3 + $0x90] sm:$0xf] %vm2555, %v2496
      %2575 = vst.msk [vmem:[#allocation3 + $0x98] sm:$0xf] %vm2555, %v2498
      %2576 = vst.msk [vmem:[#allocation3 + $0xa0] sm:$0xf] %vm2555, %v2500
      %2577 = vst.msk [vmem:[#allocation3 + $0xa8] sm:$0xf] %vm2555, %v2502
      %2578 = vst.msk [vmem:[#allocation3 + $0xb0] sm:$0xf] %vm2555, %v2504
      %2579 = vst.msk [vmem:[#allocation3 + $0xb8] sm:$0xf] %vm2555, %v2506
      %2580 = vst.msk [vmem:[#allocation3 + $0xc0] sm:$0xf] %vm2555, %v2508
      %2581 = vst.msk [vmem:[#allocation3 + $0xc8] sm:$0xf] %vm2555, %v2510
      %2582 = vst.msk [vmem:[#allocation3 + $0xd0] sm:$0xf] %vm2555, %v2512
      %2583 = vst.msk [vmem:[#allocation3 + $0xd8] sm:$0xf] %vm2555, %v2514
      %2584 = vst.msk [vmem:[#allocation3 + $0xe0] sm:$0xf] %vm2555, %v2516
      %2585 = vst.msk [vmem:[#allocation3 + $0xe8] sm:$0xf] %vm2555, %v2518
      %2586 = vst.msk [vmem:[#allocation3 + $0xf0] sm:$0xf] %vm2555, %v2520
      %2587 = vst.msk [vmem:[#allocation3 + $0xf8] sm:$0xf] %vm2555, %v2522
      %v2588 = vld [vmem:[%s2330 + $0x1] sm:$0xff]
      %v2589 = vld [vmem:[%s2330 + $0x9] sm:$0xff]
      %v2590 = vld [vmem:[%s2330 + $0x19] sm:$0xff]
      %v2591 = vld [vmem:[%s2330 + $0x21] sm:$0xff]
      %v2592 = vld [vmem:[%s2330 + $0x31] sm:$0xff]
      %v2593 = vld [vmem:[%s2330 + $0x39] sm:$0xff]
      %v2594 = vld [vmem:[%s2330 + $0x49] sm:$0xff]
      %v2595 = vld [vmem:[%s2330 + $0x51] sm:$0xff]
      %v2596 = vld [vmem:[%s2330 + $0x61] sm:$0xff]
      %v2597 = vld [vmem:[%s2330 + $0x69] sm:$0xff]
      %v2598 = vld [vmem:[%s2330 + $0x79] sm:$0xff]
      %v2599 = vld [vmem:[%s2330 + $0x81] sm:$0xff]
      %v2600 = vld [vmem:[%s2330 + $0x91] sm:$0xff]
      %v2601 = vld [vmem:[%s2330 + $0x99] sm:$0xff]
      %v2602 = vld [vmem:[%s2330 + $0xa9] sm:$0xff]
      %v2603 = vld [vmem:[%s2330 + $0xb1] sm:$0xff]
      %v2604 = vld [vmem:[%s2330 + $0xc1] sm:$0xff]
      %v2605 = vld [vmem:[%s2330 + $0xc9] sm:$0xff]
      %v2606 = vld [vmem:[%s2330 + $0xd9] sm:$0xff]
      %v2607 = vld [vmem:[%s2330 + $0xe1] sm:$0xff]
      %v2608 = vld [vmem:[%s2330 + $0xf1] sm:$0xff]
      %v2609 = vld [vmem:[%s2330 + $0xf9] sm:$0xff]
      %v2610 = vld [vmem:[%s2330 + $0x109] sm:$0xff]
      %v2611 = vld [vmem:[%s2330 + $0x111] sm:$0xff]
      %v2612 = vld [vmem:[%s2330 + $0x121] sm:$0xff]
      %v2613 = vld [vmem:[%s2330 + $0x129] sm:$0xff]
      %v2614 = vld [vmem:[%s2330 + $0x139] sm:$0xff]
      %v2615 = vld [vmem:[%s2330 + $0x141] sm:$0xff]
      %v2616 = vld [vmem:[%s2330 + $0x151] sm:$0xff]
      %v2617 = vld [vmem:[%s2330 + $0x159] sm:$0xff]
      %v2618 = vld [vmem:[%s2330 + $0x169] sm:$0xff]
      %v2619 = vld [vmem:[%s2330 + $0x171] sm:$0xff]
      %v2620 = vpack.c.bf16 %v2589, %v2588
      %v2621 = vpack.c.bf16 %v2591, %v2590
      %v2622 = vpack.c.bf16 %v2593, %v2592
      %v2623 = vpack.c.bf16 %v2595, %v2594
      %v2624 = vpack.c.bf16 %v2597, %v2596
      %v2625 = vpack.c.bf16 %v2599, %v2598
      %v2626 = vpack.c.bf16 %v2601, %v2600
      %v2627 = vpack.c.bf16 %v2603, %v2602
      %v2628 = vpack.c.bf16 %v2605, %v2604
      %v2629 = vpack.c.bf16 %v2607, %v2606
      %v2630 = vpack.c.bf16 %v2609, %v2608
      %v2631 = vpack.c.bf16 %v2611, %v2610
      %v2632 = vpack.c.bf16 %v2613, %v2612
      %v2633 = vpack.c.bf16 %v2615, %v2614
      %v2634 = vpack.c.bf16 %v2617, %v2616
      %v2635 = vpack.c.bf16 %v2619, %v2618
      %v2652 = vunpack.c.l.b16 %v2620
      %v2653 = vunpack.c.h.b16 %v2620
      %v2654 = vunpack.c.l.b16 %v2621
      %v2655 = vunpack.c.h.b16 %v2621
      %v2656 = vunpack.c.l.b16 %v2622
      %v2657 = vunpack.c.h.b16 %v2622
      %v2658 = vunpack.c.l.b16 %v2623
      %v2659 = vunpack.c.h.b16 %v2623
      %v2660 = vunpack.c.l.b16 %v2624
      %v2661 = vunpack.c.h.b16 %v2624
      %v2662 = vunpack.c.l.b16 %v2625
      %v2663 = vunpack.c.h.b16 %v2625
      %v2664 = vunpack.c.l.b16 %v2626
      %v2665 = vunpack.c.h.b16 %v2626
      %v2666 = vunpack.c.l.b16 %v2627
      %v2667 = vunpack.c.h.b16 %v2627
      %v2668 = vunpack.c.l.b16 %v2628
      %v2669 = vunpack.c.h.b16 %v2628
      %v2670 = vunpack.c.l.b16 %v2629
      %v2671 = vunpack.c.h.b16 %v2629
      %v2672 = vunpack.c.l.b16 %v2630
      %v2673 = vunpack.c.h.b16 %v2630
      %v2674 = vunpack.c.l.b16 %v2631
      %v2675 = vunpack.c.h.b16 %v2631
      %v2676 = vunpack.c.l.b16 %v2632
      %v2677 = vunpack.c.h.b16 %v2632
      %v2678 = vunpack.c.l.b16 %v2633
      %v2679 = vunpack.c.h.b16 %v2633
      %v2680 = vunpack.c.l.b16 %v2634
      %v2681 = vunpack.c.h.b16 %v2634
      %v2682 = vunpack.c.l.b16 %v2635
      %v2683 = vunpack.c.h.b16 %v2635
      %v2684 = vpack.c.b16 %v2652, %v2652
      %v2685 = vpack.c.b16 %v2653, %v2653
      %v2686 = vpack.c.b16 %v2654, %v2654
      %v2687 = vpack.c.b16 %v2655, %v2655
      %v2688 = vpack.c.b16 %v2656, %v2656
      %v2689 = vpack.c.b16 %v2657, %v2657
      %v2690 = vpack.c.b16 %v2658, %v2658
      %v2691 = vpack.c.b16 %v2659, %v2659
      %v2692 = vpack.c.b16 %v2660, %v2660
      %v2693 = vpack.c.b16 %v2661, %v2661
      %v2694 = vpack.c.b16 %v2662, %v2662
      %v2695 = vpack.c.b16 %v2663, %v2663
      %v2696 = vpack.c.b16 %v2664, %v2664
      %v2697 = vpack.c.b16 %v2665, %v2665
      %v2698 = vpack.c.b16 %v2666, %v2666
      %v2699 = vpack.c.b16 %v2667, %v2667
      %v2700 = vpack.c.b16 %v2668, %v2668
      %v2701 = vpack.c.b16 %v2669, %v2669
      %v2702 = vpack.c.b16 %v2670, %v2670
      %v2703 = vpack.c.b16 %v2671, %v2671
      %v2704 = vpack.c.b16 %v2672, %v2672
      %v2705 = vpack.c.b16 %v2673, %v2673
      %v2706 = vpack.c.b16 %v2674, %v2674
      %v2707 = vpack.c.b16 %v2675, %v2675
      %v2708 = vpack.c.b16 %v2676, %v2676
      %v2709 = vpack.c.b16 %v2677, %v2677
      %v2710 = vpack.c.b16 %v2678, %v2678
      %v2711 = vpack.c.b16 %v2679, %v2679
      %v2712 = vpack.c.b16 %v2680, %v2680
      %v2713 = vpack.c.b16 %v2681, %v2681
      %v2714 = vpack.c.b16 %v2682, %v2682
      %v2715 = vpack.c.b16 %v2683, %v2683
      %2716 = vrot.lane.b32.xlu0 %v2684, 112
      %v2717 = vpop.permute.xlu0 %2716
      %2718 = vrot.lane.b32.xlu0 %v2685, 112
      %v2719 = vpop.permute.xlu0 %2718
      %2720 = vrot.lane.b32.xlu0 %v2686, 112
      %v2721 = vpop.permute.xlu0 %2720
      %2722 = vrot.lane.b32.xlu0 %v2687, 112
      %v2723 = vpop.permute.xlu0 %2722
      %2724 = vrot.lane.b32.xlu0 %v2688, 112
      %v2725 = vpop.permute.xlu0 %2724
      %2726 = vrot.lane.b32.xlu0 %v2689, 112
      %v2727 = vpop.permute.xlu0 %2726
      %2728 = vrot.lane.b32.xlu0 %v2690, 112
      %v2729 = vpop.permute.xlu0 %2728
      %2730 = vrot.lane.b32.xlu0 %v2691, 112
      %v2731 = vpop.permute.xlu0 %2730
      %2732 = vrot.lane.b32.xlu0 %v2692, 112
      %v2733 = vpop.permute.xlu0 %2732
      %2734 = vrot.lane.b32.xlu0 %v2693, 112
      %v2735 = vpop.permute.xlu0 %2734
      %2736 = vrot.lane.b32.xlu0 %v2694, 112
      %v2737 = vpop.permute.xlu0 %2736
      %2738 = vrot.lane.b32.xlu0 %v2695, 112
      %v2739 = vpop.permute.xlu0 %2738
      %2740 = vrot.lane.b32.xlu0 %v2696, 112
      %v2741 = vpop.permute.xlu0 %2740
      %2742 = vrot.lane.b32.xlu0 %v2697, 112
      %v2743 = vpop.permute.xlu0 %2742
      %2744 = vrot.lane.b32.xlu0 %v2698, 112
      %v2745 = vpop.permute.xlu0 %2744
      %2746 = vrot.lane.b32.xlu0 %v2699, 112
      %v2747 = vpop.permute.xlu0 %2746
      %2748 = vrot.lane.b32.xlu0 %v2700, 112
      %v2749 = vpop.permute.xlu0 %2748
      %2750 = vrot.lane.b32.xlu0 %v2701, 112
      %v2751 = vpop.permute.xlu0 %2750
      %2752 = vrot.lane.b32.xlu0 %v2702, 112
      %v2753 = vpop.permute.xlu0 %2752
      %2754 = vrot.lane.b32.xlu0 %v2703, 112
      %v2755 = vpop.permute.xlu0 %2754
      %2756 = vrot.lane.b32.xlu0 %v2704, 112
      %v2757 = vpop.permute.xlu0 %2756
      %2758 = vrot.lane.b32.xlu0 %v2705, 112
      %v2759 = vpop.permute.xlu0 %2758
      %2760 = vrot.lane.b32.xlu0 %v2706, 112
      %v2761 = vpop.permute.xlu0 %2760
      %2762 = vrot.lane.b32.xlu0 %v2707, 112
      %v2763 = vpop.permute.xlu0 %2762
      %2764 = vrot.lane.b32.xlu0 %v2708, 112
      %v2765 = vpop.permute.xlu0 %2764
      %2766 = vrot.lane.b32.xlu0 %v2709, 112
      %v2767 = vpop.permute.xlu0 %2766
      %2768 = vrot.lane.b32.xlu0 %v2710, 112
      %v2769 = vpop.permute.xlu0 %2768
      %2770 = vrot.lane.b32.xlu0 %v2711, 112
      %v2771 = vpop.permute.xlu0 %2770
      %2772 = vrot.lane.b32.xlu0 %v2712, 112
      %v2773 = vpop.permute.xlu0 %2772
      %2774 = vrot.lane.b32.xlu0 %v2713, 112
      %v2775 = vpop.permute.xlu0 %2774
      %2776 = vrot.lane.b32.xlu0 %v2714, 112
      %v2777 = vpop.permute.xlu0 %2776
      %2778 = vrot.lane.b32.xlu0 %v2715, 112
      %v2779 = vpop.permute.xlu0 %2778
      %vm2812 = vcmask 1044352
      %2813 = vst.msk [vmem:[#allocation3] sm:$0xf] %vm2812, %v2717
      %2814 = vst.msk [vmem:[#allocation3 + $0x8] sm:$0xf] %vm2812, %v2719
      %2815 = vst.msk [vmem:[#allocation3 + $0x10] sm:$0xf] %vm2812, %v2721
      %2816 = vst.msk [vmem:[#allocation3 + $0x18] sm:$0xf] %vm2812, %v2723
      %2817 = vst.msk [vmem:[#allocation3 + $0x20] sm:$0xf] %vm2812, %v2725
      %2818 = vst.msk [vmem:[#allocation3 + $0x28] sm:$0xf] %vm2812, %v2727
      %2819 = vst.msk [vmem:[#allocation3 + $0x30] sm:$0xf] %vm2812, %v2729
      %2820 = vst.msk [vmem:[#allocation3 + $0x38] sm:$0xf] %vm2812, %v2731
      %2821 = vst.msk [vmem:[#allocation3 + $0x40] sm:$0xf] %vm2812, %v2733
      %2822 = vst.msk [vmem:[#allocation3 + $0x48] sm:$0xf] %vm2812, %v2735
      %2823 = vst.msk [vmem:[#allocation3 + $0x50] sm:$0xf] %vm2812, %v2737
      %2824 = vst.msk [vmem:[#allocation3 + $0x58] sm:$0xf] %vm2812, %v2739
      %2825 = vst.msk [vmem:[#allocation3 + $0x60] sm:$0xf] %vm2812, %v2741
      %2826 = vst.msk [vmem:[#allocation3 + $0x68] sm:$0xf] %vm2812, %v2743
      %2827 = vst.msk [vmem:[#allocation3 + $0x70] sm:$0xf] %vm2812, %v2745
      %2828 = vst.msk [vmem:[#allocation3 + $0x78] sm:$0xf] %vm2812, %v2747
      %2829 = vst.msk [vmem:[#allocation3 + $0x80] sm:$0xf] %vm2812, %v2749
      %2830 = vst.msk [vmem:[#allocation3 + $0x88] sm:$0xf] %vm2812, %v2751
      %2831 = vst.msk [vmem:[#allocation3 + $0x90] sm:$0xf] %vm2812, %v2753
      %2832 = vst.msk [vmem:[#allocation3 + $0x98] sm:$0xf] %vm2812, %v2755
      %2833 = vst.msk [vmem:[#allocation3 + $0xa0] sm:$0xf] %vm2812, %v2757
      %2834 = vst.msk [vmem:[#allocation3 + $0xa8] sm:$0xf] %vm2812, %v2759
      %2835 = vst.msk [vmem:[#allocation3 + $0xb0] sm:$0xf] %vm2812, %v2761
      %2836 = vst.msk [vmem:[#allocation3 + $0xb8] sm:$0xf] %vm2812, %v2763
      %2837 = vst.msk [vmem:[#allocation3 + $0xc0] sm:$0xf] %vm2812, %v2765
      %2838 = vst.msk [vmem:[#allocation3 + $0xc8] sm:$0xf] %vm2812, %v2767
      %2839 = vst.msk [vmem:[#allocation3 + $0xd0] sm:$0xf] %vm2812, %v2769
      %2840 = vst.msk [vmem:[#allocation3 + $0xd8] sm:$0xf] %vm2812, %v2771
      %2841 = vst.msk [vmem:[#allocation3 + $0xe0] sm:$0xf] %vm2812, %v2773
      %2842 = vst.msk [vmem:[#allocation3 + $0xe8] sm:$0xf] %vm2812, %v2775
      %2843 = vst.msk [vmem:[#allocation3 + $0xf0] sm:$0xf] %vm2812, %v2777
      %2844 = vst.msk [vmem:[#allocation3 + $0xf8] sm:$0xf] %vm2812, %v2779
      %v2845 = vld [vmem:[%s2330 + $0x2] sm:$0xff]
      %v2846 = vld [vmem:[%s2330 + $0xa] sm:$0xff]
      %v2847 = vld [vmem:[%s2330 + $0x1a] sm:$0xff]
      %v2848 = vld [vmem:[%s2330 + $0x22] sm:$0xff]
      %v2849 = vld [vmem:[%s2330 + $0x32] sm:$0xff]
      %v2850 = vld [vmem:[%s2330 + $0x3a] sm:$0xff]
      %v2851 = vld [vmem:[%s2330 + $0x4a] sm:$0xff]
      %v2852 = vld [vmem:[%s2330 + $0x52] sm:$0xff]
      %v2853 = vld [vmem:[%s2330 + $0x62] sm:$0xff]
      %v2854 = vld [vmem:[%s2330 + $0x6a] sm:$0xff]
      %v2855 = vld [vmem:[%s2330 + $0x7a] sm:$0xff]
      %v2856 = vld [vmem:[%s2330 + $0x82] sm:$0xff]
      %v2857 = vld [vmem:[%s2330 + $0x92] sm:$0xff]
      %v2858 = vld [vmem:[%s2330 + $0x9a] sm:$0xff]
      %v2859 = vld [vmem:[%s2330 + $0xaa] sm:$0xff]
      %v2860 = vld [vmem:[%s2330 + $0xb2] sm:$0xff]
      %v2861 = vld [vmem:[%s2330 + $0xc2] sm:$0xff]
      %v2862 = vld [vmem:[%s2330 + $0xca] sm:$0xff]
      %v2863 = vld [vmem:[%s2330 + $0xda] sm:$0xff]
      %v2864 = vld [vmem:[%s2330 + $0xe2] sm:$0xff]
      %v2865 = vld [vmem:[%s2330 + $0xf2] sm:$0xff]
      %v2866 = vld [vmem:[%s2330 + $0xfa] sm:$0xff]
      %v2867 = vld [vmem:[%s2330 + $0x10a] sm:$0xff]
      %v2868 = vld [vmem:[%s2330 + $0x112] sm:$0xff]
      %v2869 = vld [vmem:[%s2330 + $0x122] sm:$0xff]
      %v2870 = vld [vmem:[%s2330 + $0x12a] sm:$0xff]
      %v2871 = vld [vmem:[%s2330 + $0x13a] sm:$0xff]
      %v2872 = vld [vmem:[%s2330 + $0x142] sm:$0xff]
      %v2873 = vld [vmem:[%s2330 + $0x152] sm:$0xff]
      %v2874 = vld [vmem:[%s2330 + $0x15a] sm:$0xff]
      %v2875 = vld [vmem:[%s2330 + $0x16a] sm:$0xff]
      %v2876 = vld [vmem:[%s2330 + $0x172] sm:$0xff]
      %v2877 = vpack.c.bf16 %v2846, %v2845
      %v2878 = vpack.c.bf16 %v2848, %v2847
      %v2879 = vpack.c.bf16 %v2850, %v2849
      %v2880 = vpack.c.bf16 %v2852, %v2851
      %v2881 = vpack.c.bf16 %v2854, %v2853
      %v2882 = vpack.c.bf16 %v2856, %v2855
      %v2883 = vpack.c.bf16 %v2858, %v2857
      %v2884 = vpack.c.bf16 %v2860, %v2859
      %v2885 = vpack.c.bf16 %v2862, %v2861
      %v2886 = vpack.c.bf16 %v2864, %v2863
      %v2887 = vpack.c.bf16 %v2866, %v2865
      %v2888 = vpack.c.bf16 %v2868, %v2867
      %v2889 = vpack.c.bf16 %v2870, %v2869
      %v2890 = vpack.c.bf16 %v2872, %v2871
      %v2891 = vpack.c.bf16 %v2874, %v2873
      %v2892 = vpack.c.bf16 %v2876, %v2875
      %v2909 = vunpack.c.l.b16 %v2877
      %v2910 = vunpack.c.h.b16 %v2877
      %v2911 = vunpack.c.l.b16 %v2878
      %v2912 = vunpack.c.h.b16 %v2878
      %v2913 = vunpack.c.l.b16 %v2879
      %v2914 = vunpack.c.h.b16 %v2879
      %v2915 = vunpack.c.l.b16 %v2880
      %v2916 = vunpack.c.h.b16 %v2880
      %v2917 = vunpack.c.l.b16 %v2881
      %v2918 = vunpack.c.h.b16 %v2881
      %v2919 = vunpack.c.l.b16 %v2882
      %v2920 = vunpack.c.h.b16 %v2882
      %v2921 = vunpack.c.l.b16 %v2883
      %v2922 = vunpack.c.h.b16 %v2883
      %v2923 = vunpack.c.l.b16 %v2884
      %v2924 = vunpack.c.h.b16 %v2884
      %v2925 = vunpack.c.l.b16 %v2885
      %v2926 = vunpack.c.h.b16 %v2885
      %v2927 = vunpack.c.l.b16 %v2886
      %v2928 = vunpack.c.h.b16 %v2886
      %v2929 = vunpack.c.l.b16 %v2887
      %v2930 = vunpack.c.h.b16 %v2887
      %v2931 = vunpack.c.l.b16 %v2888
      %v2932 = vunpack.c.h.b16 %v2888
      %v2933 = vunpack.c.l.b16 %v2889
      %v2934 = vunpack.c.h.b16 %v2889
      %v2935 = vunpack.c.l.b16 %v2890
      %v2936 = vunpack.c.h.b16 %v2890
      %v2937 = vunpack.c.l.b16 %v2891
      %v2938 = vunpack.c.h.b16 %v2891
      %v2939 = vunpack.c.l.b16 %v2892
      %v2940 = vunpack.c.h.b16 %v2892
      %v2941 = vpack.c.b16 %v2909, %v2909
      %v2942 = vpack.c.b16 %v2910, %v2910
      %v2943 = vpack.c.b16 %v2911, %v2911
      %v2944 = vpack.c.b16 %v2912, %v2912
      %v2945 = vpack.c.b16 %v2913, %v2913
      %v2946 = vpack.c.b16 %v2914, %v2914
      %v2947 = vpack.c.b16 %v2915, %v2915
      %v2948 = vpack.c.b16 %v2916, %v2916
      %v2949 = vpack.c.b16 %v2917, %v2917
      %v2950 = vpack.c.b16 %v2918, %v2918
      %v2951 = vpack.c.b16 %v2919, %v2919
      %v2952 = vpack.c.b16 %v2920, %v2920
      %v2953 = vpack.c.b16 %v2921, %v2921
      %v2954 = vpack.c.b16 %v2922, %v2922
      %v2955 = vpack.c.b16 %v2923, %v2923
      %v2956 = vpack.c.b16 %v2924, %v2924
      %v2957 = vpack.c.b16 %v2925, %v2925
      %v2958 = vpack.c.b16 %v2926, %v2926
      %v2959 = vpack.c.b16 %v2927, %v2927
      %v2960 = vpack.c.b16 %v2928, %v2928
      %v2961 = vpack.c.b16 %v2929, %v2929
      %v2962 = vpack.c.b16 %v2930, %v2930
      %v2963 = vpack.c.b16 %v2931, %v2931
      %v2964 = vpack.c.b16 %v2932, %v2932
      %v2965 = vpack.c.b16 %v2933, %v2933
      %v2966 = vpack.c.b16 %v2934, %v2934
      %v2967 = vpack.c.b16 %v2935, %v2935
      %v2968 = vpack.c.b16 %v2936, %v2936
      %v2969 = vpack.c.b16 %v2937, %v2937
      %v2970 = vpack.c.b16 %v2938, %v2938
      %v2971 = vpack.c.b16 %v2939, %v2939
      %v2972 = vpack.c.b16 %v2940, %v2940
      %3005 = vst.msk [vmem:[#allocation3 + $0x4] sm:$0xf] %vm1012, %v2941
      %3006 = vst.msk [vmem:[#allocation3 + $0xc] sm:$0xf] %vm1012, %v2942
      %3007 = vst.msk [vmem:[#allocation3 + $0x14] sm:$0xf] %vm1012, %v2943
      %3008 = vst.msk [vmem:[#allocation3 + $0x1c] sm:$0xf] %vm1012, %v2944
      %3009 = vst.msk [vmem:[#allocation3 + $0x24] sm:$0xf] %vm1012, %v2945
      %3010 = vst.msk [vmem:[#allocation3 + $0x2c] sm:$0xf] %vm1012, %v2946
      %3011 = vst.msk [vmem:[#allocation3 + $0x34] sm:$0xf] %vm1012, %v2947
      %3012 = vst.msk [vmem:[#allocation3 + $0x3c] sm:$0xf] %vm1012, %v2948
      %3013 = vst.msk [vmem:[#allocation3 + $0x44] sm:$0xf] %vm1012, %v2949
      %3014 = vst.msk [vmem:[#allocation3 + $0x4c] sm:$0xf] %vm1012, %v2950
      %3015 = vst.msk [vmem:[#allocation3 + $0x54] sm:$0xf] %vm1012, %v2951
      %3016 = vst.msk [vmem:[#allocation3 + $0x5c] sm:$0xf] %vm1012, %v2952
      %3017 = vst.msk [vmem:[#allocation3 + $0x64] sm:$0xf] %vm1012, %v2953
      %3018 = vst.msk [vmem:[#allocation3 + $0x6c] sm:$0xf] %vm1012, %v2954
      %3019 = vst.msk [vmem:[#allocation3 + $0x74] sm:$0xf] %vm1012, %v2955
      %3020 = vst.msk [vmem:[#allocation3 + $0x7c] sm:$0xf] %vm1012, %v2956
      %3021 = vst.msk [vmem:[#allocation3 + $0x84] sm:$0xf] %vm1012, %v2957
      %3022 = vst.msk [vmem:[#allocation3 + $0x8c] sm:$0xf] %vm1012, %v2958
      %3023 = vst.msk [vmem:[#allocation3 + $0x94] sm:$0xf] %vm1012, %v2959
      %3024 = vst.msk [vmem:[#allocation3 + $0x9c] sm:$0xf] %vm1012, %v2960
      %3025 = vst.msk [vmem:[#allocation3 + $0xa4] sm:$0xf] %vm1012, %v2961
      %3026 = vst.msk [vmem:[#allocation3 + $0xac] sm:$0xf] %vm1012, %v2962
      %3027 = vst.msk [vmem:[#allocation3 + $0xb4] sm:$0xf] %vm1012, %v2963
      %3028 = vst.msk [vmem:[#allocation3 + $0xbc] sm:$0xf] %vm1012, %v2964
      %3029 = vst.msk [vmem:[#allocation3 + $0xc4] sm:$0xf] %vm1012, %v2965
      %3030 = vst.msk [vmem:[#allocation3 + $0xcc] sm:$0xf] %vm1012, %v2966
      %3031 = vst.msk [vmem:[#allocation3 + $0xd4] sm:$0xf] %vm1012, %v2967
      %3032 = vst.msk [vmem:[#allocation3 + $0xdc] sm:$0xf] %vm1012, %v2968
      %3033 = vst.msk [vmem:[#allocation3 + $0xe4] sm:$0xf] %vm1012, %v2969
      %3034 = vst.msk [vmem:[#allocation3 + $0xec] sm:$0xf] %vm1012, %v2970
      %3035 = vst.msk [vmem:[#allocation3 + $0xf4] sm:$0xf] %vm1012, %v2971
      %3036 = vst.msk [vmem:[#allocation3 + $0xfc] sm:$0xf] %vm1012, %v2972
      %v3037 = vld [vmem:[#allocation3] sm:$0xff]
      %v3038 = vld [vmem:[#allocation3 + $0x8] sm:$0xff]
      %v3039 = vld [vmem:[#allocation3 + $0x10] sm:$0xff]
      %v3040 = vld [vmem:[#allocation3 + $0x18] sm:$0xff]
      %v3041 = vld [vmem:[#allocation3 + $0x20] sm:$0xff]
      %v3042 = vld [vmem:[#allocation3 + $0x28] sm:$0xff]
      %v3043 = vld [vmem:[#allocation3 + $0x30] sm:$0xff]
      %v3044 = vld [vmem:[#allocation3 + $0x38] sm:$0xff]
      %v3045 = vld [vmem:[#allocation3 + $0x40] sm:$0xff]
      %v3046 = vld [vmem:[#allocation3 + $0x48] sm:$0xff]
      %v3047 = vld [vmem:[#allocation3 + $0x50] sm:$0xff]
      %v3048 = vld [vmem:[#allocation3 + $0x58] sm:$0xff]
      %v3049 = vld [vmem:[#allocation3 + $0x60] sm:$0xff]
      %v3050 = vld [vmem:[#allocation3 + $0x68] sm:$0xff]
      %v3051 = vld [vmem:[#allocation3 + $0x70] sm:$0xff]
      %v3052 = vld [vmem:[#allocation3 + $0x78] sm:$0xff]
      %v3053 = vld [vmem:[#allocation3 + $0x80] sm:$0xff]
      %v3054 = vld [vmem:[#allocation3 + $0x88] sm:$0xff]
      %v3055 = vld [vmem:[#allocation3 + $0x90] sm:$0xff]
      %v3056 = vld [vmem:[#allocation3 + $0x98] sm:$0xff]
      %v3057 = vld [vmem:[#allocation3 + $0xa0] sm:$0xff]
      %v3058 = vld [vmem:[#allocation3 + $0xa8] sm:$0xff]
      %v3059 = vld [vmem:[#allocation3 + $0xb0] sm:$0xff]
      %v3060 = vld [vmem:[#allocation3 + $0xb8] sm:$0xff]
      %v3061 = vld [vmem:[#allocation3 + $0xc0] sm:$0xff]
      %v3062 = vld [vmem:[#allocation3 + $0xc8] sm:$0xff]
      %v3063 = vld [vmem:[#allocation3 + $0xd0] sm:$0xff]
      %v3064 = vld [vmem:[#allocation3 + $0xd8] sm:$0xff]
      %v3065 = vld [vmem:[#allocation3 + $0xe0] sm:$0xff]
      %v3066 = vld [vmem:[#allocation3 + $0xe8] sm:$0xff]
      %v3067 = vld [vmem:[#allocation3 + $0xf0] sm:$0xff]
      %v3068 = vld [vmem:[#allocation3 + $0xf8] sm:$0xff]
      %v3069 = vld [vmem:[%s6] sm:$0xf]
      %v3070 = vld [vmem:[%s6 + $0x4] sm:$0xf]
      %v3071 = vld [vmem:[%s6 + $0x8] sm:$0xf]
      %v3072 = vld [vmem:[%s6 + $0xc] sm:$0xf]
      %v3073 = vld [vmem:[%s6 + $0x10] sm:$0xf]
      %v3074 = vld [vmem:[%s6 + $0x14] sm:$0xf]
      %v3075 = vld [vmem:[%s6 + $0x18] sm:$0xf]
      %v3076 = vld [vmem:[%s6 + $0x1c] sm:$0xf]
      %v3077 = vld [vmem:[%s6 + $0x20] sm:$0xf]
      %v3078 = vld [vmem:[%s6 + $0x24] sm:$0xf]
      %v3079 = vld [vmem:[%s6 + $0x28] sm:$0xf]
      %v3080 = vld [vmem:[%s6 + $0x2c] sm:$0xf]
      %v3081 = vld [vmem:[%s6 + $0x30] sm:$0xf]
      %v3082 = vld [vmem:[%s6 + $0x34] sm:$0xf]
      %v3083 = vld [vmem:[%s6 + $0x38] sm:$0xf]
      %v3084 = vld [vmem:[%s6 + $0x3c] sm:$0xf]
      %v3085 = vld [vmem:[%s6 + $0x40] sm:$0xf]
      %v3086 = vld [vmem:[%s6 + $0x44] sm:$0xf]
      %v3119 = vunpack.c.l.b16 %v3037
      %v3120 = vunpack.c.h.b16 %v3037
      %v3121 = vunpack.c.l.b16 %v3038
      %v3122 = vunpack.c.h.b16 %v3038
      %v3123 = vunpack.c.l.b16 %v3039
      %v3124 = vunpack.c.h.b16 %v3039
      %v3125 = vunpack.c.l.b16 %v3040
      %v3126 = vunpack.c.h.b16 %v3040
      %v3127 = vunpack.c.l.b16 %v3041
      %v3128 = vunpack.c.h.b16 %v3041
      %v3129 = vunpack.c.l.b16 %v3042
      %v3130 = vunpack.c.h.b16 %v3042
      %v3131 = vunpack.c.l.b16 %v3043
      %v3132 = vunpack.c.h.b16 %v3043
      %v3133 = vunpack.c.l.b16 %v3044
      %v3134 = vunpack.c.h.b16 %v3044
      %v3135 = vunpack.c.l.b16 %v3045
      %v3136 = vunpack.c.h.b16 %v3045
      %v3137 = vunpack.c.l.b16 %v3046
      %v3138 = vunpack.c.h.b16 %v3046
      %v3139 = vunpack.c.l.b16 %v3047
      %v3140 = vunpack.c.h.b16 %v3047
      %v3141 = vunpack.c.l.b16 %v3048
      %v3142 = vunpack.c.h.b16 %v3048
      %v3143 = vunpack.c.l.b16 %v3049
      %v3144 = vunpack.c.h.b16 %v3049
      %v3145 = vunpack.c.l.b16 %v3050
      %v3146 = vunpack.c.h.b16 %v3050
      %v3147 = vunpack.c.l.b16 %v3051
      %v3148 = vunpack.c.h.b16 %v3051
      %v3149 = vunpack.c.l.b16 %v3052
      %v3150 = vunpack.c.h.b16 %v3052
      %v3151 = vunpack.c.l.b16 %v3053
      %v3152 = vunpack.c.h.b16 %v3053
      %v3153 = vunpack.c.l.b16 %v3054
      %v3154 = vunpack.c.h.b16 %v3054
      %v3155 = vunpack.c.l.b16 %v3055
      %v3156 = vunpack.c.h.b16 %v3055
      %v3157 = vunpack.c.l.b16 %v3056
      %v3158 = vunpack.c.h.b16 %v3056
      %v3159 = vunpack.c.l.b16 %v3057
      %v3160 = vunpack.c.h.b16 %v3057
      %v3161 = vunpack.c.l.b16 %v3058
      %v3162 = vunpack.c.h.b16 %v3058
      %v3163 = vunpack.c.l.b16 %v3059
      %v3164 = vunpack.c.h.b16 %v3059
      %v3165 = vunpack.c.l.b16 %v3060
      %v3166 = vunpack.c.h.b16 %v3060
      %v3167 = vunpack.c.l.b16 %v3061
      %v3168 = vunpack.c.h.b16 %v3061
      %v3169 = vunpack.c.l.b16 %v3062
      %v3170 = vunpack.c.h.b16 %v3062
      %v3171 = vunpack.c.l.b16 %v3063
      %v3172 = vunpack.c.h.b16 %v3063
      %v3173 = vunpack.c.l.b16 %v3064
      %v3174 = vunpack.c.h.b16 %v3064
      %v3175 = vunpack.c.l.b16 %v3065
      %v3176 = vunpack.c.h.b16 %v3065
      %v3177 = vunpack.c.l.b16 %v3066
      %v3178 = vunpack.c.h.b16 %v3066
      %v3179 = vunpack.c.l.b16 %v3067
      %v3180 = vunpack.c.h.b16 %v3067
      %v3181 = vunpack.c.l.b16 %v3068
      %v3182 = vunpack.c.h.b16 %v3068
      %v3183 = vpack.c.b16 %v3121, %v3119
      %v3184 = vpack.c.b16 %v3122, %v3120
      %v3185 = vpack.c.b16 %v3125, %v3123
      %v3186 = vpack.c.b16 %v3126, %v3124
      %v3187 = vpack.c.b16 %v3129, %v3127
      %v3188 = vpack.c.b16 %v3130, %v3128
      %v3189 = vpack.c.b16 %v3133, %v3131
      %v3190 = vpack.c.b16 %v3134, %v3132
      %v3191 = vpack.c.b16 %v3137, %v3135
      %v3192 = vpack.c.b16 %v3138, %v3136
      %v3193 = vpack.c.b16 %v3141, %v3139
      %v3194 = vpack.c.b16 %v3142, %v3140
      %v3195 = vpack.c.b16 %v3145, %v3143
      %v3196 = vpack.c.b16 %v3146, %v3144
      %v3197 = vpack.c.b16 %v3149, %v3147
      %v3198 = vpack.c.b16 %v3150, %v3148
      %v3199 = vpack.c.b16 %v3153, %v3151
      %v3200 = vpack.c.b16 %v3154, %v3152
      %v3201 = vpack.c.b16 %v3157, %v3155
      %v3202 = vpack.c.b16 %v3158, %v3156
      %v3203 = vpack.c.b16 %v3161, %v3159
      %v3204 = vpack.c.b16 %v3162, %v3160
      %v3205 = vpack.c.b16 %v3165, %v3163
      %v3206 = vpack.c.b16 %v3166, %v3164
      %v3207 = vpack.c.b16 %v3169, %v3167
      %v3208 = vpack.c.b16 %v3170, %v3168
      %v3209 = vpack.c.b16 %v3173, %v3171
      %v3210 = vpack.c.b16 %v3174, %v3172
      %v3211 = vpack.c.b16 %v3177, %v3175
      %v3212 = vpack.c.b16 %v3178, %v3176
      %v3213 = vpack.c.b16 %v3181, %v3179
      %v3214 = vpack.c.b16 %v3182, %v3180
      %v3249 = vunpack.c.l.b16 %v3069
      %v3250 = vunpack.c.l.b16 %v3070
      %v3251 = vunpack.c.l.b16 %v3071
      %v3252 = vunpack.c.l.b16 %v3072
      %v3253 = vunpack.c.l.b16 %v3073
      %v3254 = vunpack.c.l.b16 %v3074
      %v3255 = vunpack.c.l.b16 %v3075
      %v3256 = vunpack.c.l.b16 %v3076
      %v3257 = vunpack.c.l.b16 %v3077
      %v3258 = vunpack.c.l.b16 %v3078
      %v3259 = vunpack.c.l.b16 %v3079
      %v3260 = vunpack.c.l.b16 %v3080
      %v3261 = vunpack.c.l.b16 %v3081
      %v3262 = vunpack.c.l.b16 %v3082
      %v3263 = vunpack.c.l.b16 %v3083
      %v3264 = vunpack.c.l.b16 %v3084
      %v3265 = vunpack.c.l.b16 %v3085
      %v3266 = vunpack.c.l.b16 %v3086
      %v3267 = vpack.c.b16 %v3250, %v3249
      %v3268 = vpack.c.b16 %v3252, %v3251
      %v3269 = vpack.c.b16 %v3254, %v3253
      %v3270 = vpack.c.b16 %v3256, %v3255
      %v3271 = vpack.c.b16 %v3258, %v3257
      %v3272 = vpack.c.b16 %v3260, %v3259
      %v3273 = vpack.c.b16 %v3262, %v3261
      %v3274 = vpack.c.b16 %v3264, %v3263
      %v3275 = vpack.c.b16 %v3266, %v3265
      %v3286 = vsel %vm763, %v3184, 0
      %v3289 = vsel %vm763, %v3186, 0
      %v3292 = vsel %vm763, %v3188, 0
      %v3295 = vsel %vm763, %v3190, 0
      %v3298 = vsel %vm763, %v3192, 0
      %v3301 = vsel %vm763, %v3194, 0
      %v3304 = vsel %vm763, %v3196, 0
      %v3307 = vsel %vm763, %v3198, 0
      %v3310 = vsel %vm763, %v3200, 0
      %v3313 = vsel %vm763, %v3202, 0
      %v3316 = vsel %vm763, %v3204, 0
      %v3319 = vsel %vm763, %v3206, 0
      %v3322 = vsel %vm763, %v3208, 0
      %v3325 = vsel %vm763, %v3210, 0
      %v3328 = vsel %vm763, %v3212, 0
      %v3331 = vsel %vm763, %v3214, 0
      %3333 = vmatprep.subr.bf16.mxu0 0
      %3334 = vmatpush1.bf16.msra.mxu0 %v3274
      %3335 = vmatprep.subr.bf16.mxu0 0
      %3336 = vmatpush1.bf16.msra.mxu0 %v3273
      %3337 = vmatprep.subr.bf16.mxu0 0
      %3338 = vmatpush1.bf16.msra.mxu0 %v3272
      %3339 = vmatprep.subr.bf16.mxu0 0
      %3340 = vmatpush1.bf16.msra.mxu0 %v3271
      %3341 = vmatprep.subr.bf16.mxu0 0
      %3342 = vmatpush1.bf16.msra.mxu0 %v3270
      %3343 = vmatprep.subr.bf16.mxu0 0
      %3344 = vmatpush1.bf16.msra.mxu0 %v3269
      %3345 = vmatprep.subr.bf16.mxu0 0
      %3346 = vmatpush1.bf16.msra.mxu0 %v3268
      %3347 = vmatprep.subr.bf16.mxu0 0
      %3348 = vmatpush1.bf16.msra.mxu0 %v3267
      %3349 = vmatprep.subr.bf16.mxu0 0
      %3350 = vmatpush2.bf16.msra.mxu0 0
      %3351 = vmatprep.subr.bf16.mxu0 0
      %3352 = vmatpush2.bf16.msra.mxu0 0
      %3353 = vmatprep.subr.bf16.mxu0 0
      %3354 = vmatpush2.bf16.msra.mxu0 0
      %3355 = vmatprep.subr.bf16.mxu0 0
      %3356 = vmatpush2.bf16.msra.mxu0 0
      %3357 = vmatprep.subr.bf16.mxu0 0
      %3358 = vmatpush2.bf16.msra.mxu0 0
      %3359 = vmatprep.subr.bf16.mxu0 0
      %3360 = vmatpush2.bf16.msra.mxu0 0
      %3361 = vmatprep.subr.bf16.mxu0 0
      %3362 = vmatpush2.bf16.msra.mxu0 0
      %3363 = vmatprep.subr.bf16.mxu0 0
      %3364 = vmatpush2.bf16.msra.mxu0 %v3275
      %3365 = vmatprep.mubr.bf16.mxu0 %v3286
      %3366 = vmatmul.mubr.bf16.gmra.mxu0 %v3183
      %v3367 = vpop.f32.mrf.mxu0
      %v3368 = vadd.f32 0.0, %v3367
      %v3369 = vpop.f32.mrf.mxu0
      %v3370 = vpop.f32.mrf.mxu0
      %v3371 = vadd.f32 0.0, %v3370
      %v3372 = vpop.f32.mrf.mxu0
      %3373 = vmatprep.mubr.bf16.mxu0 %v3289
      %3374 = vmatmul.mubr.bf16.gmra.mxu0 %v3185
      %v3375 = vpop.f32.mrf.mxu0
      %v3376 = vadd.f32 0.0, %v3375
      %v3377 = vpop.f32.mrf.mxu0
      %v3378 = vpop.f32.mrf.mxu0
      %v3379 = vadd.f32 0.0, %v3378
      %v3380 = vpop.f32.mrf.mxu0
      %3381 = vmatprep.mubr.bf16.mxu0 %v3292
      %3382 = vmatmul.mubr.bf16.gmra.mxu0 %v3187
      %v3383 = vpop.f32.mrf.mxu0
      %v3384 = vadd.f32 0.0, %v3383
      %v3385 = vpop.f32.mrf.mxu0
      %v3386 = vpop.f32.mrf.mxu0
      %v3387 = vadd.f32 0.0, %v3386
      %v3388 = vpop.f32.mrf.mxu0
      %3389 = vmatprep.mubr.bf16.mxu0 %v3295
      %3390 = vmatmul.mubr.bf16.gmra.mxu0 %v3189
      %v3391 = vpop.f32.mrf.mxu0
      %v3392 = vadd.f32 0.0, %v3391
      %v3393 = vpop.f32.mrf.mxu0
      %v3394 = vpop.f32.mrf.mxu0
      %v3395 = vadd.f32 0.0, %v3394
      %v3396 = vpop.f32.mrf.mxu0
      %3397 = vmatprep.mubr.bf16.mxu0 %v3298
      %3398 = vmatmul.mubr.bf16.gmra.mxu0 %v3191
      %v3399 = vpop.f32.mrf.mxu0
      %v3400 = vadd.f32 0.0, %v3399
      %v3401 = vpop.f32.mrf.mxu0
      %v3402 = vpop.f32.mrf.mxu0
      %v3403 = vadd.f32 0.0, %v3402
      %v3404 = vpop.f32.mrf.mxu0
      %3405 = vmatprep.mubr.bf16.mxu0 %v3301
      %3406 = vmatmul.mubr.bf16.gmra.mxu0 %v3193
      %v3407 = vpop.f32.mrf.mxu0
      %v3408 = vadd.f32 0.0, %v3407
      %v3409 = vpop.f32.mrf.mxu0
      %v3410 = vpop.f32.mrf.mxu0
      %v3411 = vadd.f32 0.0, %v3410
      %v3412 = vpop.f32.mrf.mxu0
      %3413 = vmatprep.mubr.bf16.mxu0 %v3304
      %3414 = vmatmul.mubr.bf16.gmra.mxu0 %v3195
      %v3415 = vpop.f32.mrf.mxu0
      %v3416 = vadd.f32 0.0, %v3415
      %v3417 = vpop.f32.mrf.mxu0
      %v3418 = vpop.f32.mrf.mxu0
      %v3419 = vadd.f32 0.0, %v3418
      %v3420 = vpop.f32.mrf.mxu0
      %3421 = vmatprep.mubr.bf16.mxu0 %v3307
      %3422 = vmatmul.mubr.bf16.gmra.mxu0 %v3197
      %v3423 = vpop.f32.mrf.mxu0
      %v3424 = vadd.f32 0.0, %v3423
      %v3425 = vpop.f32.mrf.mxu0
      %v3426 = vpop.f32.mrf.mxu0
      %v3427 = vadd.f32 0.0, %v3426
      %v3428 = vpop.f32.mrf.mxu0
      %3429 = vmatprep.mubr.bf16.mxu0 %v3310
      %3430 = vmatmul.mubr.bf16.gmra.mxu0 %v3199
      %v3431 = vpop.f32.mrf.mxu0
      %v3432 = vadd.f32 0.0, %v3431
      %v3433 = vpop.f32.mrf.mxu0
      %v3434 = vpop.f32.mrf.mxu0
      %v3435 = vadd.f32 0.0, %v3434
      %v3436 = vpop.f32.mrf.mxu0
      %3437 = vmatprep.mubr.bf16.mxu0 %v3313
      %3438 = vmatmul.mubr.bf16.gmra.mxu0 %v3201
      %v3439 = vpop.f32.mrf.mxu0
      %v3440 = vadd.f32 0.0, %v3439
      %v3441 = vpop.f32.mrf.mxu0
      %v3442 = vpop.f32.mrf.mxu0
      %v3443 = vadd.f32 0.0, %v3442
      %v3444 = vpop.f32.mrf.mxu0
      %3445 = vmatprep.mubr.bf16.mxu0 %v3316
      %3446 = vmatmul.mubr.bf16.gmra.mxu0 %v3203
      %v3447 = vpop.f32.mrf.mxu0
      %v3448 = vadd.f32 0.0, %v3447
      %v3449 = vpop.f32.mrf.mxu0
      %v3450 = vpop.f32.mrf.mxu0
      %v3451 = vadd.f32 0.0, %v3450
      %v3452 = vpop.f32.mrf.mxu0
      %3453 = vmatprep.mubr.bf16.mxu0 %v3319
      %3454 = vmatmul.mubr.bf16.gmra.mxu0 %v3205
      %v3455 = vpop.f32.mrf.mxu0
      %v3456 = vadd.f32 0.0, %v3455
      %v3457 = vpop.f32.mrf.mxu0
      %v3458 = vpop.f32.mrf.mxu0
      %v3459 = vadd.f32 0.0, %v3458
      %v3460 = vpop.f32.mrf.mxu0
      %3461 = vmatprep.mubr.bf16.mxu0 %v3322
      %3462 = vmatmul.mubr.bf16.gmra.mxu0 %v3207
      %v3463 = vpop.f32.mrf.mxu0
      %v3464 = vadd.f32 0.0, %v3463
      %v3465 = vpop.f32.mrf.mxu0
      %v3466 = vpop.f32.mrf.mxu0
      %v3467 = vadd.f32 0.0, %v3466
      %v3468 = vpop.f32.mrf.mxu0
      %3469 = vmatprep.mubr.bf16.mxu0 %v3325
      %3470 = vmatmul.mubr.bf16.gmra.mxu0 %v3209
      %v3471 = vpop.f32.mrf.mxu0
      %v3472 = vadd.f32 0.0, %v3471
      %v3473 = vpop.f32.mrf.mxu0
      %v3474 = vpop.f32.mrf.mxu0
      %v3475 = vadd.f32 0.0, %v3474
      %v3476 = vpop.f32.mrf.mxu0
      %3477 = vmatprep.mubr.bf16.mxu0 %v3328
      %3478 = vmatmul.mubr.bf16.gmra.mxu0 %v3211
      %v3479 = vpop.f32.mrf.mxu0
      %v3480 = vadd.f32 0.0, %v3479
      %v3481 = vpop.f32.mrf.mxu0
      %v3482 = vpop.f32.mrf.mxu0
      %v3483 = vadd.f32 0.0, %v3482
      %v3484 = vpop.f32.mrf.mxu0
      %3485 = vmatprep.mubr.bf16.mxu0 %v3331
      %3486 = vmatmul.mubr.bf16.gmra.mxu0 %v3213
      %v3487 = vpop.f32.mrf.mxu0
      %v3488 = vadd.f32 0.0, %v3487
      %v3489 = vpop.f32.mrf.mxu0
      %v3490 = vpop.f32.mrf.mxu0
      %v3491 = vadd.f32 0.0, %v3490
      %v3492 = vpop.f32.mrf.mxu0
      %3493 = vdwg.mxu0
      %3494 = vst.msk [vmem:[%s278] sm:$0xff] %vm439, %v3368
      %3495 = vst.msk [vmem:[%s278 + $0x8] sm:$0xff] %vm439, %v3371
      %3496 = vst.msk [vmem:[%s278 + $0x10] sm:$0xff] %vm439, %v3376
      %3497 = vst.msk [vmem:[%s278 + $0x18] sm:$0xff] %vm439, %v3379
      %3498 = vst.msk [vmem:[%s278 + $0x20] sm:$0xff] %vm439, %v3384
      %3499 = vst.msk [vmem:[%s278 + $0x28] sm:$0xff] %vm439, %v3387
      %3500 = vst.msk [vmem:[%s278 + $0x30] sm:$0xff] %vm439, %v3392
      %3501 = vst.msk [vmem:[%s278 + $0x38] sm:$0xff] %vm439, %v3395
      %3502 = vst.msk [vmem:[%s278 + $0x40] sm:$0xff] %vm439, %v3400
      %3503 = vst.msk [vmem:[%s278 + $0x48] sm:$0xff] %vm439, %v3403
      %3504 = vst.msk [vmem:[%s278 + $0x50] sm:$0xff] %vm439, %v3408
      %3505 = vst.msk [vmem:[%s278 + $0x58] sm:$0xff] %vm439, %v3411
      %3506 = vst.msk [vmem:[%s278 + $0x60] sm:$0xff] %vm439, %v3416
      %3507 = vst.msk [vmem:[%s278 + $0x68] sm:$0xff] %vm439, %v3419
      %3508 = vst.msk [vmem:[%s278 + $0x70] sm:$0xff] %vm439, %v3424
      %3509 = vst.msk [vmem:[%s278 + $0x78] sm:$0xff] %vm439, %v3427
      %3510 = vst.msk [vmem:[%s278 + $0x80] sm:$0xff] %vm439, %v3432
      %3511 = vst.msk [vmem:[%s278 + $0x88] sm:$0xff] %vm439, %v3435
      %3512 = vst.msk [vmem:[%s278 + $0x90] sm:$0xff] %vm439, %v3440
      %3513 = vst.msk [vmem:[%s278 + $0x98] sm:$0xff] %vm439, %v3443
      %3514 = vst.msk [vmem:[%s278 + $0xa0] sm:$0xff] %vm439, %v3448
      %3515 = vst.msk [vmem:[%s278 + $0xa8] sm:$0xff] %vm439, %v3451
      %3516 = vst.msk [vmem:[%s278 + $0xb0] sm:$0xff] %vm439, %v3456
      %3517 = vst.msk [vmem:[%s278 + $0xb8] sm:$0xff] %vm439, %v3459
      %3518 = vst.msk [vmem:[%s278 + $0xc0] sm:$0xff] %vm439, %v3464
      %3519 = vst.msk [vmem:[%s278 + $0xc8] sm:$0xff] %vm439, %v3467
      %3520 = vst.msk [vmem:[%s278 + $0xd0] sm:$0xff] %vm439, %v3472
      %3521 = vst.msk [vmem:[%s278 + $0xd8] sm:$0xff] %vm439, %v3475
      %3522 = vst.msk [vmem:[%s278 + $0xe0] sm:$0xff] %vm439, %v3480
      %3523 = vst.msk [vmem:[%s278 + $0xe8] sm:$0xff] %vm439, %v3483
      %3524 = vst.msk [vmem:[%s278 + $0xf0] sm:$0xff] %vm439, %v3488
      %3525 = vst.msk [vmem:[%s278 + $0xf8] sm:$0xff] %vm439, %v3491
      %p3526 = scmp.lt.s32.totalorder %s18, 1
      %s3527 = scalar_select %p3526, %s18, 1
      %s3528 = smul.addr %s3527, 32
      %s3529 = smul.addr %s3528, 8
      %s3530 = scalar_lea.vmem %s7, %s3529
      // Predicated region
      $region49: #{bottleneck_forward.1} parent=47 // pred_check
        %p3531 = pneg %p188
      $region50: #{bottleneck_forward.1} parent=47 // pred_check_branch
        %3533 = sbr.rel (%p3531) target = $region52
      $region51: #{bottleneck_forward.1} parent=47 // pred_region
        _
      $region52: #{bottleneck_forward.1} parent=47 // pred_fallthru
        _
    $region48: #{bottleneck_forward.1} parent=5 // pred_fallthru
      _
    %p3534 = scmp.le.s32.totalorder 2, %s13
    // Predicated region
    $region53: #{bottleneck_forward.1} parent=5 // pred_check
      %p3535 = pneg %p3534
    $region54: #{bottleneck_forward.1} parent=5 // pred_check_branch
      %3537 = sbr.rel (%p3535) target = $region56
    $region55: #{bottleneck_forward.1} parent=5 // pred_region
      %s3538 = ssub.s32 %s13, 2
      // Predicated region
      $region57: #{bottleneck_forward.1} parent=55 // pred_check
        %p3539 = pneg %p194
      $region58: #{bottleneck_forward.1} parent=55 // pred_check_branch
        %3541 = sbr.rel (%p3539) target = $region60
      $region59: #{bottleneck_forward.1} parent=55 // pred_region
        %p3542 = scmp.lt.s32.totalorder %s19, 1
        %s3543 = scalar_select %p3542, %s19, 1
        %s3544 = smul.addr %s3543, 32
        %s3545 = smul.addr %s3544, 8
        %s3546 = scalar_lea.vmem %s7, %s3545
      $region60: #{bottleneck_forward.1} parent=55 // pred_fallthru
        _
    $region56: #{bottleneck_forward.1} parent=5 // pred_fallthru
      _
  $region6: #{bottleneck_forward.1} parent=0 // loop_footer
    %s17 = sadd.s32 1, %s13
  $region7: #{bottleneck_forward.1} parent=0 // loop_footer_branch
    %12 = sbr.rel target = $region3
  $region8: #{bottleneck_forward.1} parent=0 // loop_exit
    _

</llo_original>
